<compile_context>
chip_gen: v6e
topology: v6e:2x2x1
jax: 0.10.0
libtpu: 0.0.40
codegen_flags: <defaults>
</compile_context>

<pallas_src>
import functools
import math

import jax
import jax.numpy as jnp
from jax.experimental import pallas as pl
from jax.experimental.pallas import tpu as pltpu


# ------------------------------ Pallas kernel ------------------------------ #
def _cell(gates, c, H):
    """Standard LSTM cell update from pre-activation gates (PyTorch order i,f,g,o)."""
    sig = jax.nn.sigmoid(gates)   # full-width: cheap at H=32 (EUP slot otherwise idle)
    th = jnp.tanh(gates)
    i = sig[:, 0 * H:1 * H]
    f = sig[:, 1 * H:2 * H]
    g = th[:, 2 * H:3 * H]
    o = sig[:, 3 * H:4 * H]
    c_new = f * c + i * g
    h_new = o * jnp.tanh(c_new)
    return h_new, c_new


def _lstm_layer_kernel(x_ref, wih_ref, whh_ref, b_ref, out_ref, gx_ref,
                       *, T, B, H, ND, unroll, mm_dtype):
    """One (possibly bidirectional) LSTM layer, both directions fused in one loop.

    x_ref   : (T*B, Din)        input sequence, flattened over (time, batch), mm_dtype
    wih_ref : (Din, ND*4H)      input->gates weights, fwd gates then bwd gates, mm_dtype
    whh_ref : (ND, H, 4H)       hidden->gates weights per direction, mm_dtype
    b_ref   : (1, ND*4H)        b_ih + b_hh per direction, f32
    out_ref : (T, B, ND*H)      hidden outputs (fwd lanes [0:H], bwd lanes [H:2H])
    gx_ref  : (T, B, ND*4H)     VMEM scratch: hoisted input projection, f32
    """
    G = ND * 4 * H

    # Hoisted input projection for all time steps and all directions: ONE MXU matmul
    # (no sequential dependence), bias folded in.  With B a multiple of 8 the reshape
    # (T*B, G) -> (T, B, G) is layout-preserving.
    xw = jnp.dot(x_ref[...], wih_ref[...], preferred_element_type=jnp.float32)
    gx_ref[...] = (xw + b_ref[...]).reshape(T, B, G)

    h0 = jnp.zeros((B, H), jnp.float32)
    c0 = jnp.zeros((B, H), jnp.float32)

    if ND == 1:
        def step(t, carry):
            h, c = carry
            # Recurrent weight read inside the loop (MXU reads from VMEM anyway).
            rec = jnp.dot(h.astype(mm_dtype), whh_ref[0],
                          preferred_element_type=jnp.float32)      # (B, 4H)
            gates = gx_ref[t] + rec
            h_new, c_new = _cell(gates, c, H)
            out_ref[t] = h_new
            return h_new, c_new

        jax.lax.fori_loop(0, T, step, (h0, c0), unroll=unroll)
    else:
        def step(s, carry):
            h_f, c_f, h_b, c_b = carry
            tf = s            # forward time index
            tb = T - 1 - s    # backward time index
            # Two independent recurrent dots (they pipeline back-to-back on the MXU);
            # only these sit on the recurrent critical path.
            rec_f = jnp.dot(h_f.astype(mm_dtype), whh_ref[0],
                            preferred_element_type=jnp.float32)    # (B, 4H)
            rec_b = jnp.dot(h_b.astype(mm_dtype), whh_ref[1],
                            preferred_element_type=jnp.float32)    # (B, 4H)
            gates_f = gx_ref[tf, :, 0 * 4 * H:1 * 4 * H] + rec_f
            gates_b = gx_ref[tb, :, 1 * 4 * H:2 * 4 * H] + rec_b
            h_f_new, c_f_new = _cell(gates_f, c_f, H)
            h_b_new, c_b_new = _cell(gates_b, c_b, H)
            out_ref[tf, :, 0:H] = h_f_new
            out_ref[tb, :, H:2 * H] = h_b_new
            return h_f_new, c_f_new, h_b_new, c_b_new

        jax.lax.fori_loop(0, T, step, (h0, c0, h0, c0), unroll=unroll)


def lstm_layer_pallas(x_tbd, w_ih_cat, w_hh_t, b_cat, hidden_dim,
                      mm_dtype=jnp.bfloat16):
    """Run one (possibly bidirectional) LSTM layer.

    x_tbd    : (T, B, Din)       B must be a multiple of 8 (wrapper pads)
    w_ih_cat : (Din, ND*4H)
    w_hh_t   : (ND, H, 4H)
    b_cat    : (1, ND*4H)
    returns  : (T, B, ND*H)      f32
    """
    T, B, Din = x_tbd.shape
    ND = w_hh_t.shape[0]
    H = hidden_dim
    G = ND * 4 * H
    x_flat = x_tbd.reshape(T * B, Din).astype(mm_dtype)  # free reshape + operand cast
    unroll = T if T <= 16 else 8                          # bounded integer unroll
    kernel = functools.partial(_lstm_layer_kernel, T=T, B=B, H=H, ND=ND,
                               unroll=unroll, mm_dtype=mm_dtype)
    return pl.pallas_call(
        kernel,
        out_shape=jax.ShapeDtypeStruct((T, B, ND * H), jnp.float32),
        grid=(1,),
        in_specs=[
            pl.BlockSpec((T * B, Din), lambda i: (0, 0)),       # x
            pl.BlockSpec((Din, G), lambda i: (0, 0)),           # W_ih^T (both dirs)
            pl.BlockSpec((ND, H, 4 * H), lambda i: (0, 0, 0)),  # W_hh^T per dir
            pl.BlockSpec((1, G), lambda i: (0, 0)),             # bias
        ],
        out_specs=pl.BlockSpec((T, B, ND * H), lambda i: (0, 0, 0)),
        scratch_shapes=[pltpu.VMEM((T, B, G), jnp.float32)],
        compiler_params=pltpu.CompilerParams(
            dimension_semantics=("arbitrary",),
            vmem_limit_bytes=32 * 1024 * 1024,
        ),
    )(x_flat, w_ih_cat.astype(mm_dtype), w_hh_t.astype(mm_dtype), b_cat)


# --------------------------- pure-JAX reference ----------------------------- #
def lstm_layer_ref(x_tbd, w_ih_cat, w_hh_t, b_cat, hidden_dim):
    T, B, Din = x_tbd.shape
    ND = w_hh_t.shape[0]
    H = hidden_dim
    outs = []
    for d in range(ND):
        xin = x_tbd[::-1] if d == 1 else x_tbd
        wih = w_ih_cat[:, d * 4 * H:(d + 1) * 4 * H]
        whh = w_hh_t[d]
        bd = b_cat[:, d * 4 * H:(d + 1) * 4 * H]

        def step(carry, x_t, wih=wih, whh=whh, bd=bd):
            h, c = carry
            gates = (jnp.dot(x_t, wih, precision=jax.lax.Precision.HIGHEST)
                     + jnp.dot(h, whh, precision=jax.lax.Precision.HIGHEST)
                     + bd)
            i = jax.nn.sigmoid(gates[:, 0 * H:1 * H])
            f = jax.nn.sigmoid(gates[:, 1 * H:2 * H])
            g = jnp.tanh(gates[:, 2 * H:3 * H])
            o = jax.nn.sigmoid(gates[:, 3 * H:4 * H])
            c = f * c + i * g
            h = o * jnp.tanh(c)
            return (h, c), h

        init = (jnp.zeros((B, H), jnp.float32), jnp.zeros((B, H), jnp.float32))
        _, hs = jax.lax.scan(step, init, xin)
        if d == 1:
            hs = hs[::-1]
        outs.append(hs)
    return jnp.concatenate(outs, axis=-1)  # (T, B, ND*H)


# ------------------------------- full module -------------------------------- #
def init_lstm_params(key, latent_dim, hidden_dim, num_layers, bidirectional):
    """PyTorch nn.LSTM init: U(-1/sqrt(H), 1/sqrt(H)); packed per layer as
    (W_ih^T concat over dirs, W_hh^T stacked over dirs, b_ih+b_hh concat over dirs)."""
    num_dir = 2 if bidirectional else 1
    k = 1.0 / math.sqrt(hidden_dim)
    params = []
    for l in range(num_layers):
        in_dim = latent_dim if l == 0 else num_dir * hidden_dim
        wih_cols, whh_l, b_cols = [], [], []
        for _ in range(num_dir):
            key, k1, k2, k3, k4 = jax.random.split(key, 5)
            w_ih = jax.random.uniform(k1, (4 * hidden_dim, in_dim), jnp.float32, -k, k)
            w_hh = jax.random.uniform(k2, (4 * hidden_dim, hidden_dim), jnp.float32, -k, k)
            b_ih = jax.random.uniform(k3, (4 * hidden_dim,), jnp.float32, -k, k)
            b_hh = jax.random.uniform(k4, (4 * hidden_dim,), jnp.float32, -k, k)
            wih_cols.append(w_ih.T)          # (in_dim, 4H)
            whh_l.append(w_hh.T)             # (H, 4H)
            b_cols.append(b_ih + b_hh)       # (4H,)
        params.append((jnp.concatenate(wih_cols, axis=1),   # (in_dim, ND*4H)
                       jnp.stack(whh_l, axis=0),            # (ND, H, 4H)
                       jnp.concatenate(b_cols)[None, :]))   # (1, ND*4H)
    return params


def lstm_forward(x_btd, params, hidden_dim, use_pallas=True, mm_dtype=jnp.bfloat16):
    """Mirror of LSTM.forward(x) with hidden_state=None (zero init), eval mode."""
    B, T, _ = x_btd.shape
    x = jnp.transpose(x_btd, (1, 0, 2)).astype(jnp.float32)  # (T, B, D)
    if use_pallas:
        b_run = ((B + 7) // 8) * 8   # pad batch to a sublane multiple (alignment)
        if b_run != B:
            x = jnp.pad(x, ((0, 0), (0, b_run - B), (0, 0)))
        layer_fn = functools.partial(lstm_layer_pallas, mm_dtype=mm_dtype)
    else:
        layer_fn = lstm_layer_ref
    for (w_ih_cat, w_hh_t, b_cat) in params:
        x = layer_fn(x, w_ih_cat, w_hh_t, b_cat, hidden_dim)  # (T, B', ND*H)
        # TODO(synk): nn.LSTM applies dropout(p=0.3) between layers only in
        # training mode; eval-mode (identity) semantics are implemented here.
    if use_pallas:
        x = x[:, :B, :]
    return jnp.transpose(x, (1, 0, 2))  # (B, T, num_dir*H)


# ---------------------------------- main ------------------------------------ #
if __name__ == "__main__":
    # Module config (matches the PyTorch spec usage)
    latent_dim = 16
    hidden_dim = 32
    num_layers = 2
    bidirectional = True

    # Small example input: (batch=2, seq=8, latent_dim=16)
    B, T = 2, 8
    key = jax.random.PRNGKey(0)
    kx, kp = jax.random.split(key)
    x = jax.random.normal(kx, (B, T, latent_dim), dtype=jnp.float32)

    params = init_lstm_params(kp, latent_dim, hidden_dim, num_layers, bidirectional)

    fwd = functools.partial(lstm_forward, hidden_dim=hidden_dim)
    run_bf16 = jax.jit(functools.partial(fwd, use_pallas=True, mm_dtype=jnp.bfloat16))
    run_f32 = jax.jit(functools.partial(fwd, use_pallas=True, mm_dtype=jnp.float32))
    run_ref = jax.jit(functools.partial(fwd, use_pallas=False))

    # Main (performance) path: bf16 MXU operands, f32 accumulation / gate math.
    out = jax.block_until_ready(run_bf16(x, params))
    expected_feat = (2 if bidirectional else 1) * hidden_dim
    assert out.shape == (B, T, expected_feat), out.shape

    ref = jax.block_until_ready(run_ref(x, params))

    # Tight algorithmic check with f32 matmul operands.
    out_f32 = jax.block_until_ready(run_f32(x, params))
    err_f32 = float(jnp.max(jnp.abs(out_f32 - ref)))
    assert err_f32 < 2e-2, err_f32
    # bf16-operand path: looser tolerance (bf16 mantissa over 2 layers x T steps).
    err_bf16 = float(jnp.max(jnp.abs(out - ref)))
    assert err_bf16 < 5e-2, err_bf16

    # Also exercise the unidirectional (ND == 1) path of the kernel.
    params_uni = init_lstm_params(kp, latent_dim, hidden_dim, 1, False)
    run_uni = jax.jit(functools.partial(lstm_forward, hidden_dim=hidden_dim,
                                        use_pallas=True, mm_dtype=jnp.float32))
    run_uni_ref = jax.jit(functools.partial(lstm_forward, hidden_dim=hidden_dim,
                                            use_pallas=False))
    out_uni = jax.block_until_ready(run_uni(x, params_uni))
    ref_uni = jax.block_until_ready(run_uni_ref(x, params_uni))
    assert out_uni.shape == (B, T, hidden_dim), out_uni.shape
    err_uni = float(jnp.max(jnp.abs(out_uni - ref_uni)))
    assert err_uni < 2e-2, err_uni

    print("KERNEL_OK")
</pallas_src>

<mosaic_0001>
module attributes {stable_mosaic.version = 11 : i64} {
  func.func @_lstm_layer_kernel(%arg0: i32, %arg1: memref<64x16xbf16, #tpu.memory_space<vmem>>, %arg2: memref<16x256xbf16, #tpu.memory_space<vmem>>, %arg3: memref<2x32x128xbf16, #tpu.memory_space<vmem>>, %arg4: memref<1x256xf32, #tpu.memory_space<vmem>>, %arg5: memref<8x8x64xf32, #tpu.memory_space<vmem>>, %arg6: memref<8x8x256xf32, #tpu.memory_space<vmem>>) attributes {dimension_semantics = [#tpu.dimension_semantics<arbitrary>], iteration_bounds = array<i64: 1>, scalar_prefetch = 0 : i64, scratch_operands = 1 : i64, tpu.core_type = #tpu.core_type<tc>, window_params = [{pipeline_mode = #tpu.pipeline_mode<synchronous>, transform_indices = @transform_0, window_bounds = array<i64: 64, 16>}, {pipeline_mode = #tpu.pipeline_mode<synchronous>, transform_indices = @transform_1, window_bounds = array<i64: 16, 256>}, {pipeline_mode = #tpu.pipeline_mode<synchronous>, transform_indices = @transform_2, window_bounds = array<i64: 2, 32, 128>}, {pipeline_mode = #tpu.pipeline_mode<synchronous>, transform_indices = @transform_3, window_bounds = array<i64: 1, 256>}, {pipeline_mode = #tpu.pipeline_mode<synchronous>, transform_indices = @transform_4, window_bounds = array<i64: 8, 8, 64>}]} {
    %c0 = arith.constant 0 : index
    %c0_0 = arith.constant 0 : index
    %0 = vector.load %arg1[%c0, %c0_0] : memref<64x16xbf16, #tpu.memory_space<vmem>>, vector<64x16xbf16>
    %c0_1 = arith.constant 0 : index
    %c0_2 = arith.constant 0 : index
    %1 = vector.load %arg2[%c0_1, %c0_2] : memref<16x256xbf16, #tpu.memory_space<vmem>>, vector<16x256xbf16>
    %cst = arith.constant dense<0.000000e+00> : vector<64x256xf32>
    %2 = tpu.matmul %0, %1, %cst {dimension_numbers = #tpu.dot_dimension_numbers<[1], [0], [0], [1], [0, 0, 1, 1], [], []>} : vector<64x16xbf16>, vector<16x256xbf16>, vector<64x256xf32> -> vector<64x256xf32>
    %c0_3 = arith.constant 0 : index
    %c0_4 = arith.constant 0 : index
    %3 = vector.load %arg4[%c0_3, %c0_4] : memref<1x256xf32, #tpu.memory_space<vmem>>, vector<1x256xf32>
    %4 = vector.broadcast %3 : vector<1x256xf32> to vector<64x256xf32>
    %5 = arith.addf %2, %4 : vector<64x256xf32>
    %6 = vector.shape_cast %5 : vector<64x256xf32> to vector<8x8x256xf32>
    %c0_5 = arith.constant 0 : index
    %c0_6 = arith.constant 0 : index
    %c0_7 = arith.constant 0 : index
    %7 = vector.load %arg6[%c0_5, %c0_6, %c0_7] : memref<8x8x256xf32, #tpu.memory_space<vmem>>, vector<8x8x256xf32>
    tpu.vector_store %arg6[%c0_5, %c0_6, %c0_7], %6 {strides = array<i32>} : memref<8x8x256xf32, #tpu.memory_space<vmem>>, vector<8x8x256xf32>,
    %cst_8 = arith.constant 0.000000e+00 : f32
    %8 = vector.broadcast %cst_8 : f32 to vector<8x32xf32>
    %cst_9 = arith.constant 0.000000e+00 : f32
    %9 = vector.broadcast %cst_9 : f32 to vector<8x32xf32>
    %c0_i32 = arith.constant 0 : i32
    %c7_i32 = arith.constant 7 : i32
    %10 = arith.subi %c7_i32, %c0_i32 : i32
    %11 = arith.truncf %8 : vector<8x32xf32> to vector<8x32xbf16>
    %c0_10 = arith.constant 0 : index
    %c0_11 = arith.constant 0 : index
    %c0_12 = arith.constant 0 : index
    %12 = vector.load %arg3[%c0_10, %c0_11, %c0_12] : memref<2x32x128xbf16, #tpu.memory_space<vmem>>, vector<1x32x128xbf16>
    %13 = vector.shape_cast %12 : vector<1x32x128xbf16> to vector<32x128xbf16>
    %cst_13 = arith.constant dense<0.000000e+00> : vector<8x128xf32>
    %14 = tpu.matmul %11, %13, %cst_13 {dimension_numbers = #tpu.dot_dimension_numbers<[1], [0], [0], [1], [0, 0, 1, 1], [], []>} : vector<8x32xbf16>, vector<32x128xbf16>, vector<8x128xf32> -> vector<8x128xf32>
    %15 = arith.truncf %8 : vector<8x32xf32> to vector<8x32xbf16>
    %c1 = arith.constant 1 : index
    %c0_14 = arith.constant 0 : index
    %c0_15 = arith.constant 0 : index
    %16 = vector.load %arg3[%c1, %c0_14, %c0_15] : memref<2x32x128xbf16, #tpu.memory_space<vmem>>, vector<1x32x128xbf16>
    %17 = vector.shape_cast %16 : vector<1x32x128xbf16> to vector<32x128xbf16>
    %cst_16 = arith.constant dense<0.000000e+00> : vector<8x128xf32>
    %18 = tpu.matmul %15, %17, %cst_16 {dimension_numbers = #tpu.dot_dimension_numbers<[1], [0], [0], [1], [0, 0, 1, 1], [], []>} : vector<8x32xbf16>, vector<32x128xbf16>, vector<8x128xf32> -> vector<8x128xf32>
    %19 = arith.index_cast %c0_i32 : i32 to index
    %c0_17 = arith.constant 0 : index
    %c0_18 = arith.constant 0 : index
    %20 = vector.load %arg6[%19, %c0_17, %c0_18] : memref<8x8x256xf32, #tpu.memory_space<vmem>>, vector<1x8x128xf32>
    %21 = vector.shape_cast %20 : vector<1x8x128xf32> to vector<8x128xf32>
    %22 = arith.addf %21, %14 : vector<8x128xf32>
    %23 = arith.index_cast %10 : i32 to index
    %c0_19 = arith.constant 0 : index
    %c128 = arith.constant 128 : index
    %24 = vector.load %arg6[%23, %c0_19, %c128] : memref<8x8x256xf32, #tpu.memory_space<vmem>>, vector<1x8x128xf32>
    %25 = vector.shape_cast %24 : vector<1x8x128xf32> to vector<8x128xf32>
    %26 = arith.addf %25, %18 : vector<8x128xf32>
    %27 = arith.negf %22 : vector<8x128xf32>
    %28 = math.exp %27 : vector<8x128xf32>
    %cst_20 = arith.constant 1.000000e+00 : f32
    %29 = vector.broadcast %cst_20 : f32 to vector<8x128xf32>
    %30 = arith.addf %29, %28 : vector<8x128xf32>
    %31 = arith.divf %29, %30 : vector<8x128xf32>
    %32 = math.tanh %22 : vector<8x128xf32>
    %33 = vector.extract_strided_slice %31 {offsets = [0, 0], sizes = [8, 32], strides = [1, 1]} : vector<8x128xf32> to vector<8x32xf32>
    %34 = vector.extract_strided_slice %31 {offsets = [0, 32], sizes = [8, 32], strides = [1, 1]} : vector<8x128xf32> to vector<8x32xf32>
    %35 = vector.extract_strided_slice %32 {offsets = [0, 64], sizes = [8, 32], strides = [1, 1]} : vector<8x128xf32> to vector<8x32xf32>
    %36 = vector.extract_strided_slice %31 {offsets = [0, 96], sizes = [8, 32], strides = [1, 1]} : vector<8x128xf32> to vector<8x32xf32>
    %37 = arith.mulf %34, %9 : vector<8x32xf32>
    %38 = arith.mulf %33, %35 : vector<8x32xf32>
    %39 = arith.addf %37, %38 : vector<8x32xf32>
    %40 = math.tanh %39 : vector<8x32xf32>
    %41 = arith.mulf %36, %40 : vector<8x32xf32>
    %42 = arith.negf %26 : vector<8x128xf32>
    %43 = math.exp %42 : vector<8x128xf32>
    %cst_21 = arith.constant 1.000000e+00 : f32
    %44 = vector.broadcast %cst_21 : f32 to vector<8x128xf32>
    %45 = arith.addf %44, %43 : vector<8x128xf32>
    %46 = arith.divf %44, %45 : vector<8x128xf32>
    %47 = math.tanh %26 : vector<8x128xf32>
    %48 = vector.extract_strided_slice %46 {offsets = [0, 0], sizes = [8, 32], strides = [1, 1]} : vector<8x128xf32> to vector<8x32xf32>
    %49 = vector.extract_strided_slice %46 {offsets = [0, 32], sizes = [8, 32], strides = [1, 1]} : vector<8x128xf32> to vector<8x32xf32>
    %50 = vector.extract_strided_slice %47 {offsets = [0, 64], sizes = [8, 32], strides = [1, 1]} : vector<8x128xf32> to vector<8x32xf32>
    %51 = vector.extract_strided_slice %46 {offsets = [0, 96], sizes = [8, 32], strides = [1, 1]} : vector<8x128xf32> to vector<8x32xf32>
    %52 = arith.mulf %49, %9 : vector<8x32xf32>
    %53 = arith.mulf %48, %50 : vector<8x32xf32>
    %54 = arith.addf %52, %53 : vector<8x32xf32>
    %55 = math.tanh %54 : vector<8x32xf32>
    %56 = arith.mulf %51, %55 : vector<8x32xf32>
    %57 = arith.index_cast %c0_i32 : i32 to index
    %c0_22 = arith.constant 0 : index
    %c0_23 = arith.constant 0 : index
    %58 = vector.load %arg5[%57, %c0_22, %c0_23] : memref<8x8x64xf32, #tpu.memory_space<vmem>>, vector<1x8x32xf32>
    %59 = vector.shape_cast %58 : vector<1x8x32xf32> to vector<8x32xf32>
    %60 = vector.shape_cast %41 : vector<8x32xf32> to vector<1x8x32xf32>
    tpu.vector_store %arg5[%57, %c0_22, %c0_23], %60 {strides = array<i32>} : memref<8x8x64xf32, #tpu.memory_space<vmem>>, vector<1x8x32xf32>,
    %61 = arith.index_cast %10 : i32 to index
    %c0_24 = arith.constant 0 : index
    %c32 = arith.constant 32 : index
    %62 = vector.load %arg5[%61, %c0_24, %c32] : memref<8x8x64xf32, #tpu.memory_space<vmem>>, vector<1x8x32xf32>
    %63 = vector.shape_cast %62 : vector<1x8x32xf32> to vector<8x32xf32>
    %64 = vector.shape_cast %56 : vector<8x32xf32> to vector<1x8x32xf32>
    tpu.vector_store %arg5[%61, %c0_24, %c32], %64 {strides = array<i32>} : memref<8x8x64xf32, #tpu.memory_space<vmem>>, vector<1x8x32xf32>,
    %c1_i32 = arith.constant 1 : i32
    %c7_i32_25 = arith.constant 7 : i32
    %65 = arith.subi %c7_i32_25, %c1_i32 : i32
    %66 = arith.truncf %41 : vector<8x32xf32> to vector<8x32xbf16>
    %c0_26 = arith.constant 0 : index
    %c0_27 = arith.constant 0 : index
    %c0_28 = arith.constant 0 : index
    %67 = vector.load %arg3[%c0_26, %c0_27, %c0_28] : memref<2x32x128xbf16, #tpu.memory_space<vmem>>, vector<1x32x128xbf16>
    %68 = vector.shape_cast %67 : vector<1x32x128xbf16> to vector<32x128xbf16>
    %cst_29 = arith.constant dense<0.000000e+00> : vector<8x128xf32>
    %69 = tpu.matmul %66, %68, %cst_29 {dimension_numbers = #tpu.dot_dimension_numbers<[1], [0], [0], [1], [0, 0, 1, 1], [], []>} : vector<8x32xbf16>, vector<32x128xbf16>, vector<8x128xf32> -> vector<8x128xf32>
    %70 = arith.truncf %56 : vector<8x32xf32> to vector<8x32xbf16>
    %c1_30 = arith.constant 1 : index
    %c0_31 = arith.constant 0 : index
    %c0_32 = arith.constant 0 : index
    %71 = vector.load %arg3[%c1_30, %c0_31, %c0_32] : memref<2x32x128xbf16, #tpu.memory_space<vmem>>, vector<1x32x128xbf16>
    %72 = vector.shape_cast %71 : vector<1x32x128xbf16> to vector<32x128xbf16>
    %cst_33 = arith.constant dense<0.000000e+00> : vector<8x128xf32>
    %73 = tpu.matmul %70, %72, %cst_33 {dimension_numbers = #tpu.dot_dimension_numbers<[1], [0], [0], [1], [0, 0, 1, 1], [], []>} : vector<8x32xbf16>, vector<32x128xbf16>, vector<8x128xf32> -> vector<8x128xf32>
    %74 = arith.index_cast %c1_i32 : i32 to index
    %c0_34 = arith.constant 0 : index
    %c0_35 = arith.constant 0 : index
    %75 = vector.load %arg6[%74, %c0_34, %c0_35] : memref<8x8x256xf32, #tpu.memory_space<vmem>>, vector<1x8x128xf32>
    %76 = vector.shape_cast %75 : vector<1x8x128xf32> to vector<8x128xf32>
    %77 = arith.addf %76, %69 : vector<8x128xf32>
    %78 = arith.index_cast %65 : i32 to index
    %c0_36 = arith.constant 0 : index
    %c128_37 = arith.constant 128 : index
    %79 = vector.load %arg6[%78, %c0_36, %c128_37] : memref<8x8x256xf32, #tpu.memory_space<vmem>>, vector<1x8x128xf32>
    %80 = vector.shape_cast %79 : vector<1x8x128xf32> to vector<8x128xf32>
    %81 = arith.addf %80, %73 : vector<8x128xf32>
    %82 = arith.negf %77 : vector<8x128xf32>
    %83 = math.exp %82 : vector<8x128xf32>
    %cst_38 = arith.constant 1.000000e+00 : f32
    %84 = vector.broadcast %cst_38 : f32 to vector<8x128xf32>
    %85 = arith.addf %84, %83 : vector<8x128xf32>
    %86 = arith.divf %84, %85 : vector<8x128xf32>
    %87 = math.tanh %77 : vector<8x128xf32>
    %88 = vector.extract_strided_slice %86 {offsets = [0, 0], sizes = [8, 32], strides = [1, 1]} : vector<8x128xf32> to vector<8x32xf32>
    %89 = vector.extract_strided_slice %86 {offsets = [0, 32], sizes = [8, 32], strides = [1, 1]} : vector<8x128xf32> to vector<8x32xf32>
    %90 = vector.extract_strided_slice %87 {offsets = [0, 64], sizes = [8, 32], strides = [1, 1]} : vector<8x128xf32> to vector<8x32xf32>
    %91 = vector.extract_strided_slice %86 {offsets = [0, 96], sizes = [8, 32], strides = [1, 1]} : vector<8x128xf32> to vector<8x32xf32>
    %92 = arith.mulf %89, %39 : vector<8x32xf32>
    %93 = arith.mulf %88, %90 : vector<8x32xf32>
    %94 = arith.addf %92, %93 : vector<8x32xf32>
    %95 = math.tanh %94 : vector<8x32xf32>
    %96 = arith.mulf %91, %95 : vector<8x32xf32>
    %97 = arith.negf %81 : vector<8x128xf32>
    %98 = math.exp %97 : vector<8x128xf32>
    %cst_39 = arith.constant 1.000000e+00 : f32
    %99 = vector.broadcast %cst_39 : f32 to vector<8x128xf32>
    %100 = arith.addf %99, %98 : vector<8x128xf32>
    %101 = arith.divf %99, %100 : vector<8x128xf32>
    %102 = math.tanh %81 : vector<8x128xf32>
    %103 = vector.extract_strided_slice %101 {offsets = [0, 0], sizes = [8, 32], strides = [1, 1]} : vector<8x128xf32> to vector<8x32xf32>
    %104 = vector.extract_strided_slice %101 {offsets = [0, 32], sizes = [8, 32], strides = [1, 1]} : vector<8x128xf32> to vector<8x32xf32>
    %105 = vector.extract_strided_slice %102 {offsets = [0, 64], sizes = [8, 32], strides = [1, 1]} : vector<8x128xf32> to vector<8x32xf32>
    %106 = vector.extract_strided_slice %101 {offsets = [0, 96], sizes = [8, 32], strides = [1, 1]} : vector<8x128xf32> to vector<8x32xf32>
    %107 = arith.mulf %104, %54 : vector<8x32xf32>
    %108 = arith.mulf %103, %105 : vector<8x32xf32>
    %109 = arith.addf %107, %108 : vector<8x32xf32>
    %110 = math.tanh %109 : vector<8x32xf32>
    %111 = arith.mulf %106, %110 : vector<8x32xf32>
    %112 = arith.index_cast %c1_i32 : i32 to index
    %c0_40 = arith.constant 0 : index
    %c0_41 = arith.constant 0 : index
    %113 = vector.load %arg5[%112, %c0_40, %c0_41] : memref<8x8x64xf32, #tpu.memory_space<vmem>>, vector<1x8x32xf32>
    %114 = vector.shape_cast %113 : vector<1x8x32xf32> to vector<8x32xf32>
    %115 = vector.shape_cast %96 : vector<8x32xf32> to vector<1x8x32xf32>
    tpu.vector_store %arg5[%112, %c0_40, %c0_41], %115 {strides = array<i32>} : memref<8x8x64xf32, #tpu.memory_space<vmem>>, vector<1x8x32xf32>,
    %116 = arith.index_cast %65 : i32 to index
    %c0_42 = arith.constant 0 : index
    %c32_43 = arith.constant 32 : index
    %117 = vector.load %arg5[%116, %c0_42, %c32_43] : memref<8x8x64xf32, #tpu.memory_space<vmem>>, vector<1x8x32xf32>
    %118 = vector.shape_cast %117 : vector<1x8x32xf32> to vector<8x32xf32>
    %119 = vector.shape_cast %111 : vector<8x32xf32> to vector<1x8x32xf32>
    tpu.vector_store %arg5[%116, %c0_42, %c32_43], %119 {strides = array<i32>} : memref<8x8x64xf32, #tpu.memory_space<vmem>>, vector<1x8x32xf32>,
    %c2_i32 = arith.constant 2 : i32
    %c7_i32_44 = arith.constant 7 : i32
    %120 = arith.subi %c7_i32_44, %c2_i32 : i32
    %121 = arith.truncf %96 : vector<8x32xf32> to vector<8x32xbf16>
    %c0_45 = arith.constant 0 : index
    %c0_46 = arith.constant 0 : index
    %c0_47 = arith.constant 0 : index
    %122 = vector.load %arg3[%c0_45, %c0_46, %c0_47] : memref<2x32x128xbf16, #tpu.memory_space<vmem>>, vector<1x32x128xbf16>
    %123 = vector.shape_cast %122 : vector<1x32x128xbf16> to vector<32x128xbf16>
    %cst_48 = arith.constant dense<0.000000e+00> : vector<8x128xf32>
    %124 = tpu.matmul %121, %123, %cst_48 {dimension_numbers = #tpu.dot_dimension_numbers<[1], [0], [0], [1], [0, 0, 1, 1], [], []>} : vector<8x32xbf16>, vector<32x128xbf16>, vector<8x128xf32> -> vector<8x128xf32>
    %125 = arith.truncf %111 : vector<8x32xf32> to vector<8x32xbf16>
    %c1_49 = arith.constant 1 : index
    %c0_50 = arith.constant 0 : index
    %c0_51 = arith.constant 0 : index
    %126 = vector.load %arg3[%c1_49, %c0_50, %c0_51] : memref<2x32x128xbf16, #tpu.memory_space<vmem>>, vector<1x32x128xbf16>
    %127 = vector.shape_cast %126 : vector<1x32x128xbf16> to vector<32x128xbf16>
    %cst_52 = arith.constant dense<0.000000e+00> : vector<8x128xf32>
    %128 = tpu.matmul %125, %127, %cst_52 {dimension_numbers = #tpu.dot_dimension_numbers<[1], [0], [0], [1], [0, 0, 1, 1], [], []>} : vector<8x32xbf16>, vector<32x128xbf16>, vector<8x128xf32> -> vector<8x128xf32>
    %129 = arith.index_cast %c2_i32 : i32 to index
    %c0_53 = arith.constant 0 : index
    %c0_54 = arith.constant 0 : index
    %130 = vector.load %arg6[%129, %c0_53, %c0_54] : memref<8x8x256xf32, #tpu.memory_space<vmem>>, vector<1x8x128xf32>
    %131 = vector.shape_cast %130 : vector<1x8x128xf32> to vector<8x128xf32>
    %132 = arith.addf %131, %124 : vector<8x128xf32>
    %133 = arith.index_cast %120 : i32 to index
    %c0_55 = arith.constant 0 : index
    %c128_56 = arith.constant 128 : index
    %134 = vector.load %arg6[%133, %c0_55, %c128_56] : memref<8x8x256xf32, #tpu.memory_space<vmem>>, vector<1x8x128xf32>
    %135 = vector.shape_cast %134 : vector<1x8x128xf32> to vector<8x128xf32>
    %136 = arith.addf %135, %128 : vector<8x128xf32>
    %137 = arith.negf %132 : vector<8x128xf32>
    %138 = math.exp %137 : vector<8x128xf32>
    %cst_57 = arith.constant 1.000000e+00 : f32
    %139 = vector.broadcast %cst_57 : f32 to vector<8x128xf32>
    %140 = arith.addf %139, %138 : vector<8x128xf32>
    %141 = arith.divf %139, %140 : vector<8x128xf32>
    %142 = math.tanh %132 : vector<8x128xf32>
    %143 = vector.extract_strided_slice %141 {offsets = [0, 0], sizes = [8, 32], strides = [1, 1]} : vector<8x128xf32> to vector<8x32xf32>
    %144 = vector.extract_strided_slice %141 {offsets = [0, 32], sizes = [8, 32], strides = [1, 1]} : vector<8x128xf32> to vector<8x32xf32>
    %145 = vector.extract_strided_slice %142 {offsets = [0, 64], sizes = [8, 32], strides = [1, 1]} : vector<8x128xf32> to vector<8x32xf32>
    %146 = vector.extract_strided_slice %141 {offsets = [0, 96], sizes = [8, 32], strides = [1, 1]} : vector<8x128xf32> to vector<8x32xf32>
    %147 = arith.mulf %144, %94 : vector<8x32xf32>
    %148 = arith.mulf %143, %145 : vector<8x32xf32>
    %149 = arith.addf %147, %148 : vector<8x32xf32>
    %150 = math.tanh %149 : vector<8x32xf32>
    %151 = arith.mulf %146, %150 : vector<8x32xf32>
    %152 = arith.negf %136 : vector<8x128xf32>
    %153 = math.exp %152 : vector<8x128xf32>
    %cst_58 = arith.constant 1.000000e+00 : f32
    %154 = vector.broadcast %cst_58 : f32 to vector<8x128xf32>
    %155 = arith.addf %154, %153 : vector<8x128xf32>
    %156 = arith.divf %154, %155 : vector<8x128xf32>
    %157 = math.tanh %136 : vector<8x128xf32>
    %158 = vector.extract_strided_slice %156 {offsets = [0, 0], sizes = [8, 32], strides = [1, 1]} : vector<8x128xf32> to vector<8x32xf32>
    %159 = vector.extract_strided_slice %156 {offsets = [0, 32], sizes = [8, 32], strides = [1, 1]} : vector<8x128xf32> to vector<8x32xf32>
    %160 = vector.extract_strided_slice %157 {offsets = [0, 64], sizes = [8, 32], strides = [1, 1]} : vector<8x128xf32> to vector<8x32xf32>
    %161 = vector.extract_strided_slice %156 {offsets = [0, 96], sizes = [8, 32], strides = [1, 1]} : vector<8x128xf32> to vector<8x32xf32>
    %162 = arith.mulf %159, %109 : vector<8x32xf32>
    %163 = arith.mulf %158, %160 : vector<8x32xf32>
    %164 = arith.addf %162, %163 : vector<8x32xf32>
    %165 = math.tanh %164 : vector<8x32xf32>
    %166 = arith.mulf %161, %165 : vector<8x32xf32>
    %167 = arith.index_cast %c2_i32 : i32 to index
    %c0_59 = arith.constant 0 : index
    %c0_60 = arith.constant 0 : index
    %168 = vector.load %arg5[%167, %c0_59, %c0_60] : memref<8x8x64xf32, #tpu.memory_space<vmem>>, vector<1x8x32xf32>
    %169 = vector.shape_cast %168 : vector<1x8x32xf32> to vector<8x32xf32>
    %170 = vector.shape_cast %151 : vector<8x32xf32> to vector<1x8x32xf32>
    tpu.vector_store %arg5[%167, %c0_59, %c0_60], %170 {strides = array<i32>} : memref<8x8x64xf32, #tpu.memory_space<vmem>>, vector<1x8x32xf32>,
    %171 = arith.index_cast %120 : i32 to index
    %c0_61 = arith.constant 0 : index
    %c32_62 = arith.constant 32 : index
    %172 = vector.load %arg5[%171, %c0_61, %c32_62] : memref<8x8x64xf32, #tpu.memory_space<vmem>>, vector<1x8x32xf32>
    %173 = vector.shape_cast %172 : vector<1x8x32xf32> to vector<8x32xf32>
    %174 = vector.shape_cast %166 : vector<8x32xf32> to vector<1x8x32xf32>
    tpu.vector_store %arg5[%171, %c0_61, %c32_62], %174 {strides = array<i32>} : memref<8x8x64xf32, #tpu.memory_space<vmem>>, vector<1x8x32xf32>,
    %c3_i32 = arith.constant 3 : i32
    %c7_i32_63 = arith.constant 7 : i32
    %175 = arith.subi %c7_i32_63, %c3_i32 : i32
    %176 = arith.truncf %151 : vector<8x32xf32> to vector<8x32xbf16>
    %c0_64 = arith.constant 0 : index
    %c0_65 = arith.constant 0 : index
    %c0_66 = arith.constant 0 : index
    %177 = vector.load %arg3[%c0_64, %c0_65, %c0_66] : memref<2x32x128xbf16, #tpu.memory_space<vmem>>, vector<1x32x128xbf16>
    %178 = vector.shape_cast %177 : vector<1x32x128xbf16> to vector<32x128xbf16>
    %cst_67 = arith.constant dense<0.000000e+00> : vector<8x128xf32>
    %179 = tpu.matmul %176, %178, %cst_67 {dimension_numbers = #tpu.dot_dimension_numbers<[1], [0], [0], [1], [0, 0, 1, 1], [], []>} : vector<8x32xbf16>, vector<32x128xbf16>, vector<8x128xf32> -> vector<8x128xf32>
    %180 = arith.truncf %166 : vector<8x32xf32> to vector<8x32xbf16>
    %c1_68 = arith.constant 1 : index
    %c0_69 = arith.constant 0 : index
    %c0_70 = arith.constant 0 : index
    %181 = vector.load %arg3[%c1_68, %c0_69, %c0_70] : memref<2x32x128xbf16, #tpu.memory_space<vmem>>, vector<1x32x128xbf16>
    %182 = vector.shape_cast %181 : vector<1x32x128xbf16> to vector<32x128xbf16>
    %cst_71 = arith.constant dense<0.000000e+00> : vector<8x128xf32>
    %183 = tpu.matmul %180, %182, %cst_71 {dimension_numbers = #tpu.dot_dimension_numbers<[1], [0], [0], [1], [0, 0, 1, 1], [], []>} : vector<8x32xbf16>, vector<32x128xbf16>, vector<8x128xf32> -> vector<8x128xf32>
    %184 = arith.index_cast %c3_i32 : i32 to index
    %c0_72 = arith.constant 0 : index
    %c0_73 = arith.constant 0 : index
    %185 = vector.load %arg6[%184, %c0_72, %c0_73] : memref<8x8x256xf32, #tpu.memory_space<vmem>>, vector<1x8x128xf32>
    %186 = vector.shape_cast %185 : vector<1x8x128xf32> to vector<8x128xf32>
    %187 = arith.addf %186, %179 : vector<8x128xf32>
    %188 = arith.index_cast %175 : i32 to index
    %c0_74 = arith.constant 0 : index
    %c128_75 = arith.constant 128 : index
    %189 = vector.load %arg6[%188, %c0_74, %c128_75] : memref<8x8x256xf32, #tpu.memory_space<vmem>>, vector<1x8x128xf32>
    %190 = vector.shape_cast %189 : vector<1x8x128xf32> to vector<8x128xf32>
    %191 = arith.addf %190, %183 : vector<8x128xf32>
    %192 = arith.negf %187 : vector<8x128xf32>
    %193 = math.exp %192 : vector<8x128xf32>
    %cst_76 = arith.constant 1.000000e+00 : f32
    %194 = vector.broadcast %cst_76 : f32 to vector<8x128xf32>
    %195 = arith.addf %194, %193 : vector<8x128xf32>
    %196 = arith.divf %194, %195 : vector<8x128xf32>
    %197 = math.tanh %187 : vector<8x128xf32>
    %198 = vector.extract_strided_slice %196 {offsets = [0, 0], sizes = [8, 32], strides = [1, 1]} : vector<8x128xf32> to vector<8x32xf32>
    %199 = vector.extract_strided_slice %196 {offsets = [0, 32], sizes = [8, 32], strides = [1, 1]} : vector<8x128xf32> to vector<8x32xf32>
    %200 = vector.extract_strided_slice %197 {offsets = [0, 64], sizes = [8, 32], strides = [1, 1]} : vector<8x128xf32> to vector<8x32xf32>
    %201 = vector.extract_strided_slice %196 {offsets = [0, 96], sizes = [8, 32], strides = [1, 1]} : vector<8x128xf32> to vector<8x32xf32>
    %202 = arith.mulf %199, %149 : vector<8x32xf32>
    %203 = arith.mulf %198, %200 : vector<8x32xf32>
    %204 = arith.addf %202, %203 : vector<8x32xf32>
    %205 = math.tanh %204 : vector<8x32xf32>
    %206 = arith.mulf %201, %205 : vector<8x32xf32>
    %207 = arith.negf %191 : vector<8x128xf32>
    %208 = math.exp %207 : vector<8x128xf32>
    %cst_77 = arith.constant 1.000000e+00 : f32
    %209 = vector.broadcast %cst_77 : f32 to vector<8x128xf32>
    %210 = arith.addf %209, %208 : vector<8x128xf32>
    %211 = arith.divf %209, %210 : vector<8x128xf32>
    %212 = math.tanh %191 : vector<8x128xf32>
    %213 = vector.extract_strided_slice %211 {offsets = [0, 0], sizes = [8, 32], strides = [1, 1]} : vector<8x128xf32> to vector<8x32xf32>
    %214 = vector.extract_strided_slice %211 {offsets = [0, 32], sizes = [8, 32], strides = [1, 1]} : vector<8x128xf32> to vector<8x32xf32>
    %215 = vector.extract_strided_slice %212 {offsets = [0, 64], sizes = [8, 32], strides = [1, 1]} : vector<8x128xf32> to vector<8x32xf32>
    %216 = vector.extract_strided_slice %211 {offsets = [0, 96], sizes = [8, 32], strides = [1, 1]} : vector<8x128xf32> to vector<8x32xf32>
    %217 = arith.mulf %214, %164 : vector<8x32xf32>
    %218 = arith.mulf %213, %215 : vector<8x32xf32>
    %219 = arith.addf %217, %218 : vector<8x32xf32>
    %220 = math.tanh %219 : vector<8x32xf32>
    %221 = arith.mulf %216, %220 : vector<8x32xf32>
    %222 = arith.index_cast %c3_i32 : i32 to index
    %c0_78 = arith.constant 0 : index
    %c0_79 = arith.constant 0 : index
    %223 = vector.load %arg5[%222, %c0_78, %c0_79] : memref<8x8x64xf32, #tpu.memory_space<vmem>>, vector<1x8x32xf32>
    %224 = vector.shape_cast %223 : vector<1x8x32xf32> to vector<8x32xf32>
    %225 = vector.shape_cast %206 : vector<8x32xf32> to vector<1x8x32xf32>
    tpu.vector_store %arg5[%222, %c0_78, %c0_79], %225 {strides = array<i32>} : memref<8x8x64xf32, #tpu.memory_space<vmem>>, vector<1x8x32xf32>,
    %226 = arith.index_cast %175 : i32 to index
    %c0_80 = arith.constant 0 : index
    %c32_81 = arith.constant 32 : index
    %227 = vector.load %arg5[%226, %c0_80, %c32_81] : memref<8x8x64xf32, #tpu.memory_space<vmem>>, vector<1x8x32xf32>
    %228 = vector.shape_cast %227 : vector<1x8x32xf32> to vector<8x32xf32>
    %229 = vector.shape_cast %221 : vector<8x32xf32> to vector<1x8x32xf32>
    tpu.vector_store %arg5[%226, %c0_80, %c32_81], %229 {strides = array<i32>} : memref<8x8x64xf32, #tpu.memory_space<vmem>>, vector<1x8x32xf32>,
    %c4_i32 = arith.constant 4 : i32
    %c7_i32_82 = arith.constant 7 : i32
    %230 = arith.subi %c7_i32_82, %c4_i32 : i32
    %231 = arith.truncf %206 : vector<8x32xf32> to vector<8x32xbf16>
    %c0_83 = arith.constant 0 : index
    %c0_84 = arith.constant 0 : index
    %c0_85 = arith.constant 0 : index
    %232 = vector.load %arg3[%c0_83, %c0_84, %c0_85] : memref<2x32x128xbf16, #tpu.memory_space<vmem>>, vector<1x32x128xbf16>
    %233 = vector.shape_cast %232 : vector<1x32x128xbf16> to vector<32x128xbf16>
    %cst_86 = arith.constant dense<0.000000e+00> : vector<8x128xf32>
    %234 = tpu.matmul %231, %233, %cst_86 {dimension_numbers = #tpu.dot_dimension_numbers<[1], [0], [0], [1], [0, 0, 1, 1], [], []>} : vector<8x32xbf16>, vector<32x128xbf16>, vector<8x128xf32> -> vector<8x128xf32>
    %235 = arith.truncf %221 : vector<8x32xf32> to vector<8x32xbf16>
    %c1_87 = arith.constant 1 : index
    %c0_88 = arith.constant 0 : index
    %c0_89 = arith.constant 0 : index
    %236 = vector.load %arg3[%c1_87, %c0_88, %c0_89] : memref<2x32x128xbf16, #tpu.memory_space<vmem>>, vector<1x32x128xbf16>
    %237 = vector.shape_cast %236 : vector<1x32x128xbf16> to vector<32x128xbf16>
    %cst_90 = arith.constant dense<0.000000e+00> : vector<8x128xf32>
    %238 = tpu.matmul %235, %237, %cst_90 {dimension_numbers = #tpu.dot_dimension_numbers<[1], [0], [0], [1], [0, 0, 1, 1], [], []>} : vector<8x32xbf16>, vector<32x128xbf16>, vector<8x128xf32> -> vector<8x128xf32>
    %239 = arith.index_cast %c4_i32 : i32 to index
    %c0_91 = arith.constant 0 : index
    %c0_92 = arith.constant 0 : index
    %240 = vector.load %arg6[%239, %c0_91, %c0_92] : memref<8x8x256xf32, #tpu.memory_space<vmem>>, vector<1x8x128xf32>
    %241 = vector.shape_cast %240 : vector<1x8x128xf32> to vector<8x128xf32>
    %242 = arith.addf %241, %234 : vector<8x128xf32>
    %243 = arith.index_cast %230 : i32 to index
    %c0_93 = arith.constant 0 : index
    %c128_94 = arith.constant 128 : index
    %244 = vector.load %arg6[%243, %c0_93, %c128_94] : memref<8x8x256xf32, #tpu.memory_space<vmem>>, vector<1x8x128xf32>
    %245 = vector.shape_cast %244 : vector<1x8x128xf32> to vector<8x128xf32>
    %246 = arith.addf %245, %238 : vector<8x128xf32>
    %247 = arith.negf %242 : vector<8x128xf32>
    %248 = math.exp %247 : vector<8x128xf32>
    %cst_95 = arith.constant 1.000000e+00 : f32
    %249 = vector.broadcast %cst_95 : f32 to vector<8x128xf32>
    %250 = arith.addf %249, %248 : vector<8x128xf32>
    %251 = arith.divf %249, %250 : vector<8x128xf32>
    %252 = math.tanh %242 : vector<8x128xf32>
    %253 = vector.extract_strided_slice %251 {offsets = [0, 0], sizes = [8, 32], strides = [1, 1]} : vector<8x128xf32> to vector<8x32xf32>
    %254 = vector.extract_strided_slice %251 {offsets = [0, 32], sizes = [8, 32], strides = [1, 1]} : vector<8x128xf32> to vector<8x32xf32>
    %255 = vector.extract_strided_slice %252 {offsets = [0, 64], sizes = [8, 32], strides = [1, 1]} : vector<8x128xf32> to vector<8x32xf32>
    %256 = vector.extract_strided_slice %251 {offsets = [0, 96], sizes = [8, 32], strides = [1, 1]} : vector<8x128xf32> to vector<8x32xf32>
    %257 = arith.mulf %254, %204 : vector<8x32xf32>
    %258 = arith.mulf %253, %255 : vector<8x32xf32>
    %259 = arith.addf %257, %258 : vector<8x32xf32>
    %260 = math.tanh %259 : vector<8x32xf32>
    %261 = arith.mulf %256, %260 : vector<8x32xf32>
    %262 = arith.negf %246 : vector<8x128xf32>
    %263 = math.exp %262 : vector<8x128xf32>
    %cst_96 = arith.constant 1.000000e+00 : f32
    %264 = vector.broadcast %cst_96 : f32 to vector<8x128xf32>
    %265 = arith.addf %264, %263 : vector<8x128xf32>
    %266 = arith.divf %264, %265 : vector<8x128xf32>
    %267 = math.tanh %246 : vector<8x128xf32>
    %268 = vector.extract_strided_slice %266 {offsets = [0, 0], sizes = [8, 32], strides = [1, 1]} : vector<8x128xf32> to vector<8x32xf32>
    %269 = vector.extract_strided_slice %266 {offsets = [0, 32], sizes = [8, 32], strides = [1, 1]} : vector<8x128xf32> to vector<8x32xf32>
    %270 = vector.extract_strided_slice %267 {offsets = [0, 64], sizes = [8, 32], strides = [1, 1]} : vector<8x128xf32> to vector<8x32xf32>
    %271 = vector.extract_strided_slice %266 {offsets = [0, 96], sizes = [8, 32], strides = [1, 1]} : vector<8x128xf32> to vector<8x32xf32>
    %272 = arith.mulf %269, %219 : vector<8x32xf32>
    %273 = arith.mulf %268, %270 : vector<8x32xf32>
    %274 = arith.addf %272, %273 : vector<8x32xf32>
    %275 = math.tanh %274 : vector<8x32xf32>
    %276 = arith.mulf %271, %275 : vector<8x32xf32>
    %277 = arith.index_cast %c4_i32 : i32 to index
    %c0_97 = arith.constant 0 : index
    %c0_98 = arith.constant 0 : index
    %278 = vector.load %arg5[%277, %c0_97, %c0_98] : memref<8x8x64xf32, #tpu.memory_space<vmem>>, vector<1x8x32xf32>
    %279 = vector.shape_cast %278 : vector<1x8x32xf32> to vector<8x32xf32>
    %280 = vector.shape_cast %261 : vector<8x32xf32> to vector<1x8x32xf32>
    tpu.vector_store %arg5[%277, %c0_97, %c0_98], %280 {strides = array<i32>} : memref<8x8x64xf32, #tpu.memory_space<vmem>>, vector<1x8x32xf32>,
    %281 = arith.index_cast %230 : i32 to index
    %c0_99 = arith.constant 0 : index
    %c32_100 = arith.constant 32 : index
    %282 = vector.load %arg5[%281, %c0_99, %c32_100] : memref<8x8x64xf32, #tpu.memory_space<vmem>>, vector<1x8x32xf32>
    %283 = vector.shape_cast %282 : vector<1x8x32xf32> to vector<8x32xf32>
    %284 = vector.shape_cast %276 : vector<8x32xf32> to vector<1x8x32xf32>
    tpu.vector_store %arg5[%281, %c0_99, %c32_100], %284 {strides = array<i32>} : memref<8x8x64xf32, #tpu.memory_space<vmem>>, vector<1x8x32xf32>,
    %c5_i32 = arith.constant 5 : i32
    %c7_i32_101 = arith.constant 7 : i32
    %285 = arith.subi %c7_i32_101, %c5_i32 : i32
    %286 = arith.truncf %261 : vector<8x32xf32> to vector<8x32xbf16>
    %c0_102 = arith.constant 0 : index
    %c0_103 = arith.constant 0 : index
    %c0_104 = arith.constant 0 : index
    %287 = vector.load %arg3[%c0_102, %c0_103, %c0_104] : memref<2x32x128xbf16, #tpu.memory_space<vmem>>, vector<1x32x128xbf16>
    %288 = vector.shape_cast %287 : vector<1x32x128xbf16> to vector<32x128xbf16>
    %cst_105 = arith.constant dense<0.000000e+00> : vector<8x128xf32>
    %289 = tpu.matmul %286, %288, %cst_105 {dimension_numbers = #tpu.dot_dimension_numbers<[1], [0], [0], [1], [0, 0, 1, 1], [], []>} : vector<8x32xbf16>, vector<32x128xbf16>, vector<8x128xf32> -> vector<8x128xf32>
    %290 = arith.truncf %276 : vector<8x32xf32> to vector<8x32xbf16>
    %c1_106 = arith.constant 1 : index
    %c0_107 = arith.constant 0 : index
    %c0_108 = arith.constant 0 : index
    %291 = vector.load %arg3[%c1_106, %c0_107, %c0_108] : memref<2x32x128xbf16, #tpu.memory_space<vmem>>, vector<1x32x128xbf16>
    %292 = vector.shape_cast %291 : vector<1x32x128xbf16> to vector<32x128xbf16>
    %cst_109 = arith.constant dense<0.000000e+00> : vector<8x128xf32>
    %293 = tpu.matmul %290, %292, %cst_109 {dimension_numbers = #tpu.dot_dimension_numbers<[1], [0], [0], [1], [0, 0, 1, 1], [], []>} : vector<8x32xbf16>, vector<32x128xbf16>, vector<8x128xf32> -> vector<8x128xf32>
    %294 = arith.index_cast %c5_i32 : i32 to index
    %c0_110 = arith.constant 0 : index
    %c0_111 = arith.constant 0 : index
    %295 = vector.load %arg6[%294, %c0_110, %c0_111] : memref<8x8x256xf32, #tpu.memory_space<vmem>>, vector<1x8x128xf32>
    %296 = vector.shape_cast %295 : vector<1x8x128xf32> to vector<8x128xf32>
    %297 = arith.addf %296, %289 : vector<8x128xf32>
    %298 = arith.index_cast %285 : i32 to index
    %c0_112 = arith.constant 0 : index
    %c128_113 = arith.constant 128 : index
    %299 = vector.load %arg6[%298, %c0_112, %c128_113] : memref<8x8x256xf32, #tpu.memory_space<vmem>>, vector<1x8x128xf32>
    %300 = vector.shape_cast %299 : vector<1x8x128xf32> to vector<8x128xf32>
    %301 = arith.addf %300, %293 : vector<8x128xf32>
    %302 = arith.negf %297 : vector<8x128xf32>
    %303 = math.exp %302 : vector<8x128xf32>
    %cst_114 = arith.constant 1.000000e+00 : f32
    %304 = vector.broadcast %cst_114 : f32 to vector<8x128xf32>
    %305 = arith.addf %304, %303 : vector<8x128xf32>
    %306 = arith.divf %304, %305 : vector<8x128xf32>
    %307 = math.tanh %297 : vector<8x128xf32>
    %308 = vector.extract_strided_slice %306 {offsets = [0, 0], sizes = [8, 32], strides = [1, 1]} : vector<8x128xf32> to vector<8x32xf32>
    %309 = vector.extract_strided_slice %306 {offsets = [0, 32], sizes = [8, 32], strides = [1, 1]} : vector<8x128xf32> to vector<8x32xf32>
    %310 = vector.extract_strided_slice %307 {offsets = [0, 64], sizes = [8, 32], strides = [1, 1]} : vector<8x128xf32> to vector<8x32xf32>
    %311 = vector.extract_strided_slice %306 {offsets = [0, 96], sizes = [8, 32], strides = [1, 1]} : vector<8x128xf32> to vector<8x32xf32>
    %312 = arith.mulf %309, %259 : vector<8x32xf32>
    %313 = arith.mulf %308, %310 : vector<8x32xf32>
    %314 = arith.addf %312, %313 : vector<8x32xf32>
    %315 = math.tanh %314 : vector<8x32xf32>
    %316 = arith.mulf %311, %315 : vector<8x32xf32>
    %317 = arith.negf %301 : vector<8x128xf32>
    %318 = math.exp %317 : vector<8x128xf32>
    %cst_115 = arith.constant 1.000000e+00 : f32
    %319 = vector.broadcast %cst_115 : f32 to vector<8x128xf32>
    %320 = arith.addf %319, %318 : vector<8x128xf32>
    %321 = arith.divf %319, %320 : vector<8x128xf32>
    %322 = math.tanh %301 : vector<8x128xf32>
    %323 = vector.extract_strided_slice %321 {offsets = [0, 0], sizes = [8, 32], strides = [1, 1]} : vector<8x128xf32> to vector<8x32xf32>
    %324 = vector.extract_strided_slice %321 {offsets = [0, 32], sizes = [8, 32], strides = [1, 1]} : vector<8x128xf32> to vector<8x32xf32>
    %325 = vector.extract_strided_slice %322 {offsets = [0, 64], sizes = [8, 32], strides = [1, 1]} : vector<8x128xf32> to vector<8x32xf32>
    %326 = vector.extract_strided_slice %321 {offsets = [0, 96], sizes = [8, 32], strides = [1, 1]} : vector<8x128xf32> to vector<8x32xf32>
    %327 = arith.mulf %324, %274 : vector<8x32xf32>
    %328 = arith.mulf %323, %325 : vector<8x32xf32>
    %329 = arith.addf %327, %328 : vector<8x32xf32>
    %330 = math.tanh %329 : vector<8x32xf32>
    %331 = arith.mulf %326, %330 : vector<8x32xf32>
    %332 = arith.index_cast %c5_i32 : i32 to index
    %c0_116 = arith.constant 0 : index
    %c0_117 = arith.constant 0 : index
    %333 = vector.load %arg5[%332, %c0_116, %c0_117] : memref<8x8x64xf32, #tpu.memory_space<vmem>>, vector<1x8x32xf32>
    %334 = vector.shape_cast %333 : vector<1x8x32xf32> to vector<8x32xf32>
    %335 = vector.shape_cast %316 : vector<8x32xf32> to vector<1x8x32xf32>
    tpu.vector_store %arg5[%332, %c0_116, %c0_117], %335 {strides = array<i32>} : memref<8x8x64xf32, #tpu.memory_space<vmem>>, vector<1x8x32xf32>,
    %336 = arith.index_cast %285 : i32 to index
    %c0_118 = arith.constant 0 : index
    %c32_119 = arith.constant 32 : index
    %337 = vector.load %arg5[%336, %c0_118, %c32_119] : memref<8x8x64xf32, #tpu.memory_space<vmem>>, vector<1x8x32xf32>
    %338 = vector.shape_cast %337 : vector<1x8x32xf32> to vector<8x32xf32>
    %339 = vector.shape_cast %331 : vector<8x32xf32> to vector<1x8x32xf32>
    tpu.vector_store %arg5[%336, %c0_118, %c32_119], %339 {strides = array<i32>} : memref<8x8x64xf32, #tpu.memory_space<vmem>>, vector<1x8x32xf32>,
    %c6_i32 = arith.constant 6 : i32
    %c7_i32_120 = arith.constant 7 : i32
    %340 = arith.subi %c7_i32_120, %c6_i32 : i32
    %341 = arith.truncf %316 : vector<8x32xf32> to vector<8x32xbf16>
    %c0_121 = arith.constant 0 : index
    %c0_122 = arith.constant 0 : index
    %c0_123 = arith.constant 0 : index
    %342 = vector.load %arg3[%c0_121, %c0_122, %c0_123] : memref<2x32x128xbf16, #tpu.memory_space<vmem>>, vector<1x32x128xbf16>
    %343 = vector.shape_cast %342 : vector<1x32x128xbf16> to vector<32x128xbf16>
    %cst_124 = arith.constant dense<0.000000e+00> : vector<8x128xf32>
    %344 = tpu.matmul %341, %343, %cst_124 {dimension_numbers = #tpu.dot_dimension_numbers<[1], [0], [0], [1], [0, 0, 1, 1], [], []>} : vector<8x32xbf16>, vector<32x128xbf16>, vector<8x128xf32> -> vector<8x128xf32>
    %345 = arith.truncf %331 : vector<8x32xf32> to vector<8x32xbf16>
    %c1_125 = arith.constant 1 : index
    %c0_126 = arith.constant 0 : index
    %c0_127 = arith.constant 0 : index
    %346 = vector.load %arg3[%c1_125, %c0_126, %c0_127] : memref<2x32x128xbf16, #tpu.memory_space<vmem>>, vector<1x32x128xbf16>
    %347 = vector.shape_cast %346 : vector<1x32x128xbf16> to vector<32x128xbf16>
    %cst_128 = arith.constant dense<0.000000e+00> : vector<8x128xf32>
    %348 = tpu.matmul %345, %347, %cst_128 {dimension_numbers = #tpu.dot_dimension_numbers<[1], [0], [0], [1], [0, 0, 1, 1], [], []>} : vector<8x32xbf16>, vector<32x128xbf16>, vector<8x128xf32> -> vector<8x128xf32>
    %349 = arith.index_cast %c6_i32 : i32 to index
    %c0_129 = arith.constant 0 : index
    %c0_130 = arith.constant 0 : index
    %350 = vector.load %arg6[%349, %c0_129, %c0_130] : memref<8x8x256xf32, #tpu.memory_space<vmem>>, vector<1x8x128xf32>
    %351 = vector.shape_cast %350 : vector<1x8x128xf32> to vector<8x128xf32>
    %352 = arith.addf %351, %344 : vector<8x128xf32>
    %353 = arith.index_cast %340 : i32 to index
    %c0_131 = arith.constant 0 : index
    %c128_132 = arith.constant 128 : index
    %354 = vector.load %arg6[%353, %c0_131, %c128_132] : memref<8x8x256xf32, #tpu.memory_space<vmem>>, vector<1x8x128xf32>
    %355 = vector.shape_cast %354 : vector<1x8x128xf32> to vector<8x128xf32>
    %356 = arith.addf %355, %348 : vector<8x128xf32>
    %357 = arith.negf %352 : vector<8x128xf32>
    %358 = math.exp %357 : vector<8x128xf32>
    %cst_133 = arith.constant 1.000000e+00 : f32
    %359 = vector.broadcast %cst_133 : f32 to vector<8x128xf32>
    %360 = arith.addf %359, %358 : vector<8x128xf32>
    %361 = arith.divf %359, %360 : vector<8x128xf32>
    %362 = math.tanh %352 : vector<8x128xf32>
    %363 = vector.extract_strided_slice %361 {offsets = [0, 0], sizes = [8, 32], strides = [1, 1]} : vector<8x128xf32> to vector<8x32xf32>
    %364 = vector.extract_strided_slice %361 {offsets = [0, 32], sizes = [8, 32], strides = [1, 1]} : vector<8x128xf32> to vector<8x32xf32>
    %365 = vector.extract_strided_slice %362 {offsets = [0, 64], sizes = [8, 32], strides = [1, 1]} : vector<8x128xf32> to vector<8x32xf32>
    %366 = vector.extract_strided_slice %361 {offsets = [0, 96], sizes = [8, 32], strides = [1, 1]} : vector<8x128xf32> to vector<8x32xf32>
    %367 = arith.mulf %364, %314 : vector<8x32xf32>
    %368 = arith.mulf %363, %365 : vector<8x32xf32>
    %369 = arith.addf %367, %368 : vector<8x32xf32>
    %370 = math.tanh %369 : vector<8x32xf32>
    %371 = arith.mulf %366, %370 : vector<8x32xf32>
    %372 = arith.negf %356 : vector<8x128xf32>
    %373 = math.exp %372 : vector<8x128xf32>
    %cst_134 = arith.constant 1.000000e+00 : f32
    %374 = vector.broadcast %cst_134 : f32 to vector<8x128xf32>
    %375 = arith.addf %374, %373 : vector<8x128xf32>
    %376 = arith.divf %374, %375 : vector<8x128xf32>
    %377 = math.tanh %356 : vector<8x128xf32>
    %378 = vector.extract_strided_slice %376 {offsets = [0, 0], sizes = [8, 32], strides = [1, 1]} : vector<8x128xf32> to vector<8x32xf32>
    %379 = vector.extract_strided_slice %376 {offsets = [0, 32], sizes = [8, 32], strides = [1, 1]} : vector<8x128xf32> to vector<8x32xf32>
    %380 = vector.extract_strided_slice %377 {offsets = [0, 64], sizes = [8, 32], strides = [1, 1]} : vector<8x128xf32> to vector<8x32xf32>
    %381 = vector.extract_strided_slice %376 {offsets = [0, 96], sizes = [8, 32], strides = [1, 1]} : vector<8x128xf32> to vector<8x32xf32>
    %382 = arith.mulf %379, %329 : vector<8x32xf32>
    %383 = arith.mulf %378, %380 : vector<8x32xf32>
    %384 = arith.addf %382, %383 : vector<8x32xf32>
    %385 = math.tanh %384 : vector<8x32xf32>
    %386 = arith.mulf %381, %385 : vector<8x32xf32>
    %387 = arith.index_cast %c6_i32 : i32 to index
    %c0_135 = arith.constant 0 : index
    %c0_136 = arith.constant 0 : index
    %388 = vector.load %arg5[%387, %c0_135, %c0_136] : memref<8x8x64xf32, #tpu.memory_space<vmem>>, vector<1x8x32xf32>
    %389 = vector.shape_cast %388 : vector<1x8x32xf32> to vector<8x32xf32>
    %390 = vector.shape_cast %371 : vector<8x32xf32> to vector<1x8x32xf32>
    tpu.vector_store %arg5[%387, %c0_135, %c0_136], %390 {strides = array<i32>} : memref<8x8x64xf32, #tpu.memory_space<vmem>>, vector<1x8x32xf32>,
    %391 = arith.index_cast %340 : i32 to index
    %c0_137 = arith.constant 0 : index
    %c32_138 = arith.constant 32 : index
    %392 = vector.load %arg5[%391, %c0_137, %c32_138] : memref<8x8x64xf32, #tpu.memory_space<vmem>>, vector<1x8x32xf32>
    %393 = vector.shape_cast %392 : vector<1x8x32xf32> to vector<8x32xf32>
    %394 = vector.shape_cast %386 : vector<8x32xf32> to vector<1x8x32xf32>
    tpu.vector_store %arg5[%391, %c0_137, %c32_138], %394 {strides = array<i32>} : memref<8x8x64xf32, #tpu.memory_space<vmem>>, vector<1x8x32xf32>,
    %c7_i32_139 = arith.constant 7 : i32
    %c7_i32_140 = arith.constant 7 : i32
    %395 = arith.subi %c7_i32_140, %c7_i32_139 : i32
    %396 = arith.truncf %371 : vector<8x32xf32> to vector<8x32xbf16>
    %c0_141 = arith.constant 0 : index
    %c0_142 = arith.constant 0 : index
    %c0_143 = arith.constant 0 : index
    %397 = vector.load %arg3[%c0_141, %c0_142, %c0_143] : memref<2x32x128xbf16, #tpu.memory_space<vmem>>, vector<1x32x128xbf16>
    %398 = vector.shape_cast %397 : vector<1x32x128xbf16> to vector<32x128xbf16>
    %cst_144 = arith.constant dense<0.000000e+00> : vector<8x128xf32>
    %399 = tpu.matmul %396, %398, %cst_144 {dimension_numbers = #tpu.dot_dimension_numbers<[1], [0], [0], [1], [0, 0, 1, 1], [], []>} : vector<8x32xbf16>, vector<32x128xbf16>, vector<8x128xf32> -> vector<8x128xf32>
    %400 = arith.truncf %386 : vector<8x32xf32> to vector<8x32xbf16>
    %c1_145 = arith.constant 1 : index
    %c0_146 = arith.constant 0 : index
    %c0_147 = arith.constant 0 : index
    %401 = vector.load %arg3[%c1_145, %c0_146, %c0_147] : memref<2x32x128xbf16, #tpu.memory_space<vmem>>, vector<1x32x128xbf16>
    %402 = vector.shape_cast %401 : vector<1x32x128xbf16> to vector<32x128xbf16>
    %cst_148 = arith.constant dense<0.000000e+00> : vector<8x128xf32>
    %403 = tpu.matmul %400, %402, %cst_148 {dimension_numbers = #tpu.dot_dimension_numbers<[1], [0], [0], [1], [0, 0, 1, 1], [], []>} : vector<8x32xbf16>, vector<32x128xbf16>, vector<8x128xf32> -> vector<8x128xf32>
    %404 = arith.index_cast %c7_i32_139 : i32 to index
    %c0_149 = arith.constant 0 : index
    %c0_150 = arith.constant 0 : index
    %405 = vector.load %arg6[%404, %c0_149, %c0_150] : memref<8x8x256xf32, #tpu.memory_space<vmem>>, vector<1x8x128xf32>
    %406 = vector.shape_cast %405 : vector<1x8x128xf32> to vector<8x128xf32>
    %407 = arith.addf %406, %399 : vector<8x128xf32>
    %408 = arith.index_cast %395 : i32 to index
    %c0_151 = arith.constant 0 : index
    %c128_152 = arith.constant 128 : index
    %409 = vector.load %arg6[%408, %c0_151, %c128_152] : memref<8x8x256xf32, #tpu.memory_space<vmem>>, vector<1x8x128xf32>
    %410 = vector.shape_cast %409 : vector<1x8x128xf32> to vector<8x128xf32>
    %411 = arith.addf %410, %403 : vector<8x128xf32>
    %412 = arith.negf %407 : vector<8x128xf32>
    %413 = math.exp %412 : vector<8x128xf32>
    %cst_153 = arith.constant 1.000000e+00 : f32
    %414 = vector.broadcast %cst_153 : f32 to vector<8x128xf32>
    %415 = arith.addf %414, %413 : vector<8x128xf32>
    %416 = arith.divf %414, %415 : vector<8x128xf32>
    %417 = math.tanh %407 : vector<8x128xf32>
    %418 = vector.extract_strided_slice %416 {offsets = [0, 0], sizes = [8, 32], strides = [1, 1]} : vector<8x128xf32> to vector<8x32xf32>
    %419 = vector.extract_strided_slice %416 {offsets = [0, 32], sizes = [8, 32], strides = [1, 1]} : vector<8x128xf32> to vector<8x32xf32>
    %420 = vector.extract_strided_slice %417 {offsets = [0, 64], sizes = [8, 32], strides = [1, 1]} : vector<8x128xf32> to vector<8x32xf32>
    %421 = vector.extract_strided_slice %416 {offsets = [0, 96], sizes = [8, 32], strides = [1, 1]} : vector<8x128xf32> to vector<8x32xf32>
    %422 = arith.mulf %419, %369 : vector<8x32xf32>
    %423 = arith.mulf %418, %420 : vector<8x32xf32>
    %424 = arith.addf %422, %423 : vector<8x32xf32>
    %425 = math.tanh %424 : vector<8x32xf32>
    %426 = arith.mulf %421, %425 : vector<8x32xf32>
    %427 = arith.negf %411 : vector<8x128xf32>
    %428 = math.exp %427 : vector<8x128xf32>
    %cst_154 = arith.constant 1.000000e+00 : f32
    %429 = vector.broadcast %cst_154 : f32 to vector<8x128xf32>
    %430 = arith.addf %429, %428 : vector<8x128xf32>
    %431 = arith.divf %429, %430 : vector<8x128xf32>
    %432 = math.tanh %411 : vector<8x128xf32>
    %433 = vector.extract_strided_slice %431 {offsets = [0, 0], sizes = [8, 32], strides = [1, 1]} : vector<8x128xf32> to vector<8x32xf32>
    %434 = vector.extract_strided_slice %431 {offsets = [0, 32], sizes = [8, 32], strides = [1, 1]} : vector<8x128xf32> to vector<8x32xf32>
    %435 = vector.extract_strided_slice %432 {offsets = [0, 64], sizes = [8, 32], strides = [1, 1]} : vector<8x128xf32> to vector<8x32xf32>
    %436 = vector.extract_strided_slice %431 {offsets = [0, 96], sizes = [8, 32], strides = [1, 1]} : vector<8x128xf32> to vector<8x32xf32>
    %437 = arith.mulf %434, %384 : vector<8x32xf32>
    %438 = arith.mulf %433, %435 : vector<8x32xf32>
    %439 = arith.addf %437, %438 : vector<8x32xf32>
    %440 = math.tanh %439 : vector<8x32xf32>
    %441 = arith.mulf %436, %440 : vector<8x32xf32>
    %442 = arith.index_cast %c7_i32_139 : i32 to index
    %c0_155 = arith.constant 0 : index
    %c0_156 = arith.constant 0 : index
    %443 = vector.load %arg5[%442, %c0_155, %c0_156] : memref<8x8x64xf32, #tpu.memory_space<vmem>>, vector<1x8x32xf32>
    %444 = vector.shape_cast %443 : vector<1x8x32xf32> to vector<8x32xf32>
    %445 = vector.shape_cast %426 : vector<8x32xf32> to vector<1x8x32xf32>
    tpu.vector_store %arg5[%442, %c0_155, %c0_156], %445 {strides = array<i32>} : memref<8x8x64xf32, #tpu.memory_space<vmem>>, vector<1x8x32xf32>,
    %446 = arith.index_cast %395 : i32 to index
    %c0_157 = arith.constant 0 : index
    %c32_158 = arith.constant 32 : index
    %447 = vector.load %arg5[%446, %c0_157, %c32_158] : memref<8x8x64xf32, #tpu.memory_space<vmem>>, vector<1x8x32xf32>
    %448 = vector.shape_cast %447 : vector<1x8x32xf32> to vector<8x32xf32>
    %449 = vector.shape_cast %441 : vector<8x32xf32> to vector<1x8x32xf32>
    tpu.vector_store %arg5[%446, %c0_157, %c32_158], %449 {strides = array<i32>} : memref<8x8x64xf32, #tpu.memory_space<vmem>>, vector<1x8x32xf32>,
    %c8_i32 = arith.constant 8 : i32
    return
  }
  func.func @transform_0(%arg0: i32) -> (i32, i32) {
    %c0_i32 = arith.constant 0 : i32
    %c0_i32_0 = arith.constant 0 : i32
    %c0_i32_1 = arith.constant 0 : i32
    return %c0_i32, %c0_i32_0 : i32, i32
  }
  func.func @transform_1(%arg0: i32) -> (i32, i32) {
    %c0_i32 = arith.constant 0 : i32
    %c0_i32_0 = arith.constant 0 : i32
    %c0_i32_1 = arith.constant 0 : i32
    return %c0_i32, %c0_i32_0 : i32, i32
  }
  func.func @transform_2(%arg0: i32) -> (i32, i32, i32) {
    %c0_i32 = arith.constant 0 : i32
    %c0_i32_0 = arith.constant 0 : i32
    %c0_i32_1 = arith.constant 0 : i32
    %c0_i32_2 = arith.constant 0 : i32
    return %c0_i32, %c0_i32_0, %c0_i32_1 : i32, i32, i32
  }
  func.func @transform_3(%arg0: i32) -> (i32, i32) {
    %c0_i32 = arith.constant 0 : i32
    %c0_i32_0 = arith.constant 0 : i32
    %c0_i32_1 = arith.constant 0 : i32
    return %c0_i32, %c0_i32_0 : i32, i32
  }
  func.func @transform_4(%arg0: i32) -> (i32, i32, i32) {
    %c0_i32 = arith.constant 0 : i32
    %c0_i32_0 = arith.constant 0 : i32
    %c0_i32_1 = arith.constant 0 : i32
    %c0_i32_2 = arith.constant 0 : i32
    return %c0_i32, %c0_i32_0, %c0_i32_1 : i32, i32, i32
  }
}

module attributes {stable_mosaic.version = 11 : i64} {
  func.func @_lstm_layer_kernel(%arg0: i32, %arg1: memref<64x64xbf16, #tpu.memory_space<vmem>>, %arg2: memref<64x256xbf16, #tpu.memory_space<vmem>>, %arg3: memref<2x32x128xbf16, #tpu.memory_space<vmem>>, %arg4: memref<1x256xf32, #tpu.memory_space<vmem>>, %arg5: memref<8x8x64xf32, #tpu.memory_space<vmem>>, %arg6: memref<8x8x256xf32, #tpu.memory_space<vmem>>) attributes {dimension_semantics = [#tpu.dimension_semantics<arbitrary>], iteration_bounds = array<i64: 1>, scalar_prefetch = 0 : i64, scratch_operands = 1 : i64, tpu.core_type = #tpu.core_type<tc>, window_params = [{pipeline_mode = #tpu.pipeline_mode<synchronous>, transform_indices = @transform_0, window_bounds = array<i64: 64, 64>}, {pipeline_mode = #tpu.pipeline_mode<synchronous>, transform_indices = @transform_1, window_bounds = array<i64: 64, 256>}, {pipeline_mode = #tpu.pipeline_mode<synchronous>, transform_indices = @transform_2, window_bounds = array<i64: 2, 32, 128>}, {pipeline_mode = #tpu.pipeline_mode<synchronous>, transform_indices = @transform_3, window_bounds = array<i64: 1, 256>}, {pipeline_mode = #tpu.pipeline_mode<synchronous>, transform_indices = @transform_4, window_bounds = array<i64: 8, 8, 64>}]} {
    %c0 = arith.constant 0 : index
    %c0_0 = arith.constant 0 : index
    %0 = vector.load %arg1[%c0, %c0_0] : memref<64x64xbf16, #tpu.memory_space<vmem>>, vector<64x64xbf16>
    %c0_1 = arith.constant 0 : index
    %c0_2 = arith.constant 0 : index
    %1 = vector.load %arg2[%c0_1, %c0_2] : memref<64x256xbf16, #tpu.memory_space<vmem>>, vector<64x256xbf16>
    %cst = arith.constant dense<0.000000e+00> : vector<64x256xf32>
    %2 = tpu.matmul %0, %1, %cst {dimension_numbers = #tpu.dot_dimension_numbers<[1], [0], [0], [1], [0, 0, 1, 1], [], []>} : vector<64x64xbf16>, vector<64x256xbf16>, vector<64x256xf32> -> vector<64x256xf32>
    %c0_3 = arith.constant 0 : index
    %c0_4 = arith.constant 0 : index
    %3 = vector.load %arg4[%c0_3, %c0_4] : memref<1x256xf32, #tpu.memory_space<vmem>>, vector<1x256xf32>
    %4 = vector.broadcast %3 : vector<1x256xf32> to vector<64x256xf32>
    %5 = arith.addf %2, %4 : vector<64x256xf32>
    %6 = vector.shape_cast %5 : vector<64x256xf32> to vector<8x8x256xf32>
    %c0_5 = arith.constant 0 : index
    %c0_6 = arith.constant 0 : index
    %c0_7 = arith.constant 0 : index
    %7 = vector.load %arg6[%c0_5, %c0_6, %c0_7] : memref<8x8x256xf32, #tpu.memory_space<vmem>>, vector<8x8x256xf32>
    tpu.vector_store %arg6[%c0_5, %c0_6, %c0_7], %6 {strides = array<i32>} : memref<8x8x256xf32, #tpu.memory_space<vmem>>, vector<8x8x256xf32>,
    %cst_8 = arith.constant 0.000000e+00 : f32
    %8 = vector.broadcast %cst_8 : f32 to vector<8x32xf32>
    %cst_9 = arith.constant 0.000000e+00 : f32
    %9 = vector.broadcast %cst_9 : f32 to vector<8x32xf32>
    %c0_i32 = arith.constant 0 : i32
    %c7_i32 = arith.constant 7 : i32
    %10 = arith.subi %c7_i32, %c0_i32 : i32
    %11 = arith.truncf %8 : vector<8x32xf32> to vector<8x32xbf16>
    %c0_10 = arith.constant 0 : index
    %c0_11 = arith.constant 0 : index
    %c0_12 = arith.constant 0 : index
    %12 = vector.load %arg3[%c0_10, %c0_11, %c0_12] : memref<2x32x128xbf16, #tpu.memory_space<vmem>>, vector<1x32x128xbf16>
    %13 = vector.shape_cast %12 : vector<1x32x128xbf16> to vector<32x128xbf16>
    %cst_13 = arith.constant dense<0.000000e+00> : vector<8x128xf32>
    %14 = tpu.matmul %11, %13, %cst_13 {dimension_numbers = #tpu.dot_dimension_numbers<[1], [0], [0], [1], [0, 0, 1, 1], [], []>} : vector<8x32xbf16>, vector<32x128xbf16>, vector<8x128xf32> -> vector<8x128xf32>
    %15 = arith.truncf %8 : vector<8x32xf32> to vector<8x32xbf16>
    %c1 = arith.constant 1 : index
    %c0_14 = arith.constant 0 : index
    %c0_15 = arith.constant 0 : index
    %16 = vector.load %arg3[%c1, %c0_14, %c0_15] : memref<2x32x128xbf16, #tpu.memory_space<vmem>>, vector<1x32x128xbf16>
    %17 = vector.shape_cast %16 : vector<1x32x128xbf16> to vector<32x128xbf16>
    %cst_16 = arith.constant dense<0.000000e+00> : vector<8x128xf32>
    %18 = tpu.matmul %15, %17, %cst_16 {dimension_numbers = #tpu.dot_dimension_numbers<[1], [0], [0], [1], [0, 0, 1, 1], [], []>} : vector<8x32xbf16>, vector<32x128xbf16>, vector<8x128xf32> -> vector<8x128xf32>
    %19 = arith.index_cast %c0_i32 : i32 to index
    %c0_17 = arith.constant 0 : index
    %c0_18 = arith.constant 0 : index
    %20 = vector.load %arg6[%19, %c0_17, %c0_18] : memref<8x8x256xf32, #tpu.memory_space<vmem>>, vector<1x8x128xf32>
    %21 = vector.shape_cast %20 : vector<1x8x128xf32> to vector<8x128xf32>
    %22 = arith.addf %21, %14 : vector<8x128xf32>
    %23 = arith.index_cast %10 : i32 to index
    %c0_19 = arith.constant 0 : index
    %c128 = arith.constant 128 : index
    %24 = vector.load %arg6[%23, %c0_19, %c128] : memref<8x8x256xf32, #tpu.memory_space<vmem>>, vector<1x8x128xf32>
    %25 = vector.shape_cast %24 : vector<1x8x128xf32> to vector<8x128xf32>
    %26 = arith.addf %25, %18 : vector<8x128xf32>
    %27 = arith.negf %22 : vector<8x128xf32>
    %28 = math.exp %27 : vector<8x128xf32>
    %cst_20 = arith.constant 1.000000e+00 : f32
    %29 = vector.broadcast %cst_20 : f32 to vector<8x128xf32>
    %30 = arith.addf %29, %28 : vector<8x128xf32>
    %31 = arith.divf %29, %30 : vector<8x128xf32>
    %32 = math.tanh %22 : vector<8x128xf32>
    %33 = vector.extract_strided_slice %31 {offsets = [0, 0], sizes = [8, 32], strides = [1, 1]} : vector<8x128xf32> to vector<8x32xf32>
    %34 = vector.extract_strided_slice %31 {offsets = [0, 32], sizes = [8, 32], strides = [1, 1]} : vector<8x128xf32> to vector<8x32xf32>
    %35 = vector.extract_strided_slice %32 {offsets = [0, 64], sizes = [8, 32], strides = [1, 1]} : vector<8x128xf32> to vector<8x32xf32>
    %36 = vector.extract_strided_slice %31 {offsets = [0, 96], sizes = [8, 32], strides = [1, 1]} : vector<8x128xf32> to vector<8x32xf32>
    %37 = arith.mulf %34, %9 : vector<8x32xf32>
    %38 = arith.mulf %33, %35 : vector<8x32xf32>
    %39 = arith.addf %37, %38 : vector<8x32xf32>
    %40 = math.tanh %39 : vector<8x32xf32>
    %41 = arith.mulf %36, %40 : vector<8x32xf32>
    %42 = arith.negf %26 : vector<8x128xf32>
    %43 = math.exp %42 : vector<8x128xf32>
    %cst_21 = arith.constant 1.000000e+00 : f32
    %44 = vector.broadcast %cst_21 : f32 to vector<8x128xf32>
    %45 = arith.addf %44, %43 : vector<8x128xf32>
    %46 = arith.divf %44, %45 : vector<8x128xf32>
    %47 = math.tanh %26 : vector<8x128xf32>
    %48 = vector.extract_strided_slice %46 {offsets = [0, 0], sizes = [8, 32], strides = [1, 1]} : vector<8x128xf32> to vector<8x32xf32>
    %49 = vector.extract_strided_slice %46 {offsets = [0, 32], sizes = [8, 32], strides = [1, 1]} : vector<8x128xf32> to vector<8x32xf32>
    %50 = vector.extract_strided_slice %47 {offsets = [0, 64], sizes = [8, 32], strides = [1, 1]} : vector<8x128xf32> to vector<8x32xf32>
    %51 = vector.extract_strided_slice %46 {offsets = [0, 96], sizes = [8, 32], strides = [1, 1]} : vector<8x128xf32> to vector<8x32xf32>
    %52 = arith.mulf %49, %9 : vector<8x32xf32>
    %53 = arith.mulf %48, %50 : vector<8x32xf32>
    %54 = arith.addf %52, %53 : vector<8x32xf32>
    %55 = math.tanh %54 : vector<8x32xf32>
    %56 = arith.mulf %51, %55 : vector<8x32xf32>
    %57 = arith.index_cast %c0_i32 : i32 to index
    %c0_22 = arith.constant 0 : index
    %c0_23 = arith.constant 0 : index
    %58 = vector.load %arg5[%57, %c0_22, %c0_23] : memref<8x8x64xf32, #tpu.memory_space<vmem>>, vector<1x8x32xf32>
    %59 = vector.shape_cast %58 : vector<1x8x32xf32> to vector<8x32xf32>
    %60 = vector.shape_cast %41 : vector<8x32xf32> to vector<1x8x32xf32>
    tpu.vector_store %arg5[%57, %c0_22, %c0_23], %60 {strides = array<i32>} : memref<8x8x64xf32, #tpu.memory_space<vmem>>, vector<1x8x32xf32>,
    %61 = arith.index_cast %10 : i32 to index
    %c0_24 = arith.constant 0 : index
    %c32 = arith.constant 32 : index
    %62 = vector.load %arg5[%61, %c0_24, %c32] : memref<8x8x64xf32, #tpu.memory_space<vmem>>, vector<1x8x32xf32>
    %63 = vector.shape_cast %62 : vector<1x8x32xf32> to vector<8x32xf32>
    %64 = vector.shape_cast %56 : vector<8x32xf32> to vector<1x8x32xf32>
    tpu.vector_store %arg5[%61, %c0_24, %c32], %64 {strides = array<i32>} : memref<8x8x64xf32, #tpu.memory_space<vmem>>, vector<1x8x32xf32>,
    %c1_i32 = arith.constant 1 : i32
    %c7_i32_25 = arith.constant 7 : i32
    %65 = arith.subi %c7_i32_25, %c1_i32 : i32
    %66 = arith.truncf %41 : vector<8x32xf32> to vector<8x32xbf16>
    %c0_26 = arith.constant 0 : index
    %c0_27 = arith.constant 0 : index
    %c0_28 = arith.constant 0 : index
    %67 = vector.load %arg3[%c0_26, %c0_27, %c0_28] : memref<2x32x128xbf16, #tpu.memory_space<vmem>>, vector<1x32x128xbf16>
    %68 = vector.shape_cast %67 : vector<1x32x128xbf16> to vector<32x128xbf16>
    %cst_29 = arith.constant dense<0.000000e+00> : vector<8x128xf32>
    %69 = tpu.matmul %66, %68, %cst_29 {dimension_numbers = #tpu.dot_dimension_numbers<[1], [0], [0], [1], [0, 0, 1, 1], [], []>} : vector<8x32xbf16>, vector<32x128xbf16>, vector<8x128xf32> -> vector<8x128xf32>
    %70 = arith.truncf %56 : vector<8x32xf32> to vector<8x32xbf16>
    %c1_30 = arith.constant 1 : index
    %c0_31 = arith.constant 0 : index
    %c0_32 = arith.constant 0 : index
    %71 = vector.load %arg3[%c1_30, %c0_31, %c0_32] : memref<2x32x128xbf16, #tpu.memory_space<vmem>>, vector<1x32x128xbf16>
    %72 = vector.shape_cast %71 : vector<1x32x128xbf16> to vector<32x128xbf16>
    %cst_33 = arith.constant dense<0.000000e+00> : vector<8x128xf32>
    %73 = tpu.matmul %70, %72, %cst_33 {dimension_numbers = #tpu.dot_dimension_numbers<[1], [0], [0], [1], [0, 0, 1, 1], [], []>} : vector<8x32xbf16>, vector<32x128xbf16>, vector<8x128xf32> -> vector<8x128xf32>
    %74 = arith.index_cast %c1_i32 : i32 to index
    %c0_34 = arith.constant 0 : index
    %c0_35 = arith.constant 0 : index
    %75 = vector.load %arg6[%74, %c0_34, %c0_35] : memref<8x8x256xf32, #tpu.memory_space<vmem>>, vector<1x8x128xf32>
    %76 = vector.shape_cast %75 : vector<1x8x128xf32> to vector<8x128xf32>
    %77 = arith.addf %76, %69 : vector<8x128xf32>
    %78 = arith.index_cast %65 : i32 to index
    %c0_36 = arith.constant 0 : index
    %c128_37 = arith.constant 128 : index
    %79 = vector.load %arg6[%78, %c0_36, %c128_37] : memref<8x8x256xf32, #tpu.memory_space<vmem>>, vector<1x8x128xf32>
    %80 = vector.shape_cast %79 : vector<1x8x128xf32> to vector<8x128xf32>
    %81 = arith.addf %80, %73 : vector<8x128xf32>
    %82 = arith.negf %77 : vector<8x128xf32>
    %83 = math.exp %82 : vector<8x128xf32>
    %cst_38 = arith.constant 1.000000e+00 : f32
    %84 = vector.broadcast %cst_38 : f32 to vector<8x128xf32>
    %85 = arith.addf %84, %83 : vector<8x128xf32>
    %86 = arith.divf %84, %85 : vector<8x128xf32>
    %87 = math.tanh %77 : vector<8x128xf32>
    %88 = vector.extract_strided_slice %86 {offsets = [0, 0], sizes = [8, 32], strides = [1, 1]} : vector<8x128xf32> to vector<8x32xf32>
    %89 = vector.extract_strided_slice %86 {offsets = [0, 32], sizes = [8, 32], strides = [1, 1]} : vector<8x128xf32> to vector<8x32xf32>
    %90 = vector.extract_strided_slice %87 {offsets = [0, 64], sizes = [8, 32], strides = [1, 1]} : vector<8x128xf32> to vector<8x32xf32>
    %91 = vector.extract_strided_slice %86 {offsets = [0, 96], sizes = [8, 32], strides = [1, 1]} : vector<8x128xf32> to vector<8x32xf32>
    %92 = arith.mulf %89, %39 : vector<8x32xf32>
    %93 = arith.mulf %88, %90 : vector<8x32xf32>
    %94 = arith.addf %92, %93 : vector<8x32xf32>
    %95 = math.tanh %94 : vector<8x32xf32>
    %96 = arith.mulf %91, %95 : vector<8x32xf32>
    %97 = arith.negf %81 : vector<8x128xf32>
    %98 = math.exp %97 : vector<8x128xf32>
    %cst_39 = arith.constant 1.000000e+00 : f32
    %99 = vector.broadcast %cst_39 : f32 to vector<8x128xf32>
    %100 = arith.addf %99, %98 : vector<8x128xf32>
    %101 = arith.divf %99, %100 : vector<8x128xf32>
    %102 = math.tanh %81 : vector<8x128xf32>
    %103 = vector.extract_strided_slice %101 {offsets = [0, 0], sizes = [8, 32], strides = [1, 1]} : vector<8x128xf32> to vector<8x32xf32>
    %104 = vector.extract_strided_slice %101 {offsets = [0, 32], sizes = [8, 32], strides = [1, 1]} : vector<8x128xf32> to vector<8x32xf32>
    %105 = vector.extract_strided_slice %102 {offsets = [0, 64], sizes = [8, 32], strides = [1, 1]} : vector<8x128xf32> to vector<8x32xf32>
    %106 = vector.extract_strided_slice %101 {offsets = [0, 96], sizes = [8, 32], strides = [1, 1]} : vector<8x128xf32> to vector<8x32xf32>
    %107 = arith.mulf %104, %54 : vector<8x32xf32>
    %108 = arith.mulf %103, %105 : vector<8x32xf32>
    %109 = arith.addf %107, %108 : vector<8x32xf32>
    %110 = math.tanh %109 : vector<8x32xf32>
    %111 = arith.mulf %106, %110 : vector<8x32xf32>
    %112 = arith.index_cast %c1_i32 : i32 to index
    %c0_40 = arith.constant 0 : index
    %c0_41 = arith.constant 0 : index
    %113 = vector.load %arg5[%112, %c0_40, %c0_41] : memref<8x8x64xf32, #tpu.memory_space<vmem>>, vector<1x8x32xf32>
    %114 = vector.shape_cast %113 : vector<1x8x32xf32> to vector<8x32xf32>
    %115 = vector.shape_cast %96 : vector<8x32xf32> to vector<1x8x32xf32>
    tpu.vector_store %arg5[%112, %c0_40, %c0_41], %115 {strides = array<i32>} : memref<8x8x64xf32, #tpu.memory_space<vmem>>, vector<1x8x32xf32>,
    %116 = arith.index_cast %65 : i32 to index
    %c0_42 = arith.constant 0 : index
    %c32_43 = arith.constant 32 : index
    %117 = vector.load %arg5[%116, %c0_42, %c32_43] : memref<8x8x64xf32, #tpu.memory_space<vmem>>, vector<1x8x32xf32>
    %118 = vector.shape_cast %117 : vector<1x8x32xf32> to vector<8x32xf32>
    %119 = vector.shape_cast %111 : vector<8x32xf32> to vector<1x8x32xf32>
    tpu.vector_store %arg5[%116, %c0_42, %c32_43], %119 {strides = array<i32>} : memref<8x8x64xf32, #tpu.memory_space<vmem>>, vector<1x8x32xf32>,
    %c2_i32 = arith.constant 2 : i32
    %c7_i32_44 = arith.constant 7 : i32
    %120 = arith.subi %c7_i32_44, %c2_i32 : i32
    %121 = arith.truncf %96 : vector<8x32xf32> to vector<8x32xbf16>
    %c0_45 = arith.constant 0 : index
    %c0_46 = arith.constant 0 : index
    %c0_47 = arith.constant 0 : index
    %122 = vector.load %arg3[%c0_45, %c0_46, %c0_47] : memref<2x32x128xbf16, #tpu.memory_space<vmem>>, vector<1x32x128xbf16>
    %123 = vector.shape_cast %122 : vector<1x32x128xbf16> to vector<32x128xbf16>
    %cst_48 = arith.constant dense<0.000000e+00> : vector<8x128xf32>
    %124 = tpu.matmul %121, %123, %cst_48 {dimension_numbers = #tpu.dot_dimension_numbers<[1], [0], [0], [1], [0, 0, 1, 1], [], []>} : vector<8x32xbf16>, vector<32x128xbf16>, vector<8x128xf32> -> vector<8x128xf32>
    %125 = arith.truncf %111 : vector<8x32xf32> to vector<8x32xbf16>
    %c1_49 = arith.constant 1 : index
    %c0_50 = arith.constant 0 : index
    %c0_51 = arith.constant 0 : index
    %126 = vector.load %arg3[%c1_49, %c0_50, %c0_51] : memref<2x32x128xbf16, #tpu.memory_space<vmem>>, vector<1x32x128xbf16>
    %127 = vector.shape_cast %126 : vector<1x32x128xbf16> to vector<32x128xbf16>
    %cst_52 = arith.constant dense<0.000000e+00> : vector<8x128xf32>
    %128 = tpu.matmul %125, %127, %cst_52 {dimension_numbers = #tpu.dot_dimension_numbers<[1], [0], [0], [1], [0, 0, 1, 1], [], []>} : vector<8x32xbf16>, vector<32x128xbf16>, vector<8x128xf32> -> vector<8x128xf32>
    %129 = arith.index_cast %c2_i32 : i32 to index
    %c0_53 = arith.constant 0 : index
    %c0_54 = arith.constant 0 : index
    %130 = vector.load %arg6[%129, %c0_53, %c0_54] : memref<8x8x256xf32, #tpu.memory_space<vmem>>, vector<1x8x128xf32>
    %131 = vector.shape_cast %130 : vector<1x8x128xf32> to vector<8x128xf32>
    %132 = arith.addf %131, %124 : vector<8x128xf32>
    %133 = arith.index_cast %120 : i32 to index
    %c0_55 = arith.constant 0 : index
    %c128_56 = arith.constant 128 : index
    %134 = vector.load %arg6[%133, %c0_55, %c128_56] : memref<8x8x256xf32, #tpu.memory_space<vmem>>, vector<1x8x128xf32>
    %135 = vector.shape_cast %134 : vector<1x8x128xf32> to vector<8x128xf32>
    %136 = arith.addf %135, %128 : vector<8x128xf32>
    %137 = arith.negf %132 : vector<8x128xf32>
    %138 = math.exp %137 : vector<8x128xf32>
    %cst_57 = arith.constant 1.000000e+00 : f32
    %139 = vector.broadcast %cst_57 : f32 to vector<8x128xf32>
    %140 = arith.addf %139, %138 : vector<8x128xf32>
    %141 = arith.divf %139, %140 : vector<8x128xf32>
    %142 = math.tanh %132 : vector<8x128xf32>
    %143 = vector.extract_strided_slice %141 {offsets = [0, 0], sizes = [8, 32], strides = [1, 1]} : vector<8x128xf32> to vector<8x32xf32>
    %144 = vector.extract_strided_slice %141 {offsets = [0, 32], sizes = [8, 32], strides = [1, 1]} : vector<8x128xf32> to vector<8x32xf32>
    %145 = vector.extract_strided_slice %142 {offsets = [0, 64], sizes = [8, 32], strides = [1, 1]} : vector<8x128xf32> to vector<8x32xf32>
    %146 = vector.extract_strided_slice %141 {offsets = [0, 96], sizes = [8, 32], strides = [1, 1]} : vector<8x128xf32> to vector<8x32xf32>
    %147 = arith.mulf %144, %94 : vector<8x32xf32>
    %148 = arith.mulf %143, %145 : vector<8x32xf32>
    %149 = arith.addf %147, %148 : vector<8x32xf32>
    %150 = math.tanh %149 : vector<8x32xf32>
    %151 = arith.mulf %146, %150 : vector<8x32xf32>
    %152 = arith.negf %136 : vector<8x128xf32>
    %153 = math.exp %152 : vector<8x128xf32>
    %cst_58 = arith.constant 1.000000e+00 : f32
    %154 = vector.broadcast %cst_58 : f32 to vector<8x128xf32>
    %155 = arith.addf %154, %153 : vector<8x128xf32>
    %156 = arith.divf %154, %155 : vector<8x128xf32>
    %157 = math.tanh %136 : vector<8x128xf32>
    %158 = vector.extract_strided_slice %156 {offsets = [0, 0], sizes = [8, 32], strides = [1, 1]} : vector<8x128xf32> to vector<8x32xf32>
    %159 = vector.extract_strided_slice %156 {offsets = [0, 32], sizes = [8, 32], strides = [1, 1]} : vector<8x128xf32> to vector<8x32xf32>
    %160 = vector.extract_strided_slice %157 {offsets = [0, 64], sizes = [8, 32], strides = [1, 1]} : vector<8x128xf32> to vector<8x32xf32>
    %161 = vector.extract_strided_slice %156 {offsets = [0, 96], sizes = [8, 32], strides = [1, 1]} : vector<8x128xf32> to vector<8x32xf32>
    %162 = arith.mulf %159, %109 : vector<8x32xf32>
    %163 = arith.mulf %158, %160 : vector<8x32xf32>
    %164 = arith.addf %162, %163 : vector<8x32xf32>
    %165 = math.tanh %164 : vector<8x32xf32>
    %166 = arith.mulf %161, %165 : vector<8x32xf32>
    %167 = arith.index_cast %c2_i32 : i32 to index
    %c0_59 = arith.constant 0 : index
    %c0_60 = arith.constant 0 : index
    %168 = vector.load %arg5[%167, %c0_59, %c0_60] : memref<8x8x64xf32, #tpu.memory_space<vmem>>, vector<1x8x32xf32>
    %169 = vector.shape_cast %168 : vector<1x8x32xf32> to vector<8x32xf32>
    %170 = vector.shape_cast %151 : vector<8x32xf32> to vector<1x8x32xf32>
    tpu.vector_store %arg5[%167, %c0_59, %c0_60], %170 {strides = array<i32>} : memref<8x8x64xf32, #tpu.memory_space<vmem>>, vector<1x8x32xf32>,
    %171 = arith.index_cast %120 : i32 to index
    %c0_61 = arith.constant 0 : index
    %c32_62 = arith.constant 32 : index
    %172 = vector.load %arg5[%171, %c0_61, %c32_62] : memref<8x8x64xf32, #tpu.memory_space<vmem>>, vector<1x8x32xf32>
    %173 = vector.shape_cast %172 : vector<1x8x32xf32> to vector<8x32xf32>
    %174 = vector.shape_cast %166 : vector<8x32xf32> to vector<1x8x32xf32>
    tpu.vector_store %arg5[%171, %c0_61, %c32_62], %174 {strides = array<i32>} : memref<8x8x64xf32, #tpu.memory_space<vmem>>, vector<1x8x32xf32>,
    %c3_i32 = arith.constant 3 : i32
    %c7_i32_63 = arith.constant 7 : i32
    %175 = arith.subi %c7_i32_63, %c3_i32 : i32
    %176 = arith.truncf %151 : vector<8x32xf32> to vector<8x32xbf16>
    %c0_64 = arith.constant 0 : index
    %c0_65 = arith.constant 0 : index
    %c0_66 = arith.constant 0 : index
    %177 = vector.load %arg3[%c0_64, %c0_65, %c0_66] : memref<2x32x128xbf16, #tpu.memory_space<vmem>>, vector<1x32x128xbf16>
    %178 = vector.shape_cast %177 : vector<1x32x128xbf16> to vector<32x128xbf16>
    %cst_67 = arith.constant dense<0.000000e+00> : vector<8x128xf32>
    %179 = tpu.matmul %176, %178, %cst_67 {dimension_numbers = #tpu.dot_dimension_numbers<[1], [0], [0], [1], [0, 0, 1, 1], [], []>} : vector<8x32xbf16>, vector<32x128xbf16>, vector<8x128xf32> -> vector<8x128xf32>
    %180 = arith.truncf %166 : vector<8x32xf32> to vector<8x32xbf16>
    %c1_68 = arith.constant 1 : index
    %c0_69 = arith.constant 0 : index
    %c0_70 = arith.constant 0 : index
    %181 = vector.load %arg3[%c1_68, %c0_69, %c0_70] : memref<2x32x128xbf16, #tpu.memory_space<vmem>>, vector<1x32x128xbf16>
    %182 = vector.shape_cast %181 : vector<1x32x128xbf16> to vector<32x128xbf16>
    %cst_71 = arith.constant dense<0.000000e+00> : vector<8x128xf32>
    %183 = tpu.matmul %180, %182, %cst_71 {dimension_numbers = #tpu.dot_dimension_numbers<[1], [0], [0], [1], [0, 0, 1, 1], [], []>} : vector<8x32xbf16>, vector<32x128xbf16>, vector<8x128xf32> -> vector<8x128xf32>
    %184 = arith.index_cast %c3_i32 : i32 to index
    %c0_72 = arith.constant 0 : index
    %c0_73 = arith.constant 0 : index
    %185 = vector.load %arg6[%184, %c0_72, %c0_73] : memref<8x8x256xf32, #tpu.memory_space<vmem>>, vector<1x8x128xf32>
    %186 = vector.shape_cast %185 : vector<1x8x128xf32> to vector<8x128xf32>
    %187 = arith.addf %186, %179 : vector<8x128xf32>
    %188 = arith.index_cast %175 : i32 to index
    %c0_74 = arith.constant 0 : index
    %c128_75 = arith.constant 128 : index
    %189 = vector.load %arg6[%188, %c0_74, %c128_75] : memref<8x8x256xf32, #tpu.memory_space<vmem>>, vector<1x8x128xf32>
    %190 = vector.shape_cast %189 : vector<1x8x128xf32> to vector<8x128xf32>
    %191 = arith.addf %190, %183 : vector<8x128xf32>
    %192 = arith.negf %187 : vector<8x128xf32>
    %193 = math.exp %192 : vector<8x128xf32>
    %cst_76 = arith.constant 1.000000e+00 : f32
    %194 = vector.broadcast %cst_76 : f32 to vector<8x128xf32>
    %195 = arith.addf %194, %193 : vector<8x128xf32>
    %196 = arith.divf %194, %195 : vector<8x128xf32>
    %197 = math.tanh %187 : vector<8x128xf32>
    %198 = vector.extract_strided_slice %196 {offsets = [0, 0], sizes = [8, 32], strides = [1, 1]} : vector<8x128xf32> to vector<8x32xf32>
    %199 = vector.extract_strided_slice %196 {offsets = [0, 32], sizes = [8, 32], strides = [1, 1]} : vector<8x128xf32> to vector<8x32xf32>
    %200 = vector.extract_strided_slice %197 {offsets = [0, 64], sizes = [8, 32], strides = [1, 1]} : vector<8x128xf32> to vector<8x32xf32>
    %201 = vector.extract_strided_slice %196 {offsets = [0, 96], sizes = [8, 32], strides = [1, 1]} : vector<8x128xf32> to vector<8x32xf32>
    %202 = arith.mulf %199, %149 : vector<8x32xf32>
    %203 = arith.mulf %198, %200 : vector<8x32xf32>
    %204 = arith.addf %202, %203 : vector<8x32xf32>
    %205 = math.tanh %204 : vector<8x32xf32>
    %206 = arith.mulf %201, %205 : vector<8x32xf32>
    %207 = arith.negf %191 : vector<8x128xf32>
    %208 = math.exp %207 : vector<8x128xf32>
    %cst_77 = arith.constant 1.000000e+00 : f32
    %209 = vector.broadcast %cst_77 : f32 to vector<8x128xf32>
    %210 = arith.addf %209, %208 : vector<8x128xf32>
    %211 = arith.divf %209, %210 : vector<8x128xf32>
    %212 = math.tanh %191 : vector<8x128xf32>
    %213 = vector.extract_strided_slice %211 {offsets = [0, 0], sizes = [8, 32], strides = [1, 1]} : vector<8x128xf32> to vector<8x32xf32>
    %214 = vector.extract_strided_slice %211 {offsets = [0, 32], sizes = [8, 32], strides = [1, 1]} : vector<8x128xf32> to vector<8x32xf32>
    %215 = vector.extract_strided_slice %212 {offsets = [0, 64], sizes = [8, 32], strides = [1, 1]} : vector<8x128xf32> to vector<8x32xf32>
    %216 = vector.extract_strided_slice %211 {offsets = [0, 96], sizes = [8, 32], strides = [1, 1]} : vector<8x128xf32> to vector<8x32xf32>
    %217 = arith.mulf %214, %164 : vector<8x32xf32>
    %218 = arith.mulf %213, %215 : vector<8x32xf32>
    %219 = arith.addf %217, %218 : vector<8x32xf32>
    %220 = math.tanh %219 : vector<8x32xf32>
    %221 = arith.mulf %216, %220 : vector<8x32xf32>
    %222 = arith.index_cast %c3_i32 : i32 to index
    %c0_78 = arith.constant 0 : index
    %c0_79 = arith.constant 0 : index
    %223 = vector.load %arg5[%222, %c0_78, %c0_79] : memref<8x8x64xf32, #tpu.memory_space<vmem>>, vector<1x8x32xf32>
    %224 = vector.shape_cast %223 : vector<1x8x32xf32> to vector<8x32xf32>
    %225 = vector.shape_cast %206 : vector<8x32xf32> to vector<1x8x32xf32>
    tpu.vector_store %arg5[%222, %c0_78, %c0_79], %225 {strides = array<i32>} : memref<8x8x64xf32, #tpu.memory_space<vmem>>, vector<1x8x32xf32>,
    %226 = arith.index_cast %175 : i32 to index
    %c0_80 = arith.constant 0 : index
    %c32_81 = arith.constant 32 : index
    %227 = vector.load %arg5[%226, %c0_80, %c32_81] : memref<8x8x64xf32, #tpu.memory_space<vmem>>, vector<1x8x32xf32>
    %228 = vector.shape_cast %227 : vector<1x8x32xf32> to vector<8x32xf32>
    %229 = vector.shape_cast %221 : vector<8x32xf32> to vector<1x8x32xf32>
    tpu.vector_store %arg5[%226, %c0_80, %c32_81], %229 {strides = array<i32>} : memref<8x8x64xf32, #tpu.memory_space<vmem>>, vector<1x8x32xf32>,
    %c4_i32 = arith.constant 4 : i32
    %c7_i32_82 = arith.constant 7 : i32
    %230 = arith.subi %c7_i32_82, %c4_i32 : i32
    %231 = arith.truncf %206 : vector<8x32xf32> to vector<8x32xbf16>
    %c0_83 = arith.constant 0 : index
    %c0_84 = arith.constant 0 : index
    %c0_85 = arith.constant 0 : index
    %232 = vector.load %arg3[%c0_83, %c0_84, %c0_85] : memref<2x32x128xbf16, #tpu.memory_space<vmem>>, vector<1x32x128xbf16>
    %233 = vector.shape_cast %232 : vector<1x32x128xbf16> to vector<32x128xbf16>
    %cst_86 = arith.constant dense<0.000000e+00> : vector<8x128xf32>
    %234 = tpu.matmul %231, %233, %cst_86 {dimension_numbers = #tpu.dot_dimension_numbers<[1], [0], [0], [1], [0, 0, 1, 1], [], []>} : vector<8x32xbf16>, vector<32x128xbf16>, vector<8x128xf32> -> vector<8x128xf32>
    %235 = arith.truncf %221 : vector<8x32xf32> to vector<8x32xbf16>
    %c1_87 = arith.constant 1 : index
    %c0_88 = arith.constant 0 : index
    %c0_89 = arith.constant 0 : index
    %236 = vector.load %arg3[%c1_87, %c0_88, %c0_89] : memref<2x32x128xbf16, #tpu.memory_space<vmem>>, vector<1x32x128xbf16>
    %237 = vector.shape_cast %236 : vector<1x32x128xbf16> to vector<32x128xbf16>
    %cst_90 = arith.constant dense<0.000000e+00> : vector<8x128xf32>
    %238 = tpu.matmul %235, %237, %cst_90 {dimension_numbers = #tpu.dot_dimension_numbers<[1], [0], [0], [1], [0, 0, 1, 1], [], []>} : vector<8x32xbf16>, vector<32x128xbf16>, vector<8x128xf32> -> vector<8x128xf32>
    %239 = arith.index_cast %c4_i32 : i32 to index
    %c0_91 = arith.constant 0 : index
    %c0_92 = arith.constant 0 : index
    %240 = vector.load %arg6[%239, %c0_91, %c0_92] : memref<8x8x256xf32, #tpu.memory_space<vmem>>, vector<1x8x128xf32>
    %241 = vector.shape_cast %240 : vector<1x8x128xf32> to vector<8x128xf32>
    %242 = arith.addf %241, %234 : vector<8x128xf32>
    %243 = arith.index_cast %230 : i32 to index
    %c0_93 = arith.constant 0 : index
    %c128_94 = arith.constant 128 : index
    %244 = vector.load %arg6[%243, %c0_93, %c128_94] : memref<8x8x256xf32, #tpu.memory_space<vmem>>, vector<1x8x128xf32>
    %245 = vector.shape_cast %244 : vector<1x8x128xf32> to vector<8x128xf32>
    %246 = arith.addf %245, %238 : vector<8x128xf32>
    %247 = arith.negf %242 : vector<8x128xf32>
    %248 = math.exp %247 : vector<8x128xf32>
    %cst_95 = arith.constant 1.000000e+00 : f32
    %249 = vector.broadcast %cst_95 : f32 to vector<8x128xf32>
    %250 = arith.addf %249, %248 : vector<8x128xf32>
    %251 = arith.divf %249, %250 : vector<8x128xf32>
    %252 = math.tanh %242 : vector<8x128xf32>
    %253 = vector.extract_strided_slice %251 {offsets = [0, 0], sizes = [8, 32], strides = [1, 1]} : vector<8x128xf32> to vector<8x32xf32>
    %254 = vector.extract_strided_slice %251 {offsets = [0, 32], sizes = [8, 32], strides = [1, 1]} : vector<8x128xf32> to vector<8x32xf32>
    %255 = vector.extract_strided_slice %252 {offsets = [0, 64], sizes = [8, 32], strides = [1, 1]} : vector<8x128xf32> to vector<8x32xf32>
    %256 = vector.extract_strided_slice %251 {offsets = [0, 96], sizes = [8, 32], strides = [1, 1]} : vector<8x128xf32> to vector<8x32xf32>
    %257 = arith.mulf %254, %204 : vector<8x32xf32>
    %258 = arith.mulf %253, %255 : vector<8x32xf32>
    %259 = arith.addf %257, %258 : vector<8x32xf32>
    %260 = math.tanh %259 : vector<8x32xf32>
    %261 = arith.mulf %256, %260 : vector<8x32xf32>
    %262 = arith.negf %246 : vector<8x128xf32>
    %263 = math.exp %262 : vector<8x128xf32>
    %cst_96 = arith.constant 1.000000e+00 : f32
    %264 = vector.broadcast %cst_96 : f32 to vector<8x128xf32>
    %265 = arith.addf %264, %263 : vector<8x128xf32>
    %266 = arith.divf %264, %265 : vector<8x128xf32>
    %267 = math.tanh %246 : vector<8x128xf32>
    %268 = vector.extract_strided_slice %266 {offsets = [0, 0], sizes = [8, 32], strides = [1, 1]} : vector<8x128xf32> to vector<8x32xf32>
    %269 = vector.extract_strided_slice %266 {offsets = [0, 32], sizes = [8, 32], strides = [1, 1]} : vector<8x128xf32> to vector<8x32xf32>
    %270 = vector.extract_strided_slice %267 {offsets = [0, 64], sizes = [8, 32], strides = [1, 1]} : vector<8x128xf32> to vector<8x32xf32>
    %271 = vector.extract_strided_slice %266 {offsets = [0, 96], sizes = [8, 32], strides = [1, 1]} : vector<8x128xf32> to vector<8x32xf32>
    %272 = arith.mulf %269, %219 : vector<8x32xf32>
    %273 = arith.mulf %268, %270 : vector<8x32xf32>
    %274 = arith.addf %272, %273 : vector<8x32xf32>
    %275 = math.tanh %274 : vector<8x32xf32>
    %276 = arith.mulf %271, %275 : vector<8x32xf32>
    %277 = arith.index_cast %c4_i32 : i32 to index
    %c0_97 = arith.constant 0 : index
    %c0_98 = arith.constant 0 : index
    %278 = vector.load %arg5[%277, %c0_97, %c0_98] : memref<8x8x64xf32, #tpu.memory_space<vmem>>, vector<1x8x32xf32>
    %279 = vector.shape_cast %278 : vector<1x8x32xf32> to vector<8x32xf32>
    %280 = vector.shape_cast %261 : vector<8x32xf32> to vector<1x8x32xf32>
    tpu.vector_store %arg5[%277, %c0_97, %c0_98], %280 {strides = array<i32>} : memref<8x8x64xf32, #tpu.memory_space<vmem>>, vector<1x8x32xf32>,
    %281 = arith.index_cast %230 : i32 to index
    %c0_99 = arith.constant 0 : index
    %c32_100 = arith.constant 32 : index
    %282 = vector.load %arg5[%281, %c0_99, %c32_100] : memref<8x8x64xf32, #tpu.memory_space<vmem>>, vector<1x8x32xf32>
    %283 = vector.shape_cast %282 : vector<1x8x32xf32> to vector<8x32xf32>
    %284 = vector.shape_cast %276 : vector<8x32xf32> to vector<1x8x32xf32>
    tpu.vector_store %arg5[%281, %c0_99, %c32_100], %284 {strides = array<i32>} : memref<8x8x64xf32, #tpu.memory_space<vmem>>, vector<1x8x32xf32>,
    %c5_i32 = arith.constant 5 : i32
    %c7_i32_101 = arith.constant 7 : i32
    %285 = arith.subi %c7_i32_101, %c5_i32 : i32
    %286 = arith.truncf %261 : vector<8x32xf32> to vector<8x32xbf16>
    %c0_102 = arith.constant 0 : index
    %c0_103 = arith.constant 0 : index
    %c0_104 = arith.constant 0 : index
    %287 = vector.load %arg3[%c0_102, %c0_103, %c0_104] : memref<2x32x128xbf16, #tpu.memory_space<vmem>>, vector<1x32x128xbf16>
    %288 = vector.shape_cast %287 : vector<1x32x128xbf16> to vector<32x128xbf16>
    %cst_105 = arith.constant dense<0.000000e+00> : vector<8x128xf32>
    %289 = tpu.matmul %286, %288, %cst_105 {dimension_numbers = #tpu.dot_dimension_numbers<[1], [0], [0], [1], [0, 0, 1, 1], [], []>} : vector<8x32xbf16>, vector<32x128xbf16>, vector<8x128xf32> -> vector<8x128xf32>
    %290 = arith.truncf %276 : vector<8x32xf32> to vector<8x32xbf16>
    %c1_106 = arith.constant 1 : index
    %c0_107 = arith.constant 0 : index
    %c0_108 = arith.constant 0 : index
    %291 = vector.load %arg3[%c1_106, %c0_107, %c0_108] : memref<2x32x128xbf16, #tpu.memory_space<vmem>>, vector<1x32x128xbf16>
    %292 = vector.shape_cast %291 : vector<1x32x128xbf16> to vector<32x128xbf16>
    %cst_109 = arith.constant dense<0.000000e+00> : vector<8x128xf32>
    %293 = tpu.matmul %290, %292, %cst_109 {dimension_numbers = #tpu.dot_dimension_numbers<[1], [0], [0], [1], [0, 0, 1, 1], [], []>} : vector<8x32xbf16>, vector<32x128xbf16>, vector<8x128xf32> -> vector<8x128xf32>
    %294 = arith.index_cast %c5_i32 : i32 to index
    %c0_110 = arith.constant 0 : index
    %c0_111 = arith.constant 0 : index
    %295 = vector.load %arg6[%294, %c0_110, %c0_111] : memref<8x8x256xf32, #tpu.memory_space<vmem>>, vector<1x8x128xf32>
    %296 = vector.shape_cast %295 : vector<1x8x128xf32> to vector<8x128xf32>
    %297 = arith.addf %296, %289 : vector<8x128xf32>
    %298 = arith.index_cast %285 : i32 to index
    %c0_112 = arith.constant 0 : index
    %c128_113 = arith.constant 128 : index
    %299 = vector.load %arg6[%298, %c0_112, %c128_113] : memref<8x8x256xf32, #tpu.memory_space<vmem>>, vector<1x8x128xf32>
    %300 = vector.shape_cast %299 : vector<1x8x128xf32> to vector<8x128xf32>
    %301 = arith.addf %300, %293 : vector<8x128xf32>
    %302 = arith.negf %297 : vector<8x128xf32>
    %303 = math.exp %302 : vector<8x128xf32>
    %cst_114 = arith.constant 1.000000e+00 : f32
    %304 = vector.broadcast %cst_114 : f32 to vector<8x128xf32>
    %305 = arith.addf %304, %303 : vector<8x128xf32>
    %306 = arith.divf %304, %305 : vector<8x128xf32>
    %307 = math.tanh %297 : vector<8x128xf32>
    %308 = vector.extract_strided_slice %306 {offsets = [0, 0], sizes = [8, 32], strides = [1, 1]} : vector<8x128xf32> to vector<8x32xf32>
    %309 = vector.extract_strided_slice %306 {offsets = [0, 32], sizes = [8, 32], strides = [1, 1]} : vector<8x128xf32> to vector<8x32xf32>
    %310 = vector.extract_strided_slice %307 {offsets = [0, 64], sizes = [8, 32], strides = [1, 1]} : vector<8x128xf32> to vector<8x32xf32>
    %311 = vector.extract_strided_slice %306 {offsets = [0, 96], sizes = [8, 32], strides = [1, 1]} : vector<8x128xf32> to vector<8x32xf32>
    %312 = arith.mulf %309, %259 : vector<8x32xf32>
    %313 = arith.mulf %308, %310 : vector<8x32xf32>
    %314 = arith.addf %312, %313 : vector<8x32xf32>
    %315 = math.tanh %314 : vector<8x32xf32>
    %316 = arith.mulf %311, %315 : vector<8x32xf32>
    %317 = arith.negf %301 : vector<8x128xf32>
    %318 = math.exp %317 : vector<8x128xf32>
    %cst_115 = arith.constant 1.000000e+00 : f32
    %319 = vector.broadcast %cst_115 : f32 to vector<8x128xf32>
    %320 = arith.addf %319, %318 : vector<8x128xf32>
    %321 = arith.divf %319, %320 : vector<8x128xf32>
    %322 = math.tanh %301 : vector<8x128xf32>
    %323 = vector.extract_strided_slice %321 {offsets = [0, 0], sizes = [8, 32], strides = [1, 1]} : vector<8x128xf32> to vector<8x32xf32>
    %324 = vector.extract_strided_slice %321 {offsets = [0, 32], sizes = [8, 32], strides = [1, 1]} : vector<8x128xf32> to vector<8x32xf32>
    %325 = vector.extract_strided_slice %322 {offsets = [0, 64], sizes = [8, 32], strides = [1, 1]} : vector<8x128xf32> to vector<8x32xf32>
    %326 = vector.extract_strided_slice %321 {offsets = [0, 96], sizes = [8, 32], strides = [1, 1]} : vector<8x128xf32> to vector<8x32xf32>
    %327 = arith.mulf %324, %274 : vector<8x32xf32>
    %328 = arith.mulf %323, %325 : vector<8x32xf32>
    %329 = arith.addf %327, %328 : vector<8x32xf32>
    %330 = math.tanh %329 : vector<8x32xf32>
    %331 = arith.mulf %326, %330 : vector<8x32xf32>
    %332 = arith.index_cast %c5_i32 : i32 to index
    %c0_116 = arith.constant 0 : index
    %c0_117 = arith.constant 0 : index
    %333 = vector.load %arg5[%332, %c0_116, %c0_117] : memref<8x8x64xf32, #tpu.memory_space<vmem>>, vector<1x8x32xf32>
    %334 = vector.shape_cast %333 : vector<1x8x32xf32> to vector<8x32xf32>
    %335 = vector.shape_cast %316 : vector<8x32xf32> to vector<1x8x32xf32>
    tpu.vector_store %arg5[%332, %c0_116, %c0_117], %335 {strides = array<i32>} : memref<8x8x64xf32, #tpu.memory_space<vmem>>, vector<1x8x32xf32>,
    %336 = arith.index_cast %285 : i32 to index
    %c0_118 = arith.constant 0 : index
    %c32_119 = arith.constant 32 : index
    %337 = vector.load %arg5[%336, %c0_118, %c32_119] : memref<8x8x64xf32, #tpu.memory_space<vmem>>, vector<1x8x32xf32>
    %338 = vector.shape_cast %337 : vector<1x8x32xf32> to vector<8x32xf32>
    %339 = vector.shape_cast %331 : vector<8x32xf32> to vector<1x8x32xf32>
    tpu.vector_store %arg5[%336, %c0_118, %c32_119], %339 {strides = array<i32>} : memref<8x8x64xf32, #tpu.memory_space<vmem>>, vector<1x8x32xf32>,
    %c6_i32 = arith.constant 6 : i32
    %c7_i32_120 = arith.constant 7 : i32
    %340 = arith.subi %c7_i32_120, %c6_i32 : i32
    %341 = arith.truncf %316 : vector<8x32xf32> to vector<8x32xbf16>
    %c0_121 = arith.constant 0 : index
    %c0_122 = arith.constant 0 : index
    %c0_123 = arith.constant 0 : index
    %342 = vector.load %arg3[%c0_121, %c0_122, %c0_123] : memref<2x32x128xbf16, #tpu.memory_space<vmem>>, vector<1x32x128xbf16>
    %343 = vector.shape_cast %342 : vector<1x32x128xbf16> to vector<32x128xbf16>
    %cst_124 = arith.constant dense<0.000000e+00> : vector<8x128xf32>
    %344 = tpu.matmul %341, %343, %cst_124 {dimension_numbers = #tpu.dot_dimension_numbers<[1], [0], [0], [1], [0, 0, 1, 1], [], []>} : vector<8x32xbf16>, vector<32x128xbf16>, vector<8x128xf32> -> vector<8x128xf32>
    %345 = arith.truncf %331 : vector<8x32xf32> to vector<8x32xbf16>
    %c1_125 = arith.constant 1 : index
    %c0_126 = arith.constant 0 : index
    %c0_127 = arith.constant 0 : index
    %346 = vector.load %arg3[%c1_125, %c0_126, %c0_127] : memref<2x32x128xbf16, #tpu.memory_space<vmem>>, vector<1x32x128xbf16>
    %347 = vector.shape_cast %346 : vector<1x32x128xbf16> to vector<32x128xbf16>
    %cst_128 = arith.constant dense<0.000000e+00> : vector<8x128xf32>
    %348 = tpu.matmul %345, %347, %cst_128 {dimension_numbers = #tpu.dot_dimension_numbers<[1], [0], [0], [1], [0, 0, 1, 1], [], []>} : vector<8x32xbf16>, vector<32x128xbf16>, vector<8x128xf32> -> vector<8x128xf32>
    %349 = arith.index_cast %c6_i32 : i32 to index
    %c0_129 = arith.constant 0 : index
    %c0_130 = arith.constant 0 : index
    %350 = vector.load %arg6[%349, %c0_129, %c0_130] : memref<8x8x256xf32, #tpu.memory_space<vmem>>, vector<1x8x128xf32>
    %351 = vector.shape_cast %350 : vector<1x8x128xf32> to vector<8x128xf32>
    %352 = arith.addf %351, %344 : vector<8x128xf32>
    %353 = arith.index_cast %340 : i32 to index
    %c0_131 = arith.constant 0 : index
    %c128_132 = arith.constant 128 : index
    %354 = vector.load %arg6[%353, %c0_131, %c128_132] : memref<8x8x256xf32, #tpu.memory_space<vmem>>, vector<1x8x128xf32>
    %355 = vector.shape_cast %354 : vector<1x8x128xf32> to vector<8x128xf32>
    %356 = arith.addf %355, %348 : vector<8x128xf32>
    %357 = arith.negf %352 : vector<8x128xf32>
    %358 = math.exp %357 : vector<8x128xf32>
    %cst_133 = arith.constant 1.000000e+00 : f32
    %359 = vector.broadcast %cst_133 : f32 to vector<8x128xf32>
    %360 = arith.addf %359, %358 : vector<8x128xf32>
    %361 = arith.divf %359, %360 : vector<8x128xf32>
    %362 = math.tanh %352 : vector<8x128xf32>
    %363 = vector.extract_strided_slice %361 {offsets = [0, 0], sizes = [8, 32], strides = [1, 1]} : vector<8x128xf32> to vector<8x32xf32>
    %364 = vector.extract_strided_slice %361 {offsets = [0, 32], sizes = [8, 32], strides = [1, 1]} : vector<8x128xf32> to vector<8x32xf32>
    %365 = vector.extract_strided_slice %362 {offsets = [0, 64], sizes = [8, 32], strides = [1, 1]} : vector<8x128xf32> to vector<8x32xf32>
    %366 = vector.extract_strided_slice %361 {offsets = [0, 96], sizes = [8, 32], strides = [1, 1]} : vector<8x128xf32> to vector<8x32xf32>
    %367 = arith.mulf %364, %314 : vector<8x32xf32>
    %368 = arith.mulf %363, %365 : vector<8x32xf32>
    %369 = arith.addf %367, %368 : vector<8x32xf32>
    %370 = math.tanh %369 : vector<8x32xf32>
    %371 = arith.mulf %366, %370 : vector<8x32xf32>
    %372 = arith.negf %356 : vector<8x128xf32>
    %373 = math.exp %372 : vector<8x128xf32>
    %cst_134 = arith.constant 1.000000e+00 : f32
    %374 = vector.broadcast %cst_134 : f32 to vector<8x128xf32>
    %375 = arith.addf %374, %373 : vector<8x128xf32>
    %376 = arith.divf %374, %375 : vector<8x128xf32>
    %377 = math.tanh %356 : vector<8x128xf32>
    %378 = vector.extract_strided_slice %376 {offsets = [0, 0], sizes = [8, 32], strides = [1, 1]} : vector<8x128xf32> to vector<8x32xf32>
    %379 = vector.extract_strided_slice %376 {offsets = [0, 32], sizes = [8, 32], strides = [1, 1]} : vector<8x128xf32> to vector<8x32xf32>
    %380 = vector.extract_strided_slice %377 {offsets = [0, 64], sizes = [8, 32], strides = [1, 1]} : vector<8x128xf32> to vector<8x32xf32>
    %381 = vector.extract_strided_slice %376 {offsets = [0, 96], sizes = [8, 32], strides = [1, 1]} : vector<8x128xf32> to vector<8x32xf32>
    %382 = arith.mulf %379, %329 : vector<8x32xf32>
    %383 = arith.mulf %378, %380 : vector<8x32xf32>
    %384 = arith.addf %382, %383 : vector<8x32xf32>
    %385 = math.tanh %384 : vector<8x32xf32>
    %386 = arith.mulf %381, %385 : vector<8x32xf32>
    %387 = arith.index_cast %c6_i32 : i32 to index
    %c0_135 = arith.constant 0 : index
    %c0_136 = arith.constant 0 : index
    %388 = vector.load %arg5[%387, %c0_135, %c0_136] : memref<8x8x64xf32, #tpu.memory_space<vmem>>, vector<1x8x32xf32>
    %389 = vector.shape_cast %388 : vector<1x8x32xf32> to vector<8x32xf32>
    %390 = vector.shape_cast %371 : vector<8x32xf32> to vector<1x8x32xf32>
    tpu.vector_store %arg5[%387, %c0_135, %c0_136], %390 {strides = array<i32>} : memref<8x8x64xf32, #tpu.memory_space<vmem>>, vector<1x8x32xf32>,
    %391 = arith.index_cast %340 : i32 to index
    %c0_137 = arith.constant 0 : index
    %c32_138 = arith.constant 32 : index
    %392 = vector.load %arg5[%391, %c0_137, %c32_138] : memref<8x8x64xf32, #tpu.memory_space<vmem>>, vector<1x8x32xf32>
    %393 = vector.shape_cast %392 : vector<1x8x32xf32> to vector<8x32xf32>
    %394 = vector.shape_cast %386 : vector<8x32xf32> to vector<1x8x32xf32>
    tpu.vector_store %arg5[%391, %c0_137, %c32_138], %394 {strides = array<i32>} : memref<8x8x64xf32, #tpu.memory_space<vmem>>, vector<1x8x32xf32>,
    %c7_i32_139 = arith.constant 7 : i32
    %c7_i32_140 = arith.constant 7 : i32
    %395 = arith.subi %c7_i32_140, %c7_i32_139 : i32
    %396 = arith.truncf %371 : vector<8x32xf32> to vector<8x32xbf16>
    %c0_141 = arith.constant 0 : index
    %c0_142 = arith.constant 0 : index
    %c0_143 = arith.constant 0 : index
    %397 = vector.load %arg3[%c0_141, %c0_142, %c0_143] : memref<2x32x128xbf16, #tpu.memory_space<vmem>>, vector<1x32x128xbf16>
    %398 = vector.shape_cast %397 : vector<1x32x128xbf16> to vector<32x128xbf16>
    %cst_144 = arith.constant dense<0.000000e+00> : vector<8x128xf32>
    %399 = tpu.matmul %396, %398, %cst_144 {dimension_numbers = #tpu.dot_dimension_numbers<[1], [0], [0], [1], [0, 0, 1, 1], [], []>} : vector<8x32xbf16>, vector<32x128xbf16>, vector<8x128xf32> -> vector<8x128xf32>
    %400 = arith.truncf %386 : vector<8x32xf32> to vector<8x32xbf16>
    %c1_145 = arith.constant 1 : index
    %c0_146 = arith.constant 0 : index
    %c0_147 = arith.constant 0 : index
    %401 = vector.load %arg3[%c1_145, %c0_146, %c0_147] : memref<2x32x128xbf16, #tpu.memory_space<vmem>>, vector<1x32x128xbf16>
    %402 = vector.shape_cast %401 : vector<1x32x128xbf16> to vector<32x128xbf16>
    %cst_148 = arith.constant dense<0.000000e+00> : vector<8x128xf32>
    %403 = tpu.matmul %400, %402, %cst_148 {dimension_numbers = #tpu.dot_dimension_numbers<[1], [0], [0], [1], [0, 0, 1, 1], [], []>} : vector<8x32xbf16>, vector<32x128xbf16>, vector<8x128xf32> -> vector<8x128xf32>
    %404 = arith.index_cast %c7_i32_139 : i32 to index
    %c0_149 = arith.constant 0 : index
    %c0_150 = arith.constant 0 : index
    %405 = vector.load %arg6[%404, %c0_149, %c0_150] : memref<8x8x256xf32, #tpu.memory_space<vmem>>, vector<1x8x128xf32>
    %406 = vector.shape_cast %405 : vector<1x8x128xf32> to vector<8x128xf32>
    %407 = arith.addf %406, %399 : vector<8x128xf32>
    %408 = arith.index_cast %395 : i32 to index
    %c0_151 = arith.constant 0 : index
    %c128_152 = arith.constant 128 : index
    %409 = vector.load %arg6[%408, %c0_151, %c128_152] : memref<8x8x256xf32, #tpu.memory_space<vmem>>, vector<1x8x128xf32>
    %410 = vector.shape_cast %409 : vector<1x8x128xf32> to vector<8x128xf32>
    %411 = arith.addf %410, %403 : vector<8x128xf32>
    %412 = arith.negf %407 : vector<8x128xf32>
    %413 = math.exp %412 : vector<8x128xf32>
    %cst_153 = arith.constant 1.000000e+00 : f32
    %414 = vector.broadcast %cst_153 : f32 to vector<8x128xf32>
    %415 = arith.addf %414, %413 : vector<8x128xf32>
    %416 = arith.divf %414, %415 : vector<8x128xf32>
    %417 = math.tanh %407 : vector<8x128xf32>
    %418 = vector.extract_strided_slice %416 {offsets = [0, 0], sizes = [8, 32], strides = [1, 1]} : vector<8x128xf32> to vector<8x32xf32>
    %419 = vector.extract_strided_slice %416 {offsets = [0, 32], sizes = [8, 32], strides = [1, 1]} : vector<8x128xf32> to vector<8x32xf32>
    %420 = vector.extract_strided_slice %417 {offsets = [0, 64], sizes = [8, 32], strides = [1, 1]} : vector<8x128xf32> to vector<8x32xf32>
    %421 = vector.extract_strided_slice %416 {offsets = [0, 96], sizes = [8, 32], strides = [1, 1]} : vector<8x128xf32> to vector<8x32xf32>
    %422 = arith.mulf %419, %369 : vector<8x32xf32>
    %423 = arith.mulf %418, %420 : vector<8x32xf32>
    %424 = arith.addf %422, %423 : vector<8x32xf32>
    %425 = math.tanh %424 : vector<8x32xf32>
    %426 = arith.mulf %421, %425 : vector<8x32xf32>
    %427 = arith.negf %411 : vector<8x128xf32>
    %428 = math.exp %427 : vector<8x128xf32>
    %cst_154 = arith.constant 1.000000e+00 : f32
    %429 = vector.broadcast %cst_154 : f32 to vector<8x128xf32>
    %430 = arith.addf %429, %428 : vector<8x128xf32>
    %431 = arith.divf %429, %430 : vector<8x128xf32>
    %432 = math.tanh %411 : vector<8x128xf32>
    %433 = vector.extract_strided_slice %431 {offsets = [0, 0], sizes = [8, 32], strides = [1, 1]} : vector<8x128xf32> to vector<8x32xf32>
    %434 = vector.extract_strided_slice %431 {offsets = [0, 32], sizes = [8, 32], strides = [1, 1]} : vector<8x128xf32> to vector<8x32xf32>
    %435 = vector.extract_strided_slice %432 {offsets = [0, 64], sizes = [8, 32], strides = [1, 1]} : vector<8x128xf32> to vector<8x32xf32>
    %436 = vector.extract_strided_slice %431 {offsets = [0, 96], sizes = [8, 32], strides = [1, 1]} : vector<8x128xf32> to vector<8x32xf32>
    %437 = arith.mulf %434, %384 : vector<8x32xf32>
    %438 = arith.mulf %433, %435 : vector<8x32xf32>
    %439 = arith.addf %437, %438 : vector<8x32xf32>
    %440 = math.tanh %439 : vector<8x32xf32>
    %441 = arith.mulf %436, %440 : vector<8x32xf32>
    %442 = arith.index_cast %c7_i32_139 : i32 to index
    %c0_155 = arith.constant 0 : index
    %c0_156 = arith.constant 0 : index
    %443 = vector.load %arg5[%442, %c0_155, %c0_156] : memref<8x8x64xf32, #tpu.memory_space<vmem>>, vector<1x8x32xf32>
    %444 = vector.shape_cast %443 : vector<1x8x32xf32> to vector<8x32xf32>
    %445 = vector.shape_cast %426 : vector<8x32xf32> to vector<1x8x32xf32>
    tpu.vector_store %arg5[%442, %c0_155, %c0_156], %445 {strides = array<i32>} : memref<8x8x64xf32, #tpu.memory_space<vmem>>, vector<1x8x32xf32>,
    %446 = arith.index_cast %395 : i32 to index
    %c0_157 = arith.constant 0 : index
    %c32_158 = arith.constant 32 : index
    %447 = vector.load %arg5[%446, %c0_157, %c32_158] : memref<8x8x64xf32, #tpu.memory_space<vmem>>, vector<1x8x32xf32>
    %448 = vector.shape_cast %447 : vector<1x8x32xf32> to vector<8x32xf32>
    %449 = vector.shape_cast %441 : vector<8x32xf32> to vector<1x8x32xf32>
    tpu.vector_store %arg5[%446, %c0_157, %c32_158], %449 {strides = array<i32>} : memref<8x8x64xf32, #tpu.memory_space<vmem>>, vector<1x8x32xf32>,
    %c8_i32 = arith.constant 8 : i32
    return
  }
  func.func @transform_0(%arg0: i32) -> (i32, i32) {
    %c0_i32 = arith.constant 0 : i32
    %c0_i32_0 = arith.constant 0 : i32
    %c0_i32_1 = arith.constant 0 : i32
    return %c0_i32, %c0_i32_0 : i32, i32
  }
  func.func @transform_1(%arg0: i32) -> (i32, i32) {
    %c0_i32 = arith.constant 0 : i32
    %c0_i32_0 = arith.constant 0 : i32
    %c0_i32_1 = arith.constant 0 : i32
    return %c0_i32, %c0_i32_0 : i32, i32
  }
  func.func @transform_2(%arg0: i32) -> (i32, i32, i32) {
    %c0_i32 = arith.constant 0 : i32
    %c0_i32_0 = arith.constant 0 : i32
    %c0_i32_1 = arith.constant 0 : i32
    %c0_i32_2 = arith.constant 0 : i32
    return %c0_i32, %c0_i32_0, %c0_i32_1 : i32, i32, i32
  }
  func.func @transform_3(%arg0: i32) -> (i32, i32) {
    %c0_i32 = arith.constant 0 : i32
    %c0_i32_0 = arith.constant 0 : i32
    %c0_i32_1 = arith.constant 0 : i32
    return %c0_i32, %c0_i32_0 : i32, i32
  }
  func.func @transform_4(%arg0: i32) -> (i32, i32, i32) {
    %c0_i32 = arith.constant 0 : i32
    %c0_i32_0 = arith.constant 0 : i32
    %c0_i32_1 = arith.constant 0 : i32
    %c0_i32_2 = arith.constant 0 : i32
    return %c0_i32, %c0_i32_0, %c0_i32_1 : i32, i32, i32
  }
}

</mosaic_0001>

<llo_original>
// kernel: lstm_forward.2
$region0: #{lstm_forward.2}
  #allocation0 [shape = 'u32[]', space=smem, size = 0x4, offset = 0x4, fixed_abs, tag = 'smem constant byte address 0x4 - core index']
  #allocation1 [shape = 'u32[144,128]{1,0:T(1,128)}', space=vmem, size = 0x12000, scoped, tag = 'internal scratch']
  #allocation2 [shape = 'f32[8,8,256]{2,1,0:T(8,128)}', space=vmem, size = 0x10000, scoped, tag = 'scratch operand']
  %s0 = inlined_call_operand.vmem [shape: bf16[64,16], index: 0, kind: input, shape index: {}]
  %s1 = inlined_call_operand.vmem [shape: bf16[16,256], index: 1, kind: input, shape index: {}]
  %s2 = inlined_call_operand.vmem [shape: bf16[2,32,128], index: 2, kind: input, shape index: {}]
  %s3 = inlined_call_operand.vmem [shape: f32[1,256], index: 3, kind: input, shape index: {}]
  %s4 = inlined_call_operand.vmem [shape: f32[8,8,64], index: 4, kind: output, shape index: {}]
  %s5 = sld [smem:[#allocation0]]
  $region26: #{lstm_forward.2} parent=0
    _
  %s7 = ssub.s32 1, %s5
  %s8 = scalar_select 0, %s7, %s5
  // Predicated region
  $region2: #{lstm_forward.2} parent=0 // pred_check
    _
  $region3: #{lstm_forward.2} parent=0 // pred_check_branch
    %10 = sbr.rel (0) target = $region5
  $region4: #{lstm_forward.2} parent=0 // pred_region
    _
  $region5: #{lstm_forward.2} parent=0 // pred_fallthru
    _
  // Predicated region
  $region6: #{lstm_forward.2} parent=0 // pred_check
    _
  $region7: #{lstm_forward.2} parent=0 // pred_check_branch
    %12 = sbr.rel (0) target = $region9
  $region8: #{lstm_forward.2} parent=0 // pred_region
    _
  $region9: #{lstm_forward.2} parent=0 // pred_fallthru
    _
  // Predicated region
  $region10: #{lstm_forward.2} parent=0 // pred_check
    _
  $region11: #{lstm_forward.2} parent=0 // pred_check_branch
    %14 = sbr.rel (0) target = $region13
  $region12: #{lstm_forward.2} parent=0 // pred_region
    _
  $region13: #{lstm_forward.2} parent=0 // pred_fallthru
    _
  // Predicated region
  $region14: #{lstm_forward.2} parent=0 // pred_check
    _
  $region15: #{lstm_forward.2} parent=0 // pred_check_branch
    %16 = sbr.rel (0) target = $region17
  $region16: #{lstm_forward.2} parent=0 // pred_region
    _
  $region17: #{lstm_forward.2} parent=0 // pred_fallthru
    _
  %v18 = vld [vmem:[%s0] sm:$0xf]
  %v19 = vld [vmem:[%s0 + $0x4] sm:$0xf]
  %v20 = vld [vmem:[%s0 + $0x8] sm:$0xf]
  %v21 = vld [vmem:[%s0 + $0xc] sm:$0xf]
  %v22 = vld [vmem:[%s0 + $0x10] sm:$0xf]
  %v23 = vld [vmem:[%s0 + $0x14] sm:$0xf]
  %v24 = vld [vmem:[%s0 + $0x18] sm:$0xf]
  %v25 = vld [vmem:[%s0 + $0x1c] sm:$0xf]
  %v26 = vld [vmem:[%s1] sm:$0xff]
  %v27 = vld [vmem:[%s1 + $0x8] sm:$0xff]
  %v28 = vld [vmem:[%s3] sm:$0x3]
  %v30 = vlaneseq
  %v31 = vshrl.u32 %v30, 7
  %v32 = vsub.s32 0, %v31
  %v33 = vrot.slane %v28, %v32
  %v34 = vlaneseq
  %v35 = vshrl.u32 %v34, 7
  %v36 = vsub.s32 1, %v35
  %v37 = vrot.slane %v28, %v36
  %v48 = vunpack.c.l.b16 %v18
  %v49 = vunpack.c.l.b16 %v19
  %v50 = vunpack.c.l.b16 %v20
  %v51 = vunpack.c.l.b16 %v21
  %v52 = vunpack.c.l.b16 %v22
  %v53 = vunpack.c.l.b16 %v23
  %v54 = vunpack.c.l.b16 %v24
  %v55 = vunpack.c.l.b16 %v25
  %v56 = vpack.c.b16 %v49, %v48
  %v57 = vpack.c.b16 %v51, %v50
  %v58 = vpack.c.b16 %v53, %v52
  %v59 = vpack.c.b16 %v55, %v54
  %v62 = vunpack.c.l.b16 %v26
  %v63 = vunpack.c.h.b16 %v26
  %v64 = vunpack.c.l.b16 %v27
  %v65 = vunpack.c.h.b16 %v27
  %v66 = vpack.c.b16 %v64, %v62
  %v67 = vpack.c.b16 %v65, %v63
  %vm70 = vcmask 130048
  %v72 = vsel %vm70, %v56, 0
  %v75 = vsel %vm70, %v57, 0
  %v78 = vsel %vm70, %v58, 0
  %v81 = vsel %vm70, %v59, 0
  %83 = vmatprep.subr.bf16.mxu0 0
  %84 = vmatpush1.bf16.msra.mxu0 0
  %85 = vmatprep.subr.bf16.mxu0 0
  %86 = vmatpush1.bf16.msra.mxu0 0
  %87 = vmatprep.subr.bf16.mxu0 0
  %88 = vmatpush1.bf16.msra.mxu0 0
  %89 = vmatprep.subr.bf16.mxu0 0
  %90 = vmatpush1.bf16.msra.mxu0 0
  %91 = vmatprep.subr.bf16.mxu0 0
  %92 = vmatpush1.bf16.msra.mxu0 0
  %93 = vmatprep.subr.bf16.mxu0 0
  %94 = vmatpush1.bf16.msra.mxu0 0
  %95 = vmatprep.subr.bf16.mxu0 0
  %96 = vmatpush1.bf16.msra.mxu0 0
  %97 = vmatprep.subr.bf16.mxu0 %v67
  %98 = vmatpush1.bf16.msra.mxu0 %v66
  %99 = vmatprep.subr.bf16.mxu0 0
  %100 = vmatpush2.bf16.msra.mxu0 0
  %101 = vmatprep.subr.bf16.mxu0 0
  %102 = vmatpush2.bf16.msra.mxu0 0
  %103 = vmatprep.subr.bf16.mxu0 0
  %104 = vmatpush2.bf16.msra.mxu0 0
  %105 = vmatprep.subr.bf16.mxu0 0
  %106 = vmatpush2.bf16.msra.mxu0 0
  %107 = vmatprep.subr.bf16.mxu0 0
  %108 = vmatpush2.bf16.msra.mxu0 0
  %109 = vmatprep.subr.bf16.mxu0 0
  %110 = vmatpush2.bf16.msra.mxu0 0
  %111 = vmatprep.subr.bf16.mxu0 0
  %112 = vmatpush2.bf16.msra.mxu0 0
  %113 = vmatprep.subr.bf16.mxu0 0
  %114 = vmatpush2.bf16.msra.mxu0 0
  %115 = vmatprep.mubr.bf16.mxu0 0
  %116 = vmatmul.mubr.bf16.gmra.mxu0 %v72
  %v117 = vpop.f32.mrf.mxu0
  %v118 = vadd.f32 %v33, %v117
  %v119 = vpop.f32.mrf.mxu0
  %v120 = vadd.f32 %v37, %v119
  %v121 = vpop.f32.mrf.mxu0
  %v122 = vadd.f32 %v33, %v121
  %v123 = vpop.f32.mrf.mxu0
  %v124 = vadd.f32 %v37, %v123
  %125 = vmatprep.mubr.bf16.mxu0 0
  %126 = vmatmul.mubr.bf16.gmra.mxu0 %v75
  %v127 = vpop.f32.mrf.mxu0
  %v128 = vadd.f32 %v33, %v127
  %v129 = vpop.f32.mrf.mxu0
  %v130 = vadd.f32 %v37, %v129
  %v131 = vpop.f32.mrf.mxu0
  %v132 = vadd.f32 %v33, %v131
  %v133 = vpop.f32.mrf.mxu0
  %v134 = vadd.f32 %v37, %v133
  %135 = vmatprep.mubr.bf16.mxu0 0
  %136 = vmatmul.mubr.bf16.gmra.mxu0 %v78
  %v137 = vpop.f32.mrf.mxu0
  %v138 = vadd.f32 %v33, %v137
  %v139 = vpop.f32.mrf.mxu0
  %v140 = vadd.f32 %v37, %v139
  %v141 = vpop.f32.mrf.mxu0
  %v142 = vadd.f32 %v33, %v141
  %v143 = vpop.f32.mrf.mxu0
  %v144 = vadd.f32 %v37, %v143
  %145 = vmatprep.mubr.bf16.mxu0 0
  %146 = vmatmul.mubr.bf16.gmra.mxu0 %v81
  %v147 = vpop.f32.mrf.mxu0
  %v148 = vadd.f32 %v33, %v147
  %v149 = vpop.f32.mrf.mxu0
  %v150 = vadd.f32 %v37, %v149
  %v151 = vpop.f32.mrf.mxu0
  %v152 = vadd.f32 %v33, %v151
  %v153 = vpop.f32.mrf.mxu0
  %v154 = vadd.f32 %v37, %v153
  %155 = vdwg.mxu0
  %156 = vst [vmem:[#allocation2] sm:$0xff] %v118
  %157 = vst [vmem:[#allocation2 + $0x8] sm:$0xff] %v120
  %158 = vst [vmem:[#allocation2 + $0x10] sm:$0xff] %v122
  %159 = vst [vmem:[#allocation2 + $0x18] sm:$0xff] %v124
  %160 = vst [vmem:[#allocation2 + $0x20] sm:$0xff] %v128
  %161 = vst [vmem:[#allocation2 + $0x28] sm:$0xff] %v130
  %162 = vst [vmem:[#allocation2 + $0x30] sm:$0xff] %v132
  %163 = vst [vmem:[#allocation2 + $0x38] sm:$0xff] %v134
  %164 = vst [vmem:[#allocation2 + $0x40] sm:$0xff] %v138
  %165 = vst [vmem:[#allocation2 + $0x48] sm:$0xff] %v140
  %166 = vst [vmem:[#allocation2 + $0x50] sm:$0xff] %v142
  %167 = vst [vmem:[#allocation2 + $0x58] sm:$0xff] %v144
  %168 = vst [vmem:[#allocation2 + $0x60] sm:$0xff] %v148
  %169 = vst [vmem:[#allocation2 + $0x68] sm:$0xff] %v150
  %170 = vst [vmem:[#allocation2 + $0x70] sm:$0xff] %v152
  %171 = vst [vmem:[#allocation2 + $0x78] sm:$0xff] %v154
  %v172 = vld [vmem:[%s2] sm:$0xf]
  %v173 = vld [vmem:[%s2 + $0x4] sm:$0xf]
  %v174 = vld [vmem:[%s2 + $0x8] sm:$0xf]
  %v175 = vld [vmem:[%s2 + $0xc] sm:$0xf]
  %v180 = vunpack.c.l.b16 %v172
  %v181 = vunpack.c.l.b16 %v173
  %v182 = vunpack.c.l.b16 %v174
  %v183 = vunpack.c.l.b16 %v175
  %v184 = vpack.c.b16 %v181, %v180
  %v185 = vpack.c.b16 %v183, %v182
  %vm188 = vcmask 261120
  %v190 = vsel %vm188, 0, 0
  %192 = vmatprep.subr.bf16.mxu0 0
  %193 = vmatpush1.bf16.msra.mxu0 0
  %194 = vmatprep.subr.bf16.mxu0 0
  %195 = vmatpush1.bf16.msra.mxu0 0
  %196 = vmatprep.subr.bf16.mxu0 0
  %197 = vmatpush1.bf16.msra.mxu0 0
  %198 = vmatprep.subr.bf16.mxu0 0
  %199 = vmatpush1.bf16.msra.mxu0 0
  %200 = vmatprep.subr.bf16.mxu0 0
  %201 = vmatpush1.bf16.msra.mxu0 0
  %202 = vmatprep.subr.bf16.mxu0 0
  %203 = vmatpush1.bf16.msra.mxu0 0
  %204 = vmatprep.subr.bf16.mxu0 0
  %205 = vmatpush1.bf16.msra.mxu0 %v185
  %206 = vmatprep.subr.bf16.mxu0 0
  %207 = vmatpush1.bf16.msra.mxu0 %v184
  %208 = vmatprep.subr.bf16.mxu0 0
  %209 = vmatpush2.bf16.msra.mxu0 0
  %210 = vmatprep.subr.bf16.mxu0 0
  %211 = vmatpush2.bf16.msra.mxu0 0
  %212 = vmatprep.subr.bf16.mxu0 0
  %213 = vmatpush2.bf16.msra.mxu0 0
  %214 = vmatprep.subr.bf16.mxu0 0
  %215 = vmatpush2.bf16.msra.mxu0 0
  %216 = vmatprep.subr.bf16.mxu0 0
  %217 = vmatpush2.bf16.msra.mxu0 0
  %218 = vmatprep.subr.bf16.mxu0 0
  %219 = vmatpush2.bf16.msra.mxu0 0
  %220 = vmatprep.subr.bf16.mxu0 0
  %221 = vmatpush2.bf16.msra.mxu0 0
  %222 = vmatprep.subr.bf16.mxu0 0
  %223 = vmatpush2.bf16.msra.mxu0 0
  %224 = vmatprep.mubr.bf16.mxu0 0
  %225 = vmatmul.mubr.bf16.gmra.mxu0 %v190
  %v226 = vpop.f32.mrf.mxu0
  %v227 = vadd.f32 0.0, %v226
  %v228 = vpop.f32.mrf.mxu0
  %v229 = vpop.f32.mrf.mxu0
  %v230 = vpop.f32.mrf.mxu0
  %231 = vdwg.mxu0
  %s232 = scalar_lea.vmem %s2, 16
  %v233 = vld [vmem:[%s232] sm:$0xf]
  %v234 = vld [vmem:[%s232 + $0x4] sm:$0xf]
  %v235 = vld [vmem:[%s232 + $0x8] sm:$0xf]
  %v236 = vld [vmem:[%s232 + $0xc] sm:$0xf]
  %v241 = vunpack.c.l.b16 %v233
  %v242 = vunpack.c.l.b16 %v234
  %v243 = vunpack.c.l.b16 %v235
  %v244 = vunpack.c.l.b16 %v236
  %v245 = vpack.c.b16 %v242, %v241
  %v246 = vpack.c.b16 %v244, %v243
  %249 = vmatprep.subr.bf16.mxu0 0
  %250 = vmatpush1.bf16.msra.mxu0 0
  %251 = vmatprep.subr.bf16.mxu0 0
  %252 = vmatpush1.bf16.msra.mxu0 0
  %253 = vmatprep.subr.bf16.mxu0 0
  %254 = vmatpush1.bf16.msra.mxu0 0
  %255 = vmatprep.subr.bf16.mxu0 0
  %256 = vmatpush1.bf16.msra.mxu0 0
  %257 = vmatprep.subr.bf16.mxu0 0
  %258 = vmatpush1.bf16.msra.mxu0 0
  %259 = vmatprep.subr.bf16.mxu0 0
  %260 = vmatpush1.bf16.msra.mxu0 0
  %261 = vmatprep.subr.bf16.mxu0 0
  %262 = vmatpush1.bf16.msra.mxu0 %v246
  %263 = vmatprep.subr.bf16.mxu0 0
  %264 = vmatpush1.bf16.msra.mxu0 %v245
  %265 = vmatprep.subr.bf16.mxu0 0
  %266 = vmatpush2.bf16.msra.mxu0 0
  %267 = vmatprep.subr.bf16.mxu0 0
  %268 = vmatpush2.bf16.msra.mxu0 0
  %269 = vmatprep.subr.bf16.mxu0 0
  %270 = vmatpush2.bf16.msra.mxu0 0
  %271 = vmatprep.subr.bf16.mxu0 0
  %272 = vmatpush2.bf16.msra.mxu0 0
  %273 = vmatprep.subr.bf16.mxu0 0
  %274 = vmatpush2.bf16.msra.mxu0 0
  %275 = vmatprep.subr.bf16.mxu0 0
  %276 = vmatpush2.bf16.msra.mxu0 0
  %277 = vmatprep.subr.bf16.mxu0 0
  %278 = vmatpush2.bf16.msra.mxu0 0
  %279 = vmatprep.subr.bf16.mxu0 0
  %280 = vmatpush2.bf16.msra.mxu0 0
  %281 = vmatprep.mubr.bf16.mxu0 0
  %282 = vmatmul.mubr.bf16.gmra.mxu0 %v190
  %v283 = vpop.f32.mrf.mxu0
  %v284 = vadd.f32 0.0, %v283
  %v285 = vpop.f32.mrf.mxu0
  %v286 = vpop.f32.mrf.mxu0
  %v287 = vpop.f32.mrf.mxu0
  %288 = vdwg.mxu0
  %v289 = vld [vmem:[#allocation2] sm:$0xff]
  %v290 = vadd.f32 %v289, %v227
  %s291 = scalar_lea.vmem [#allocation2], 112
  %v292 = vld [vmem:[%s291 + $0x8] sm:$0xff]
  %v293 = vadd.f32 %v292, %v284
  %v294 = vxor.u32 %v290, 2147483648
  %v295 = vmul.f32 %v294, 1.442695
  %v296 = vpow.pop %v295
  %v297 = vadd.f32 %v296, 1.0
  %v298 = vrcp.pop %v297
  %v299 = vmul.f32 1.0, %v298
  %v300 = vtanh.pop %v290
  %v301 = vmul.f32 %v299, 0.0
  %303 = vrot.lane.b32.xlu0 %v300, 64
  %v304 = vpop.permute.xlu0 %303
  %v306 = vmul.f32 %v299, %v304
  %308 = vrot.lane.b32.xlu0 %v306, 32
  %v309 = vpop.permute.xlu0 %308
  %v311 = vadd.f32 %v301, %v309
  %v312 = vtanh.pop %v311
  %314 = vrot.lane.b32.xlu0 %v312, 64
  %v315 = vpop.permute.xlu0 %314
  %v317 = vmul.f32 %v299, %v315
  %v318 = vxor.u32 %v293, 2147483648
  %v319 = vmul.f32 %v318, 1.442695
  %v320 = vpow.pop %v319
  %v321 = vadd.f32 %v320, 1.0
  %v322 = vrcp.pop %v321
  %v323 = vmul.f32 1.0, %v322
  %v324 = vtanh.pop %v293
  %v325 = vmul.f32 %v323, 0.0
  %327 = vrot.lane.b32.xlu0 %v324, 64
  %v328 = vpop.permute.xlu0 %327
  %v330 = vmul.f32 %v323, %v328
  %332 = vrot.lane.b32.xlu0 %v330, 32
  %v333 = vpop.permute.xlu0 %332
  %v335 = vadd.f32 %v325, %v333
  %v336 = vtanh.pop %v335
  %338 = vrot.lane.b32.xlu0 %v336, 64
  %v339 = vpop.permute.xlu0 %338
  %v341 = vmul.f32 %v323, %v339
  %343 = vrot.lane.b32.xlu0 %v317, 32
  %v344 = vpop.permute.xlu0 %343
  %346 = vst.msk [vmem:[%s4] sm:$0xff] %vm188, %v344
  %348 = vrot.lane.b32.xlu0 %v341, 64
  %v349 = vpop.permute.xlu0 %348
  %s351 = scalar_lea.vmem %s4, 56
  %vm352 = vcmask 523520
  %353 = vst.msk [vmem:[%s351] sm:$0xff] %vm352, %v349
  %v354 = vpack.c.bf16 %v317, %v317
  %v355 = vld [vmem:[%s2] sm:$0xf]
  %v356 = vld [vmem:[%s2 + $0x4] sm:$0xf]
  %v357 = vld [vmem:[%s2 + $0x8] sm:$0xf]
  %v358 = vld [vmem:[%s2 + $0xc] sm:$0xf]
  %360 = vrot.lane.b32.xlu0 %v354, 32
  %v361 = vpop.permute.xlu0 %360
  %v366 = vunpack.c.l.b16 %v355
  %v367 = vunpack.c.l.b16 %v356
  %v368 = vunpack.c.l.b16 %v357
  %v369 = vunpack.c.l.b16 %v358
  %v370 = vpack.c.b16 %v367, %v366
  %v371 = vpack.c.b16 %v369, %v368
  %v375 = vsel %vm188, %v361, 0
  %377 = vmatprep.subr.bf16.mxu0 0
  %378 = vmatpush1.bf16.msra.mxu0 0
  %379 = vmatprep.subr.bf16.mxu0 0
  %380 = vmatpush1.bf16.msra.mxu0 0
  %381 = vmatprep.subr.bf16.mxu0 0
  %382 = vmatpush1.bf16.msra.mxu0 0
  %383 = vmatprep.subr.bf16.mxu0 0
  %384 = vmatpush1.bf16.msra.mxu0 0
  %385 = vmatprep.subr.bf16.mxu0 0
  %386 = vmatpush1.bf16.msra.mxu0 0
  %387 = vmatprep.subr.bf16.mxu0 0
  %388 = vmatpush1.bf16.msra.mxu0 0
  %389 = vmatprep.subr.bf16.mxu0 0
  %390 = vmatpush1.bf16.msra.mxu0 %v371
  %391 = vmatprep.subr.bf16.mxu0 0
  %392 = vmatpush1.bf16.msra.mxu0 %v370
  %393 = vmatprep.subr.bf16.mxu0 0
  %394 = vmatpush2.bf16.msra.mxu0 0
  %395 = vmatprep.subr.bf16.mxu0 0
  %396 = vmatpush2.bf16.msra.mxu0 0
  %397 = vmatprep.subr.bf16.mxu0 0
  %398 = vmatpush2.bf16.msra.mxu0 0
  %399 = vmatprep.subr.bf16.mxu0 0
  %400 = vmatpush2.bf16.msra.mxu0 0
  %401 = vmatprep.subr.bf16.mxu0 0
  %402 = vmatpush2.bf16.msra.mxu0 0
  %403 = vmatprep.subr.bf16.mxu0 0
  %404 = vmatpush2.bf16.msra.mxu0 0
  %405 = vmatprep.subr.bf16.mxu0 0
  %406 = vmatpush2.bf16.msra.mxu0 0
  %407 = vmatprep.subr.bf16.mxu0 0
  %408 = vmatpush2.bf16.msra.mxu0 0
  %409 = vmatprep.mubr.bf16.mxu0 0
  %410 = vmatmul.mubr.bf16.gmra.mxu0 %v375
  %v411 = vpop.f32.mrf.mxu0
  %v412 = vadd.f32 0.0, %v411
  %v413 = vpop.f32.mrf.mxu0
  %v414 = vpop.f32.mrf.mxu0
  %v415 = vpop.f32.mrf.mxu0
  %416 = vdwg.mxu0
  %v417 = vpack.c.bf16 %v341, %v341
  %v418 = vld [vmem:[%s232] sm:$0xf]
  %v419 = vld [vmem:[%s232 + $0x4] sm:$0xf]
  %v420 = vld [vmem:[%s232 + $0x8] sm:$0xf]
  %v421 = vld [vmem:[%s232 + $0xc] sm:$0xf]
  %423 = vrot.lane.b32.xlu0 %v417, 32
  %v424 = vpop.permute.xlu0 %423
  %v429 = vunpack.c.l.b16 %v418
  %v430 = vunpack.c.l.b16 %v419
  %v431 = vunpack.c.l.b16 %v420
  %v432 = vunpack.c.l.b16 %v421
  %v433 = vpack.c.b16 %v430, %v429
  %v434 = vpack.c.b16 %v432, %v431
  %v438 = vsel %vm188, %v424, 0
  %440 = vmatprep.subr.bf16.mxu0 0
  %441 = vmatpush1.bf16.msra.mxu0 0
  %442 = vmatprep.subr.bf16.mxu0 0
  %443 = vmatpush1.bf16.msra.mxu0 0
  %444 = vmatprep.subr.bf16.mxu0 0
  %445 = vmatpush1.bf16.msra.mxu0 0
  %446 = vmatprep.subr.bf16.mxu0 0
  %447 = vmatpush1.bf16.msra.mxu0 0
  %448 = vmatprep.subr.bf16.mxu0 0
  %449 = vmatpush1.bf16.msra.mxu0 0
  %450 = vmatprep.subr.bf16.mxu0 0
  %451 = vmatpush1.bf16.msra.mxu0 0
  %452 = vmatprep.subr.bf16.mxu0 0
  %453 = vmatpush1.bf16.msra.mxu0 %v434
  %454 = vmatprep.subr.bf16.mxu0 0
  %455 = vmatpush1.bf16.msra.mxu0 %v433
  %456 = vmatprep.subr.bf16.mxu0 0
  %457 = vmatpush2.bf16.msra.mxu0 0
  %458 = vmatprep.subr.bf16.mxu0 0
  %459 = vmatpush2.bf16.msra.mxu0 0
  %460 = vmatprep.subr.bf16.mxu0 0
  %461 = vmatpush2.bf16.msra.mxu0 0
  %462 = vmatprep.subr.bf16.mxu0 0
  %463 = vmatpush2.bf16.msra.mxu0 0
  %464 = vmatprep.subr.bf16.mxu0 0
  %465 = vmatpush2.bf16.msra.mxu0 0
  %466 = vmatprep.subr.bf16.mxu0 0
  %467 = vmatpush2.bf16.msra.mxu0 0
  %468 = vmatprep.subr.bf16.mxu0 0
  %469 = vmatpush2.bf16.msra.mxu0 0
  %470 = vmatprep.subr.bf16.mxu0 0
  %471 = vmatpush2.bf16.msra.mxu0 0
  %472 = vmatprep.mubr.bf16.mxu0 0
  %473 = vmatmul.mubr.bf16.gmra.mxu0 %v438
  %v474 = vpop.f32.mrf.mxu0
  %v475 = vadd.f32 0.0, %v474
  %v476 = vpop.f32.mrf.mxu0
  %v477 = vpop.f32.mrf.mxu0
  %v478 = vpop.f32.mrf.mxu0
  %479 = vdwg.mxu0
  %s480 = scalar_lea.vmem [#allocation2], 16
  %v481 = vld [vmem:[%s480] sm:$0xff]
  %v482 = vadd.f32 %v481, %v412
  %s483 = scalar_lea.vmem [#allocation2], 96
  %v484 = vld [vmem:[%s483 + $0x8] sm:$0xff]
  %v485 = vadd.f32 %v484, %v475
  %v486 = vxor.u32 %v482, 2147483648
  %v487 = vmul.f32 %v486, 1.442695
  %v488 = vpow.pop %v487
  %v489 = vadd.f32 %v488, 1.0
  %v490 = vrcp.pop %v489
  %v491 = vmul.f32 1.0, %v490
  %v492 = vtanh.pop %v482
  %v493 = vmul.f32 %v491, %v311
  %495 = vrot.lane.b32.xlu0 %v492, 64
  %v496 = vpop.permute.xlu0 %495
  %v498 = vmul.f32 %v491, %v496
  %500 = vrot.lane.b32.xlu0 %v498, 32
  %v501 = vpop.permute.xlu0 %500
  %v503 = vadd.f32 %v493, %v501
  %v504 = vtanh.pop %v503
  %506 = vrot.lane.b32.xlu0 %v504, 64
  %v507 = vpop.permute.xlu0 %506
  %v509 = vmul.f32 %v491, %v507
  %v510 = vxor.u32 %v485, 2147483648
  %v511 = vmul.f32 %v510, 1.442695
  %v512 = vpow.pop %v511
  %v513 = vadd.f32 %v512, 1.0
  %v514 = vrcp.pop %v513
  %v515 = vmul.f32 1.0, %v514
  %v516 = vtanh.pop %v485
  %v517 = vmul.f32 %v515, %v335
  %519 = vrot.lane.b32.xlu0 %v516, 64
  %v520 = vpop.permute.xlu0 %519
  %v522 = vmul.f32 %v515, %v520
  %524 = vrot.lane.b32.xlu0 %v522, 32
  %v525 = vpop.permute.xlu0 %524
  %v527 = vadd.f32 %v517, %v525
  %v528 = vtanh.pop %v527
  %530 = vrot.lane.b32.xlu0 %v528, 64
  %v531 = vpop.permute.xlu0 %530
  %v533 = vmul.f32 %v515, %v531
  %535 = vrot.lane.b32.xlu0 %v509, 32
  %v536 = vpop.permute.xlu0 %535
  %s538 = scalar_lea.vmem %s4, 8
  %539 = vst.msk [vmem:[%s538] sm:$0xff] %vm188, %v536
  %541 = vrot.lane.b32.xlu0 %v533, 64
  %v542 = vpop.permute.xlu0 %541
  %s544 = scalar_lea.vmem %s4, 48
  %545 = vst.msk [vmem:[%s544] sm:$0xff] %vm352, %v542
  %v546 = vpack.c.bf16 %v509, %v509
  %v547 = vld [vmem:[%s2] sm:$0xf]
  %v548 = vld [vmem:[%s2 + $0x4] sm:$0xf]
  %v549 = vld [vmem:[%s2 + $0x8] sm:$0xf]
  %v550 = vld [vmem:[%s2 + $0xc] sm:$0xf]
  %552 = vrot.lane.b32.xlu0 %v546, 32
  %v553 = vpop.permute.xlu0 %552
  %v558 = vunpack.c.l.b16 %v547
  %v559 = vunpack.c.l.b16 %v548
  %v560 = vunpack.c.l.b16 %v549
  %v561 = vunpack.c.l.b16 %v550
  %v562 = vpack.c.b16 %v559, %v558
  %v563 = vpack.c.b16 %v561, %v560
  %v567 = vsel %vm188, %v553, 0
  %569 = vmatprep.subr.bf16.mxu0 0
  %570 = vmatpush1.bf16.msra.mxu0 0
  %571 = vmatprep.subr.bf16.mxu0 0
  %572 = vmatpush1.bf16.msra.mxu0 0
  %573 = vmatprep.subr.bf16.mxu0 0
  %574 = vmatpush1.bf16.msra.mxu0 0
  %575 = vmatprep.subr.bf16.mxu0 0
  %576 = vmatpush1.bf16.msra.mxu0 0
  %577 = vmatprep.subr.bf16.mxu0 0
  %578 = vmatpush1.bf16.msra.mxu0 0
  %579 = vmatprep.subr.bf16.mxu0 0
  %580 = vmatpush1.bf16.msra.mxu0 0
  %581 = vmatprep.subr.bf16.mxu0 0
  %582 = vmatpush1.bf16.msra.mxu0 %v563
  %583 = vmatprep.subr.bf16.mxu0 0
  %584 = vmatpush1.bf16.msra.mxu0 %v562
  %585 = vmatprep.subr.bf16.mxu0 0
  %586 = vmatpush2.bf16.msra.mxu0 0
  %587 = vmatprep.subr.bf16.mxu0 0
  %588 = vmatpush2.bf16.msra.mxu0 0
  %589 = vmatprep.subr.bf16.mxu0 0
  %590 = vmatpush2.bf16.msra.mxu0 0
  %591 = vmatprep.subr.bf16.mxu0 0
  %592 = vmatpush2.bf16.msra.mxu0 0
  %593 = vmatprep.subr.bf16.mxu0 0
  %594 = vmatpush2.bf16.msra.mxu0 0
  %595 = vmatprep.subr.bf16.mxu0 0
  %596 = vmatpush2.bf16.msra.mxu0 0
  %597 = vmatprep.subr.bf16.mxu0 0
  %598 = vmatpush2.bf16.msra.mxu0 0
  %599 = vmatprep.subr.bf16.mxu0 0
  %600 = vmatpush2.bf16.msra.mxu0 0
  %601 = vmatprep.mubr.bf16.mxu0 0
  %602 = vmatmul.mubr.bf16.gmra.mxu0 %v567
  %v603 = vpop.f32.mrf.mxu0
  %v604 = vadd.f32 0.0, %v603
  %v605 = vpop.f32.mrf.mxu0
  %v606 = vpop.f32.mrf.mxu0
  %v607 = vpop.f32.mrf.mxu0
  %608 = vdwg.mxu0
  %v609 = vpack.c.bf16 %v533, %v533
  %v610 = vld [vmem:[%s232] sm:$0xf]
  %v611 = vld [vmem:[%s232 + $0x4] sm:$0xf]
  %v612 = vld [vmem:[%s232 + $0x8] sm:$0xf]
  %v613 = vld [vmem:[%s232 + $0xc] sm:$0xf]
  %615 = vrot.lane.b32.xlu0 %v609, 32
  %v616 = vpop.permute.xlu0 %615
  %v621 = vunpack.c.l.b16 %v610
  %v622 = vunpack.c.l.b16 %v611
  %v623 = vunpack.c.l.b16 %v612
  %v624 = vunpack.c.l.b16 %v613
  %v625 = vpack.c.b16 %v622, %v621
  %v626 = vpack.c.b16 %v624, %v623
  %v630 = vsel %vm188, %v616, 0
  %632 = vmatprep.subr.bf16.mxu0 0
  %633 = vmatpush1.bf16.msra.mxu0 0
  %634 = vmatprep.subr.bf16.mxu0 0
  %635 = vmatpush1.bf16.msra.mxu0 0
  %636 = vmatprep.subr.bf16.mxu0 0
  %637 = vmatpush1.bf16.msra.mxu0 0
  %638 = vmatprep.subr.bf16.mxu0 0
  %639 = vmatpush1.bf16.msra.mxu0 0
  %640 = vmatprep.subr.bf16.mxu0 0
  %641 = vmatpush1.bf16.msra.mxu0 0
  %642 = vmatprep.subr.bf16.mxu0 0
  %643 = vmatpush1.bf16.msra.mxu0 0
  %644 = vmatprep.subr.bf16.mxu0 0
  %645 = vmatpush1.bf16.msra.mxu0 %v626
  %646 = vmatprep.subr.bf16.mxu0 0
  %647 = vmatpush1.bf16.msra.mxu0 %v625
  %648 = vmatprep.subr.bf16.mxu0 0
  %649 = vmatpush2.bf16.msra.mxu0 0
  %650 = vmatprep.subr.bf16.mxu0 0
  %651 = vmatpush2.bf16.msra.mxu0 0
  %652 = vmatprep.subr.bf16.mxu0 0
  %653 = vmatpush2.bf16.msra.mxu0 0
  %654 = vmatprep.subr.bf16.mxu0 0
  %655 = vmatpush2.bf16.msra.mxu0 0
  %656 = vmatprep.subr.bf16.mxu0 0
  %657 = vmatpush2.bf16.msra.mxu0 0
  %658 = vmatprep.subr.bf16.mxu0 0
  %659 = vmatpush2.bf16.msra.mxu0 0
  %660 = vmatprep.subr.bf16.mxu0 0
  %661 = vmatpush2.bf16.msra.mxu0 0
  %662 = vmatprep.subr.bf16.mxu0 0
  %663 = vmatpush2.bf16.msra.mxu0 0
  %664 = vmatprep.mubr.bf16.mxu0 0
  %665 = vmatmul.mubr.bf16.gmra.mxu0 %v630
  %v666 = vpop.f32.mrf.mxu0
  %v667 = vadd.f32 0.0, %v666
  %v668 = vpop.f32.mrf.mxu0
  %v669 = vpop.f32.mrf.mxu0
  %v670 = vpop.f32.mrf.mxu0
  %671 = vdwg.mxu0
  %s672 = scalar_lea.vmem [#allocation2], 32
  %v673 = vld [vmem:[%s672] sm:$0xff]
  %v674 = vadd.f32 %v673, %v604
  %s675 = scalar_lea.vmem [#allocation2], 80
  %v676 = vld [vmem:[%s675 + $0x8] sm:$0xff]
  %v677 = vadd.f32 %v676, %v667
  %v678 = vxor.u32 %v674, 2147483648
  %v679 = vmul.f32 %v678, 1.442695
  %v680 = vpow.pop %v679
  %v681 = vadd.f32 %v680, 1.0
  %v682 = vrcp.pop %v681
  %v683 = vmul.f32 1.0, %v682
  %v684 = vtanh.pop %v674
  %v685 = vmul.f32 %v683, %v503
  %687 = vrot.lane.b32.xlu0 %v684, 64
  %v688 = vpop.permute.xlu0 %687
  %v690 = vmul.f32 %v683, %v688
  %692 = vrot.lane.b32.xlu0 %v690, 32
  %v693 = vpop.permute.xlu0 %692
  %v695 = vadd.f32 %v685, %v693
  %v696 = vtanh.pop %v695
  %698 = vrot.lane.b32.xlu0 %v696, 64
  %v699 = vpop.permute.xlu0 %698
  %v701 = vmul.f32 %v683, %v699
  %v702 = vxor.u32 %v677, 2147483648
  %v703 = vmul.f32 %v702, 1.442695
  %v704 = vpow.pop %v703
  %v705 = vadd.f32 %v704, 1.0
  %v706 = vrcp.pop %v705
  %v707 = vmul.f32 1.0, %v706
  %v708 = vtanh.pop %v677
  %v709 = vmul.f32 %v707, %v527
  %711 = vrot.lane.b32.xlu0 %v708, 64
  %v712 = vpop.permute.xlu0 %711
  %v714 = vmul.f32 %v707, %v712
  %716 = vrot.lane.b32.xlu0 %v714, 32
  %v717 = vpop.permute.xlu0 %716
  %v719 = vadd.f32 %v709, %v717
  %v720 = vtanh.pop %v719
  %722 = vrot.lane.b32.xlu0 %v720, 64
  %v723 = vpop.permute.xlu0 %722
  %v725 = vmul.f32 %v707, %v723
  %727 = vrot.lane.b32.xlu0 %v701, 32
  %v728 = vpop.permute.xlu0 %727
  %s730 = scalar_lea.vmem %s4, 16
  %731 = vst.msk [vmem:[%s730] sm:$0xff] %vm188, %v728
  %733 = vrot.lane.b32.xlu0 %v725, 64
  %v734 = vpop.permute.xlu0 %733
  %s736 = scalar_lea.vmem %s4, 40
  %737 = vst.msk [vmem:[%s736] sm:$0xff] %vm352, %v734
  %v738 = vpack.c.bf16 %v701, %v701
  %v739 = vld [vmem:[%s2] sm:$0xf]
  %v740 = vld [vmem:[%s2 + $0x4] sm:$0xf]
  %v741 = vld [vmem:[%s2 + $0x8] sm:$0xf]
  %v742 = vld [vmem:[%s2 + $0xc] sm:$0xf]
  %744 = vrot.lane.b32.xlu0 %v738, 32
  %v745 = vpop.permute.xlu0 %744
  %v750 = vunpack.c.l.b16 %v739
  %v751 = vunpack.c.l.b16 %v740
  %v752 = vunpack.c.l.b16 %v741
  %v753 = vunpack.c.l.b16 %v742
  %v754 = vpack.c.b16 %v751, %v750
  %v755 = vpack.c.b16 %v753, %v752
  %v759 = vsel %vm188, %v745, 0
  %761 = vmatprep.subr.bf16.mxu0 0
  %762 = vmatpush1.bf16.msra.mxu0 0
  %763 = vmatprep.subr.bf16.mxu0 0
  %764 = vmatpush1.bf16.msra.mxu0 0
  %765 = vmatprep.subr.bf16.mxu0 0
  %766 = vmatpush1.bf16.msra.mxu0 0
  %767 = vmatprep.subr.bf16.mxu0 0
  %768 = vmatpush1.bf16.msra.mxu0 0
  %769 = vmatprep.subr.bf16.mxu0 0
  %770 = vmatpush1.bf16.msra.mxu0 0
  %771 = vmatprep.subr.bf16.mxu0 0
  %772 = vmatpush1.bf16.msra.mxu0 0
  %773 = vmatprep.subr.bf16.mxu0 0
  %774 = vmatpush1.bf16.msra.mxu0 %v755
  %775 = vmatprep.subr.bf16.mxu0 0
  %776 = vmatpush1.bf16.msra.mxu0 %v754
  %777 = vmatprep.subr.bf16.mxu0 0
  %778 = vmatpush2.bf16.msra.mxu0 0
  %779 = vmatprep.subr.bf16.mxu0 0
  %780 = vmatpush2.bf16.msra.mxu0 0
  %781 = vmatprep.subr.bf16.mxu0 0
  %782 = vmatpush2.bf16.msra.mxu0 0
  %783 = vmatprep.subr.bf16.mxu0 0
  %784 = vmatpush2.bf16.msra.mxu0 0
  %785 = vmatprep.subr.bf16.mxu0 0
  %786 = vmatpush2.bf16.msra.mxu0 0
  %787 = vmatprep.subr.bf16.mxu0 0
  %788 = vmatpush2.bf16.msra.mxu0 0
  %789 = vmatprep.subr.bf16.mxu0 0
  %790 = vmatpush2.bf16.msra.mxu0 0
  %791 = vmatprep.subr.bf16.mxu0 0
  %792 = vmatpush2.bf16.msra.mxu0 0
  %793 = vmatprep.mubr.bf16.mxu0 0
  %794 = vmatmul.mubr.bf16.gmra.mxu0 %v759
  %v795 = vpop.f32.mrf.mxu0
  %v796 = vadd.f32 0.0, %v795
  %v797 = vpop.f32.mrf.mxu0
  %v798 = vpop.f32.mrf.mxu0
  %v799 = vpop.f32.mrf.mxu0
  %800 = vdwg.mxu0
  %v801 = vpack.c.bf16 %v725, %v725
  %v802 = vld [vmem:[%s232] sm:$0xf]
  %v803 = vld [vmem:[%s232 + $0x4] sm:$0xf]
  %v804 = vld [vmem:[%s232 + $0x8] sm:$0xf]
  %v805 = vld [vmem:[%s232 + $0xc] sm:$0xf]
  %807 = vrot.lane.b32.xlu0 %v801, 32
  %v808 = vpop.permute.xlu0 %807
  %v813 = vunpack.c.l.b16 %v802
  %v814 = vunpack.c.l.b16 %v803
  %v815 = vunpack.c.l.b16 %v804
  %v816 = vunpack.c.l.b16 %v805
  %v817 = vpack.c.b16 %v814, %v813
  %v818 = vpack.c.b16 %v816, %v815
  %v822 = vsel %vm188, %v808, 0
  %824 = vmatprep.subr.bf16.mxu0 0
  %825 = vmatpush1.bf16.msra.mxu0 0
  %826 = vmatprep.subr.bf16.mxu0 0
  %827 = vmatpush1.bf16.msra.mxu0 0
  %828 = vmatprep.subr.bf16.mxu0 0
  %829 = vmatpush1.bf16.msra.mxu0 0
  %830 = vmatprep.subr.bf16.mxu0 0
  %831 = vmatpush1.bf16.msra.mxu0 0
  %832 = vmatprep.subr.bf16.mxu0 0
  %833 = vmatpush1.bf16.msra.mxu0 0
  %834 = vmatprep.subr.bf16.mxu0 0
  %835 = vmatpush1.bf16.msra.mxu0 0
  %836 = vmatprep.subr.bf16.mxu0 0
  %837 = vmatpush1.bf16.msra.mxu0 %v818
  %838 = vmatprep.subr.bf16.mxu0 0
  %839 = vmatpush1.bf16.msra.mxu0 %v817
  %840 = vmatprep.subr.bf16.mxu0 0
  %841 = vmatpush2.bf16.msra.mxu0 0
  %842 = vmatprep.subr.bf16.mxu0 0
  %843 = vmatpush2.bf16.msra.mxu0 0
  %844 = vmatprep.subr.bf16.mxu0 0
  %845 = vmatpush2.bf16.msra.mxu0 0
  %846 = vmatprep.subr.bf16.mxu0 0
  %847 = vmatpush2.bf16.msra.mxu0 0
  %848 = vmatprep.subr.bf16.mxu0 0
  %849 = vmatpush2.bf16.msra.mxu0 0
  %850 = vmatprep.subr.bf16.mxu0 0
  %851 = vmatpush2.bf16.msra.mxu0 0
  %852 = vmatprep.subr.bf16.mxu0 0
  %853 = vmatpush2.bf16.msra.mxu0 0
  %854 = vmatprep.subr.bf16.mxu0 0
  %855 = vmatpush2.bf16.msra.mxu0 0
  %856 = vmatprep.mubr.bf16.mxu0 0
  %857 = vmatmul.mubr.bf16.gmra.mxu0 %v822
  %v858 = vpop.f32.mrf.mxu0
  %v859 = vadd.f32 0.0, %v858
  %v860 = vpop.f32.mrf.mxu0
  %v861 = vpop.f32.mrf.mxu0
  %v862 = vpop.f32.mrf.mxu0
  %863 = vdwg.mxu0
  %s864 = scalar_lea.vmem [#allocation2], 48
  %v865 = vld [vmem:[%s864] sm:$0xff]
  %v866 = vadd.f32 %v865, %v796
  %s867 = scalar_lea.vmem [#allocation2], 64
  %v868 = vld [vmem:[%s867 + $0x8] sm:$0xff]
  %v869 = vadd.f32 %v868, %v859
  %v870 = vxor.u32 %v866, 2147483648
  %v871 = vmul.f32 %v870, 1.442695
  %v872 = vpow.pop %v871
  %v873 = vadd.f32 %v872, 1.0
  %v874 = vrcp.pop %v873
  %v875 = vmul.f32 1.0, %v874
  %v876 = vtanh.pop %v866
  %v877 = vmul.f32 %v875, %v695
  %879 = vrot.lane.b32.xlu0 %v876, 64
  %v880 = vpop.permute.xlu0 %879
  %v882 = vmul.f32 %v875, %v880
  %884 = vrot.lane.b32.xlu0 %v882, 32
  %v885 = vpop.permute.xlu0 %884
  %v887 = vadd.f32 %v877, %v885
  %v888 = vtanh.pop %v887
  %890 = vrot.lane.b32.xlu0 %v888, 64
  %v891 = vpop.permute.xlu0 %890
  %v893 = vmul.f32 %v875, %v891
  %v894 = vxor.u32 %v869, 2147483648
  %v895 = vmul.f32 %v894, 1.442695
  %v896 = vpow.pop %v895
  %v897 = vadd.f32 %v896, 1.0
  %v898 = vrcp.pop %v897
  %v899 = vmul.f32 1.0, %v898
  %v900 = vtanh.pop %v869
  %v901 = vmul.f32 %v899, %v719
  %903 = vrot.lane.b32.xlu0 %v900, 64
  %v904 = vpop.permute.xlu0 %903
  %v906 = vmul.f32 %v899, %v904
  %908 = vrot.lane.b32.xlu0 %v906, 32
  %v909 = vpop.permute.xlu0 %908
  %v911 = vadd.f32 %v901, %v909
  %v912 = vtanh.pop %v911
  %914 = vrot.lane.b32.xlu0 %v912, 64
  %v915 = vpop.permute.xlu0 %914
  %v917 = vmul.f32 %v899, %v915
  %919 = vrot.lane.b32.xlu0 %v893, 32
  %v920 = vpop.permute.xlu0 %919
  %s922 = scalar_lea.vmem %s4, 24
  %923 = vst.msk [vmem:[%s922] sm:$0xff] %vm188, %v920
  %925 = vrot.lane.b32.xlu0 %v917, 64
  %v926 = vpop.permute.xlu0 %925
  %s928 = scalar_lea.vmem %s4, 32
  %929 = vst.msk [vmem:[%s928] sm:$0xff] %vm352, %v926
  %v930 = vpack.c.bf16 %v893, %v893
  %v931 = vld [vmem:[%s2] sm:$0xf]
  %v932 = vld [vmem:[%s2 + $0x4] sm:$0xf]
  %v933 = vld [vmem:[%s2 + $0x8] sm:$0xf]
  %v934 = vld [vmem:[%s2 + $0xc] sm:$0xf]
  %936 = vrot.lane.b32.xlu0 %v930, 32
  %v937 = vpop.permute.xlu0 %936
  %v942 = vunpack.c.l.b16 %v931
  %v943 = vunpack.c.l.b16 %v932
  %v944 = vunpack.c.l.b16 %v933
  %v945 = vunpack.c.l.b16 %v934
  %v946 = vpack.c.b16 %v943, %v942
  %v947 = vpack.c.b16 %v945, %v944
  %v951 = vsel %vm188, %v937, 0
  %953 = vmatprep.subr.bf16.mxu0 0
  %954 = vmatpush1.bf16.msra.mxu0 0
  %955 = vmatprep.subr.bf16.mxu0 0
  %956 = vmatpush1.bf16.msra.mxu0 0
  %957 = vmatprep.subr.bf16.mxu0 0
  %958 = vmatpush1.bf16.msra.mxu0 0
  %959 = vmatprep.subr.bf16.mxu0 0
  %960 = vmatpush1.bf16.msra.mxu0 0
  %961 = vmatprep.subr.bf16.mxu0 0
  %962 = vmatpush1.bf16.msra.mxu0 0
  %963 = vmatprep.subr.bf16.mxu0 0
  %964 = vmatpush1.bf16.msra.mxu0 0
  %965 = vmatprep.subr.bf16.mxu0 0
  %966 = vmatpush1.bf16.msra.mxu0 %v947
  %967 = vmatprep.subr.bf16.mxu0 0
  %968 = vmatpush1.bf16.msra.mxu0 %v946
  %969 = vmatprep.subr.bf16.mxu0 0
  %970 = vmatpush2.bf16.msra.mxu0 0
  %971 = vmatprep.subr.bf16.mxu0 0
  %972 = vmatpush2.bf16.msra.mxu0 0
  %973 = vmatprep.subr.bf16.mxu0 0
  %974 = vmatpush2.bf16.msra.mxu0 0
  %975 = vmatprep.subr.bf16.mxu0 0
  %976 = vmatpush2.bf16.msra.mxu0 0
  %977 = vmatprep.subr.bf16.mxu0 0
  %978 = vmatpush2.bf16.msra.mxu0 0
  %979 = vmatprep.subr.bf16.mxu0 0
  %980 = vmatpush2.bf16.msra.mxu0 0
  %981 = vmatprep.subr.bf16.mxu0 0
  %982 = vmatpush2.bf16.msra.mxu0 0
  %983 = vmatprep.subr.bf16.mxu0 0
  %984 = vmatpush2.bf16.msra.mxu0 0
  %985 = vmatprep.mubr.bf16.mxu0 0
  %986 = vmatmul.mubr.bf16.gmra.mxu0 %v951
  %v987 = vpop.f32.mrf.mxu0
  %v988 = vadd.f32 0.0, %v987
  %v989 = vpop.f32.mrf.mxu0
  %v990 = vpop.f32.mrf.mxu0
  %v991 = vpop.f32.mrf.mxu0
  %992 = vdwg.mxu0
  %v993 = vpack.c.bf16 %v917, %v917
  %v994 = vld [vmem:[%s232] sm:$0xf]
  %v995 = vld [vmem:[%s232 + $0x4] sm:$0xf]
  %v996 = vld [vmem:[%s232 + $0x8] sm:$0xf]
  %v997 = vld [vmem:[%s232 + $0xc] sm:$0xf]
  %999 = vrot.lane.b32.xlu0 %v993, 32
  %v1000 = vpop.permute.xlu0 %999
  %v1005 = vunpack.c.l.b16 %v994
  %v1006 = vunpack.c.l.b16 %v995
  %v1007 = vunpack.c.l.b16 %v996
  %v1008 = vunpack.c.l.b16 %v997
  %v1009 = vpack.c.b16 %v1006, %v1005
  %v1010 = vpack.c.b16 %v1008, %v1007
  %v1014 = vsel %vm188, %v1000, 0
  %1016 = vmatprep.subr.bf16.mxu0 0
  %1017 = vmatpush1.bf16.msra.mxu0 0
  %1018 = vmatprep.subr.bf16.mxu0 0
  %1019 = vmatpush1.bf16.msra.mxu0 0
  %1020 = vmatprep.subr.bf16.mxu0 0
  %1021 = vmatpush1.bf16.msra.mxu0 0
  %1022 = vmatprep.subr.bf16.mxu0 0
  %1023 = vmatpush1.bf16.msra.mxu0 0
  %1024 = vmatprep.subr.bf16.mxu0 0
  %1025 = vmatpush1.bf16.msra.mxu0 0
  %1026 = vmatprep.subr.bf16.mxu0 0
  %1027 = vmatpush1.bf16.msra.mxu0 0
  %1028 = vmatprep.subr.bf16.mxu0 0
  %1029 = vmatpush1.bf16.msra.mxu0 %v1010
  %1030 = vmatprep.subr.bf16.mxu0 0
  %1031 = vmatpush1.bf16.msra.mxu0 %v1009
  %1032 = vmatprep.subr.bf16.mxu0 0
  %1033 = vmatpush2.bf16.msra.mxu0 0
  %1034 = vmatprep.subr.bf16.mxu0 0
  %1035 = vmatpush2.bf16.msra.mxu0 0
  %1036 = vmatprep.subr.bf16.mxu0 0
  %1037 = vmatpush2.bf16.msra.mxu0 0
  %1038 = vmatprep.subr.bf16.mxu0 0
  %1039 = vmatpush2.bf16.msra.mxu0 0
  %1040 = vmatprep.subr.bf16.mxu0 0
  %1041 = vmatpush2.bf16.msra.mxu0 0
  %1042 = vmatprep.subr.bf16.mxu0 0
  %1043 = vmatpush2.bf16.msra.mxu0 0
  %1044 = vmatprep.subr.bf16.mxu0 0
  %1045 = vmatpush2.bf16.msra.mxu0 0
  %1046 = vmatprep.subr.bf16.mxu0 0
  %1047 = vmatpush2.bf16.msra.mxu0 0
  %1048 = vmatprep.mubr.bf16.mxu0 0
  %1049 = vmatmul.mubr.bf16.gmra.mxu0 %v1014
  %v1050 = vpop.f32.mrf.mxu0
  %v1051 = vadd.f32 0.0, %v1050
  %v1052 = vpop.f32.mrf.mxu0
  %v1053 = vpop.f32.mrf.mxu0
  %v1054 = vpop.f32.mrf.mxu0
  %1055 = vdwg.mxu0
  %v1056 = vld [vmem:[%s867] sm:$0xff]
  %v1057 = vadd.f32 %v1056, %v988
  %v1058 = vld [vmem:[%s864 + $0x8] sm:$0xff]
  %v1059 = vadd.f32 %v1058, %v1051
  %v1060 = vxor.u32 %v1057, 2147483648
  %v1061 = vmul.f32 %v1060, 1.442695
  %v1062 = vpow.pop %v1061
  %v1063 = vadd.f32 %v1062, 1.0
  %v1064 = vrcp.pop %v1063
  %v1065 = vmul.f32 1.0, %v1064
  %v1066 = vtanh.pop %v1057
  %v1067 = vmul.f32 %v1065, %v887
  %1069 = vrot.lane.b32.xlu0 %v1066, 64
  %v1070 = vpop.permute.xlu0 %1069
  %v1072 = vmul.f32 %v1065, %v1070
  %1074 = vrot.lane.b32.xlu0 %v1072, 32
  %v1075 = vpop.permute.xlu0 %1074
  %v1077 = vadd.f32 %v1067, %v1075
  %v1078 = vtanh.pop %v1077
  %1080 = vrot.lane.b32.xlu0 %v1078, 64
  %v1081 = vpop.permute.xlu0 %1080
  %v1083 = vmul.f32 %v1065, %v1081
  %v1084 = vxor.u32 %v1059, 2147483648
  %v1085 = vmul.f32 %v1084, 1.442695
  %v1086 = vpow.pop %v1085
  %v1087 = vadd.f32 %v1086, 1.0
  %v1088 = vrcp.pop %v1087
  %v1089 = vmul.f32 1.0, %v1088
  %v1090 = vtanh.pop %v1059
  %v1091 = vmul.f32 %v1089, %v911
  %1093 = vrot.lane.b32.xlu0 %v1090, 64
  %v1094 = vpop.permute.xlu0 %1093
  %v1096 = vmul.f32 %v1089, %v1094
  %1098 = vrot.lane.b32.xlu0 %v1096, 32
  %v1099 = vpop.permute.xlu0 %1098
  %v1101 = vadd.f32 %v1091, %v1099
  %v1102 = vtanh.pop %v1101
  %1104 = vrot.lane.b32.xlu0 %v1102, 64
  %v1105 = vpop.permute.xlu0 %1104
  %v1107 = vmul.f32 %v1089, %v1105
  %1109 = vrot.lane.b32.xlu0 %v1083, 32
  %v1110 = vpop.permute.xlu0 %1109
  %1112 = vst.msk [vmem:[%s928] sm:$0xff] %vm188, %v1110
  %1114 = vrot.lane.b32.xlu0 %v1107, 64
  %v1115 = vpop.permute.xlu0 %1114
  %1117 = vst.msk [vmem:[%s922] sm:$0xff] %vm352, %v1115
  %v1118 = vpack.c.bf16 %v1083, %v1083
  %v1119 = vld [vmem:[%s2] sm:$0xf]
  %v1120 = vld [vmem:[%s2 + $0x4] sm:$0xf]
  %v1121 = vld [vmem:[%s2 + $0x8] sm:$0xf]
  %v1122 = vld [vmem:[%s2 + $0xc] sm:$0xf]
  %1124 = vrot.lane.b32.xlu0 %v1118, 32
  %v1125 = vpop.permute.xlu0 %1124
  %v1130 = vunpack.c.l.b16 %v1119
  %v1131 = vunpack.c.l.b16 %v1120
  %v1132 = vunpack.c.l.b16 %v1121
  %v1133 = vunpack.c.l.b16 %v1122
  %v1134 = vpack.c.b16 %v1131, %v1130
  %v1135 = vpack.c.b16 %v1133, %v1132
  %v1139 = vsel %vm188, %v1125, 0
  %1141 = vmatprep.subr.bf16.mxu0 0
  %1142 = vmatpush1.bf16.msra.mxu0 0
  %1143 = vmatprep.subr.bf16.mxu0 0
  %1144 = vmatpush1.bf16.msra.mxu0 0
  %1145 = vmatprep.subr.bf16.mxu0 0
  %1146 = vmatpush1.bf16.msra.mxu0 0
  %1147 = vmatprep.subr.bf16.mxu0 0
  %1148 = vmatpush1.bf16.msra.mxu0 0
  %1149 = vmatprep.subr.bf16.mxu0 0
  %1150 = vmatpush1.bf16.msra.mxu0 0
  %1151 = vmatprep.subr.bf16.mxu0 0
  %1152 = vmatpush1.bf16.msra.mxu0 0
  %1153 = vmatprep.subr.bf16.mxu0 0
  %1154 = vmatpush1.bf16.msra.mxu0 %v1135
  %1155 = vmatprep.subr.bf16.mxu0 0
  %1156 = vmatpush1.bf16.msra.mxu0 %v1134
  %1157 = vmatprep.subr.bf16.mxu0 0
  %1158 = vmatpush2.bf16.msra.mxu0 0
  %1159 = vmatprep.subr.bf16.mxu0 0
  %1160 = vmatpush2.bf16.msra.mxu0 0
  %1161 = vmatprep.subr.bf16.mxu0 0
  %1162 = vmatpush2.bf16.msra.mxu0 0
  %1163 = vmatprep.subr.bf16.mxu0 0
  %1164 = vmatpush2.bf16.msra.mxu0 0
  %1165 = vmatprep.subr.bf16.mxu0 0
  %1166 = vmatpush2.bf16.msra.mxu0 0
  %1167 = vmatprep.subr.bf16.mxu0 0
  %1168 = vmatpush2.bf16.msra.mxu0 0
  %1169 = vmatprep.subr.bf16.mxu0 0
  %1170 = vmatpush2.bf16.msra.mxu0 0
  %1171 = vmatprep.subr.bf16.mxu0 0
  %1172 = vmatpush2.bf16.msra.mxu0 0
  %1173 = vmatprep.mubr.bf16.mxu0 0
  %1174 = vmatmul.mubr.bf16.gmra.mxu0 %v1139
  %v1175 = vpop.f32.mrf.mxu0
  %v1176 = vadd.f32 0.0, %v1175
  %v1177 = vpop.f32.mrf.mxu0
  %v1178 = vpop.f32.mrf.mxu0
  %v1179 = vpop.f32.mrf.mxu0
  %1180 = vdwg.mxu0
  %v1181 = vpack.c.bf16 %v1107, %v1107
  %v1182 = vld [vmem:[%s232] sm:$0xf]
  %v1183 = vld [vmem:[%s232 + $0x4] sm:$0xf]
  %v1184 = vld [vmem:[%s232 + $0x8] sm:$0xf]
  %v1185 = vld [vmem:[%s232 + $0xc] sm:$0xf]
  %1187 = vrot.lane.b32.xlu0 %v1181, 32
  %v1188 = vpop.permute.xlu0 %1187
  %v1193 = vunpack.c.l.b16 %v1182
  %v1194 = vunpack.c.l.b16 %v1183
  %v1195 = vunpack.c.l.b16 %v1184
  %v1196 = vunpack.c.l.b16 %v1185
  %v1197 = vpack.c.b16 %v1194, %v1193
  %v1198 = vpack.c.b16 %v1196, %v1195
  %v1202 = vsel %vm188, %v1188, 0
  %1204 = vmatprep.subr.bf16.mxu0 0
  %1205 = vmatpush1.bf16.msra.mxu0 0
  %1206 = vmatprep.subr.bf16.mxu0 0
  %1207 = vmatpush1.bf16.msra.mxu0 0
  %1208 = vmatprep.subr.bf16.mxu0 0
  %1209 = vmatpush1.bf16.msra.mxu0 0
  %1210 = vmatprep.subr.bf16.mxu0 0
  %1211 = vmatpush1.bf16.msra.mxu0 0
  %1212 = vmatprep.subr.bf16.mxu0 0
  %1213 = vmatpush1.bf16.msra.mxu0 0
  %1214 = vmatprep.subr.bf16.mxu0 0
  %1215 = vmatpush1.bf16.msra.mxu0 0
  %1216 = vmatprep.subr.bf16.mxu0 0
  %1217 = vmatpush1.bf16.msra.mxu0 %v1198
  %1218 = vmatprep.subr.bf16.mxu0 0
  %1219 = vmatpush1.bf16.msra.mxu0 %v1197
  %1220 = vmatprep.subr.bf16.mxu0 0
  %1221 = vmatpush2.bf16.msra.mxu0 0
  %1222 = vmatprep.subr.bf16.mxu0 0
  %1223 = vmatpush2.bf16.msra.mxu0 0
  %1224 = vmatprep.subr.bf16.mxu0 0
  %1225 = vmatpush2.bf16.msra.mxu0 0
  %1226 = vmatprep.subr.bf16.mxu0 0
  %1227 = vmatpush2.bf16.msra.mxu0 0
  %1228 = vmatprep.subr.bf16.mxu0 0
  %1229 = vmatpush2.bf16.msra.mxu0 0
  %1230 = vmatprep.subr.bf16.mxu0 0
  %1231 = vmatpush2.bf16.msra.mxu0 0
  %1232 = vmatprep.subr.bf16.mxu0 0
  %1233 = vmatpush2.bf16.msra.mxu0 0
  %1234 = vmatprep.subr.bf16.mxu0 0
  %1235 = vmatpush2.bf16.msra.mxu0 0
  %1236 = vmatprep.mubr.bf16.mxu0 0
  %1237 = vmatmul.mubr.bf16.gmra.mxu0 %v1202
  %v1238 = vpop.f32.mrf.mxu0
  %v1239 = vadd.f32 0.0, %v1238
  %v1240 = vpop.f32.mrf.mxu0
  %v1241 = vpop.f32.mrf.mxu0
  %v1242 = vpop.f32.mrf.mxu0
  %1243 = vdwg.mxu0
  %v1244 = vld [vmem:[%s675] sm:$0xff]
  %v1245 = vadd.f32 %v1244, %v1176
  %v1246 = vld [vmem:[%s672 + $0x8] sm:$0xff]
  %v1247 = vadd.f32 %v1246, %v1239
  %v1248 = vxor.u32 %v1245, 2147483648
  %v1249 = vmul.f32 %v1248, 1.442695
  %v1250 = vpow.pop %v1249
  %v1251 = vadd.f32 %v1250, 1.0
  %v1252 = vrcp.pop %v1251
  %v1253 = vmul.f32 1.0, %v1252
  %v1254 = vtanh.pop %v1245
  %v1255 = vmul.f32 %v1253, %v1077
  %1257 = vrot.lane.b32.xlu0 %v1254, 64
  %v1258 = vpop.permute.xlu0 %1257
  %v1260 = vmul.f32 %v1253, %v1258
  %1262 = vrot.lane.b32.xlu0 %v1260, 32
  %v1263 = vpop.permute.xlu0 %1262
  %v1265 = vadd.f32 %v1255, %v1263
  %v1266 = vtanh.pop %v1265
  %1268 = vrot.lane.b32.xlu0 %v1266, 64
  %v1269 = vpop.permute.xlu0 %1268
  %v1271 = vmul.f32 %v1253, %v1269
  %v1272 = vxor.u32 %v1247, 2147483648
  %v1273 = vmul.f32 %v1272, 1.442695
  %v1274 = vpow.pop %v1273
  %v1275 = vadd.f32 %v1274, 1.0
  %v1276 = vrcp.pop %v1275
  %v1277 = vmul.f32 1.0, %v1276
  %v1278 = vtanh.pop %v1247
  %v1279 = vmul.f32 %v1277, %v1101
  %1281 = vrot.lane.b32.xlu0 %v1278, 64
  %v1282 = vpop.permute.xlu0 %1281
  %v1284 = vmul.f32 %v1277, %v1282
  %1286 = vrot.lane.b32.xlu0 %v1284, 32
  %v1287 = vpop.permute.xlu0 %1286
  %v1289 = vadd.f32 %v1279, %v1287
  %v1290 = vtanh.pop %v1289
  %1292 = vrot.lane.b32.xlu0 %v1290, 64
  %v1293 = vpop.permute.xlu0 %1292
  %v1295 = vmul.f32 %v1277, %v1293
  %1297 = vrot.lane.b32.xlu0 %v1271, 32
  %v1298 = vpop.permute.xlu0 %1297
  %1300 = vst.msk [vmem:[%s736] sm:$0xff] %vm188, %v1298
  %1302 = vrot.lane.b32.xlu0 %v1295, 64
  %v1303 = vpop.permute.xlu0 %1302
  %1305 = vst.msk [vmem:[%s730] sm:$0xff] %vm352, %v1303
  %v1306 = vpack.c.bf16 %v1271, %v1271
  %v1307 = vld [vmem:[%s2] sm:$0xf]
  %v1308 = vld [vmem:[%s2 + $0x4] sm:$0xf]
  %v1309 = vld [vmem:[%s2 + $0x8] sm:$0xf]
  %v1310 = vld [vmem:[%s2 + $0xc] sm:$0xf]
  %1312 = vrot.lane.b32.xlu0 %v1306, 32
  %v1313 = vpop.permute.xlu0 %1312
  %v1318 = vunpack.c.l.b16 %v1307
  %v1319 = vunpack.c.l.b16 %v1308
  %v1320 = vunpack.c.l.b16 %v1309
  %v1321 = vunpack.c.l.b16 %v1310
  %v1322 = vpack.c.b16 %v1319, %v1318
  %v1323 = vpack.c.b16 %v1321, %v1320
  %v1327 = vsel %vm188, %v1313, 0
  %1329 = vmatprep.subr.bf16.mxu0 0
  %1330 = vmatpush1.bf16.msra.mxu0 0
  %1331 = vmatprep.subr.bf16.mxu0 0
  %1332 = vmatpush1.bf16.msra.mxu0 0
  %1333 = vmatprep.subr.bf16.mxu0 0
  %1334 = vmatpush1.bf16.msra.mxu0 0
  %1335 = vmatprep.subr.bf16.mxu0 0
  %1336 = vmatpush1.bf16.msra.mxu0 0
  %1337 = vmatprep.subr.bf16.mxu0 0
  %1338 = vmatpush1.bf16.msra.mxu0 0
  %1339 = vmatprep.subr.bf16.mxu0 0
  %1340 = vmatpush1.bf16.msra.mxu0 0
  %1341 = vmatprep.subr.bf16.mxu0 0
  %1342 = vmatpush1.bf16.msra.mxu0 %v1323
  %1343 = vmatprep.subr.bf16.mxu0 0
  %1344 = vmatpush1.bf16.msra.mxu0 %v1322
  %1345 = vmatprep.subr.bf16.mxu0 0
  %1346 = vmatpush2.bf16.msra.mxu0 0
  %1347 = vmatprep.subr.bf16.mxu0 0
  %1348 = vmatpush2.bf16.msra.mxu0 0
  %1349 = vmatprep.subr.bf16.mxu0 0
  %1350 = vmatpush2.bf16.msra.mxu0 0
  %1351 = vmatprep.subr.bf16.mxu0 0
  %1352 = vmatpush2.bf16.msra.mxu0 0
  %1353 = vmatprep.subr.bf16.mxu0 0
  %1354 = vmatpush2.bf16.msra.mxu0 0
  %1355 = vmatprep.subr.bf16.mxu0 0
  %1356 = vmatpush2.bf16.msra.mxu0 0
  %1357 = vmatprep.subr.bf16.mxu0 0
  %1358 = vmatpush2.bf16.msra.mxu0 0
  %1359 = vmatprep.subr.bf16.mxu0 0
  %1360 = vmatpush2.bf16.msra.mxu0 0
  %1361 = vmatprep.mubr.bf16.mxu0 0
  %1362 = vmatmul.mubr.bf16.gmra.mxu0 %v1327
  %v1363 = vpop.f32.mrf.mxu0
  %v1364 = vadd.f32 0.0, %v1363
  %v1365 = vpop.f32.mrf.mxu0
  %v1366 = vpop.f32.mrf.mxu0
  %v1367 = vpop.f32.mrf.mxu0
  %1368 = vdwg.mxu0
  %v1369 = vpack.c.bf16 %v1295, %v1295
  %v1370 = vld [vmem:[%s232] sm:$0xf]
  %v1371 = vld [vmem:[%s232 + $0x4] sm:$0xf]
  %v1372 = vld [vmem:[%s232 + $0x8] sm:$0xf]
  %v1373 = vld [vmem:[%s232 + $0xc] sm:$0xf]
  %1375 = vrot.lane.b32.xlu0 %v1369, 32
  %v1376 = vpop.permute.xlu0 %1375
  %v1381 = vunpack.c.l.b16 %v1370
  %v1382 = vunpack.c.l.b16 %v1371
  %v1383 = vunpack.c.l.b16 %v1372
  %v1384 = vunpack.c.l.b16 %v1373
  %v1385 = vpack.c.b16 %v1382, %v1381
  %v1386 = vpack.c.b16 %v1384, %v1383
  %v1390 = vsel %vm188, %v1376, 0
  %1392 = vmatprep.subr.bf16.mxu0 0
  %1393 = vmatpush1.bf16.msra.mxu0 0
  %1394 = vmatprep.subr.bf16.mxu0 0
  %1395 = vmatpush1.bf16.msra.mxu0 0
  %1396 = vmatprep.subr.bf16.mxu0 0
  %1397 = vmatpush1.bf16.msra.mxu0 0
  %1398 = vmatprep.subr.bf16.mxu0 0
  %1399 = vmatpush1.bf16.msra.mxu0 0
  %1400 = vmatprep.subr.bf16.mxu0 0
  %1401 = vmatpush1.bf16.msra.mxu0 0
  %1402 = vmatprep.subr.bf16.mxu0 0
  %1403 = vmatpush1.bf16.msra.mxu0 0
  %1404 = vmatprep.subr.bf16.mxu0 0
  %1405 = vmatpush1.bf16.msra.mxu0 %v1386
  %1406 = vmatprep.subr.bf16.mxu0 0
  %1407 = vmatpush1.bf16.msra.mxu0 %v1385
  %1408 = vmatprep.subr.bf16.mxu0 0
  %1409 = vmatpush2.bf16.msra.mxu0 0
  %1410 = vmatprep.subr.bf16.mxu0 0
  %1411 = vmatpush2.bf16.msra.mxu0 0
  %1412 = vmatprep.subr.bf16.mxu0 0
  %1413 = vmatpush2.bf16.msra.mxu0 0
  %1414 = vmatprep.subr.bf16.mxu0 0
  %1415 = vmatpush2.bf16.msra.mxu0 0
  %1416 = vmatprep.subr.bf16.mxu0 0
  %1417 = vmatpush2.bf16.msra.mxu0 0
  %1418 = vmatprep.subr.bf16.mxu0 0
  %1419 = vmatpush2.bf16.msra.mxu0 0
  %1420 = vmatprep.subr.bf16.mxu0 0
  %1421 = vmatpush2.bf16.msra.mxu0 0
  %1422 = vmatprep.subr.bf16.mxu0 0
  %1423 = vmatpush2.bf16.msra.mxu0 0
  %1424 = vmatprep.mubr.bf16.mxu0 0
  %1425 = vmatmul.mubr.bf16.gmra.mxu0 %v1390
  %v1426 = vpop.f32.mrf.mxu0
  %v1427 = vadd.f32 0.0, %v1426
  %v1428 = vpop.f32.mrf.mxu0
  %v1429 = vpop.f32.mrf.mxu0
  %v1430 = vpop.f32.mrf.mxu0
  %1431 = vdwg.mxu0
  %v1432 = vld [vmem:[%s483] sm:$0xff]
  %v1433 = vadd.f32 %v1432, %v1364
  %v1434 = vld [vmem:[%s480 + $0x8] sm:$0xff]
  %v1435 = vadd.f32 %v1434, %v1427
  %v1436 = vxor.u32 %v1433, 2147483648
  %v1437 = vmul.f32 %v1436, 1.442695
  %v1438 = vpow.pop %v1437
  %v1439 = vadd.f32 %v1438, 1.0
  %v1440 = vrcp.pop %v1439
  %v1441 = vmul.f32 1.0, %v1440
  %v1442 = vtanh.pop %v1433
  %v1443 = vmul.f32 %v1441, %v1265
  %1445 = vrot.lane.b32.xlu0 %v1442, 64
  %v1446 = vpop.permute.xlu0 %1445
  %v1448 = vmul.f32 %v1441, %v1446
  %1450 = vrot.lane.b32.xlu0 %v1448, 32
  %v1451 = vpop.permute.xlu0 %1450
  %v1453 = vadd.f32 %v1443, %v1451
  %v1454 = vtanh.pop %v1453
  %1456 = vrot.lane.b32.xlu0 %v1454, 64
  %v1457 = vpop.permute.xlu0 %1456
  %v1459 = vmul.f32 %v1441, %v1457
  %v1460 = vxor.u32 %v1435, 2147483648
  %v1461 = vmul.f32 %v1460, 1.442695
  %v1462 = vpow.pop %v1461
  %v1463 = vadd.f32 %v1462, 1.0
  %v1464 = vrcp.pop %v1463
  %v1465 = vmul.f32 1.0, %v1464
  %v1466 = vtanh.pop %v1435
  %v1467 = vmul.f32 %v1465, %v1289
  %1469 = vrot.lane.b32.xlu0 %v1466, 64
  %v1470 = vpop.permute.xlu0 %1469
  %v1472 = vmul.f32 %v1465, %v1470
  %1474 = vrot.lane.b32.xlu0 %v1472, 32
  %v1475 = vpop.permute.xlu0 %1474
  %v1477 = vadd.f32 %v1467, %v1475
  %v1478 = vtanh.pop %v1477
  %1480 = vrot.lane.b32.xlu0 %v1478, 64
  %v1481 = vpop.permute.xlu0 %1480
  %v1483 = vmul.f32 %v1465, %v1481
  %1485 = vrot.lane.b32.xlu0 %v1459, 32
  %v1486 = vpop.permute.xlu0 %1485
  %1488 = vst.msk [vmem:[%s544] sm:$0xff] %vm188, %v1486
  %1490 = vrot.lane.b32.xlu0 %v1483, 64
  %v1491 = vpop.permute.xlu0 %1490
  %1493 = vst.msk [vmem:[%s538] sm:$0xff] %vm352, %v1491
  %v1494 = vpack.c.bf16 %v1459, %v1459
  %v1495 = vld [vmem:[%s2] sm:$0xf]
  %v1496 = vld [vmem:[%s2 + $0x4] sm:$0xf]
  %v1497 = vld [vmem:[%s2 + $0x8] sm:$0xf]
  %v1498 = vld [vmem:[%s2 + $0xc] sm:$0xf]
  %1500 = vrot.lane.b32.xlu0 %v1494, 32
  %v1501 = vpop.permute.xlu0 %1500
  %v1506 = vunpack.c.l.b16 %v1495
  %v1507 = vunpack.c.l.b16 %v1496
  %v1508 = vunpack.c.l.b16 %v1497
  %v1509 = vunpack.c.l.b16 %v1498
  %v1510 = vpack.c.b16 %v1507, %v1506
  %v1511 = vpack.c.b16 %v1509, %v1508
  %v1515 = vsel %vm188, %v1501, 0
  %1517 = vmatprep.subr.bf16.mxu0 0
  %1518 = vmatpush1.bf16.msra.mxu0 0
  %1519 = vmatprep.subr.bf16.mxu0 0
  %1520 = vmatpush1.bf16.msra.mxu0 0
  %1521 = vmatprep.subr.bf16.mxu0 0
  %1522 = vmatpush1.bf16.msra.mxu0 0
  %1523 = vmatprep.subr.bf16.mxu0 0
  %1524 = vmatpush1.bf16.msra.mxu0 0
  %1525 = vmatprep.subr.bf16.mxu0 0
  %1526 = vmatpush1.bf16.msra.mxu0 0
  %1527 = vmatprep.subr.bf16.mxu0 0
  %1528 = vmatpush1.bf16.msra.mxu0 0
  %1529 = vmatprep.subr.bf16.mxu0 0
  %1530 = vmatpush1.bf16.msra.mxu0 %v1511
  %1531 = vmatprep.subr.bf16.mxu0 0
  %1532 = vmatpush1.bf16.msra.mxu0 %v1510
  %1533 = vmatprep.subr.bf16.mxu0 0
  %1534 = vmatpush2.bf16.msra.mxu0 0
  %1535 = vmatprep.subr.bf16.mxu0 0
  %1536 = vmatpush2.bf16.msra.mxu0 0
  %1537 = vmatprep.subr.bf16.mxu0 0
  %1538 = vmatpush2.bf16.msra.mxu0 0
  %1539 = vmatprep.subr.bf16.mxu0 0
  %1540 = vmatpush2.bf16.msra.mxu0 0
  %1541 = vmatprep.subr.bf16.mxu0 0
  %1542 = vmatpush2.bf16.msra.mxu0 0
  %1543 = vmatprep.subr.bf16.mxu0 0
  %1544 = vmatpush2.bf16.msra.mxu0 0
  %1545 = vmatprep.subr.bf16.mxu0 0
  %1546 = vmatpush2.bf16.msra.mxu0 0
  %1547 = vmatprep.subr.bf16.mxu0 0
  %1548 = vmatpush2.bf16.msra.mxu0 0
  %1549 = vmatprep.mubr.bf16.mxu0 0
  %1550 = vmatmul.mubr.bf16.gmra.mxu0 %v1515
  %v1551 = vpop.f32.mrf.mxu0
  %v1552 = vadd.f32 0.0, %v1551
  %v1553 = vpop.f32.mrf.mxu0
  %v1554 = vpop.f32.mrf.mxu0
  %v1555 = vpop.f32.mrf.mxu0
  %1556 = vdwg.mxu0
  %v1557 = vpack.c.bf16 %v1483, %v1483
  %v1558 = vld [vmem:[%s232] sm:$0xf]
  %v1559 = vld [vmem:[%s232 + $0x4] sm:$0xf]
  %v1560 = vld [vmem:[%s232 + $0x8] sm:$0xf]
  %v1561 = vld [vmem:[%s232 + $0xc] sm:$0xf]
  %1563 = vrot.lane.b32.xlu0 %v1557, 32
  %v1564 = vpop.permute.xlu0 %1563
  %v1569 = vunpack.c.l.b16 %v1558
  %v1570 = vunpack.c.l.b16 %v1559
  %v1571 = vunpack.c.l.b16 %v1560
  %v1572 = vunpack.c.l.b16 %v1561
  %v1573 = vpack.c.b16 %v1570, %v1569
  %v1574 = vpack.c.b16 %v1572, %v1571
  %v1578 = vsel %vm188, %v1564, 0
  %1580 = vmatprep.subr.bf16.mxu0 0
  %1581 = vmatpush1.bf16.msra.mxu0 0
  %1582 = vmatprep.subr.bf16.mxu0 0
  %1583 = vmatpush1.bf16.msra.mxu0 0
  %1584 = vmatprep.subr.bf16.mxu0 0
  %1585 = vmatpush1.bf16.msra.mxu0 0
  %1586 = vmatprep.subr.bf16.mxu0 0
  %1587 = vmatpush1.bf16.msra.mxu0 0
  %1588 = vmatprep.subr.bf16.mxu0 0
  %1589 = vmatpush1.bf16.msra.mxu0 0
  %1590 = vmatprep.subr.bf16.mxu0 0
  %1591 = vmatpush1.bf16.msra.mxu0 0
  %1592 = vmatprep.subr.bf16.mxu0 0
  %1593 = vmatpush1.bf16.msra.mxu0 %v1574
  %1594 = vmatprep.subr.bf16.mxu0 0
  %1595 = vmatpush1.bf16.msra.mxu0 %v1573
  %1596 = vmatprep.subr.bf16.mxu0 0
  %1597 = vmatpush2.bf16.msra.mxu0 0
  %1598 = vmatprep.subr.bf16.mxu0 0
  %1599 = vmatpush2.bf16.msra.mxu0 0
  %1600 = vmatprep.subr.bf16.mxu0 0
  %1601 = vmatpush2.bf16.msra.mxu0 0
  %1602 = vmatprep.subr.bf16.mxu0 0
  %1603 = vmatpush2.bf16.msra.mxu0 0
  %1604 = vmatprep.subr.bf16.mxu0 0
  %1605 = vmatpush2.bf16.msra.mxu0 0
  %1606 = vmatprep.subr.bf16.mxu0 0
  %1607 = vmatpush2.bf16.msra.mxu0 0
  %1608 = vmatprep.subr.bf16.mxu0 0
  %1609 = vmatpush2.bf16.msra.mxu0 0
  %1610 = vmatprep.subr.bf16.mxu0 0
  %1611 = vmatpush2.bf16.msra.mxu0 0
  %1612 = vmatprep.mubr.bf16.mxu0 0
  %1613 = vmatmul.mubr.bf16.gmra.mxu0 %v1578
  %v1614 = vpop.f32.mrf.mxu0
  %v1615 = vadd.f32 0.0, %v1614
  %v1616 = vpop.f32.mrf.mxu0
  %v1617 = vpop.f32.mrf.mxu0
  %v1618 = vpop.f32.mrf.mxu0
  %1619 = vdwg.mxu0
  %v1620 = vld [vmem:[%s291] sm:$0xff]
  %v1621 = vadd.f32 %v1620, %v1552
  %v1622 = vld [vmem:[#allocation2 + $0x8] sm:$0xff]
  %v1623 = vadd.f32 %v1622, %v1615
  %v1624 = vxor.u32 %v1621, 2147483648
  %v1625 = vmul.f32 %v1624, 1.442695
  %v1626 = vpow.pop %v1625
  %v1627 = vadd.f32 %v1626, 1.0
  %v1628 = vrcp.pop %v1627
  %v1629 = vmul.f32 1.0, %v1628
  %v1630 = vtanh.pop %v1621
  %v1631 = vmul.f32 %v1629, %v1453
  %1633 = vrot.lane.b32.xlu0 %v1630, 64
  %v1634 = vpop.permute.xlu0 %1633
  %v1636 = vmul.f32 %v1629, %v1634
  %1638 = vrot.lane.b32.xlu0 %v1636, 32
  %v1639 = vpop.permute.xlu0 %1638
  %v1641 = vadd.f32 %v1631, %v1639
  %v1642 = vtanh.pop %v1641
  %1644 = vrot.lane.b32.xlu0 %v1642, 64
  %v1645 = vpop.permute.xlu0 %1644
  %v1647 = vmul.f32 %v1629, %v1645
  %v1648 = vxor.u32 %v1623, 2147483648
  %v1649 = vmul.f32 %v1648, 1.442695
  %v1650 = vpow.pop %v1649
  %v1651 = vadd.f32 %v1650, 1.0
  %v1652 = vrcp.pop %v1651
  %v1653 = vmul.f32 1.0, %v1652
  %v1654 = vtanh.pop %v1623
  %v1655 = vmul.f32 %v1653, %v1477
  %1657 = vrot.lane.b32.xlu0 %v1654, 64
  %v1658 = vpop.permute.xlu0 %1657
  %v1660 = vmul.f32 %v1653, %v1658
  %1662 = vrot.lane.b32.xlu0 %v1660, 32
  %v1663 = vpop.permute.xlu0 %1662
  %v1665 = vadd.f32 %v1655, %v1663
  %v1666 = vtanh.pop %v1665
  %1668 = vrot.lane.b32.xlu0 %v1666, 64
  %v1669 = vpop.permute.xlu0 %1668
  %v1671 = vmul.f32 %v1653, %v1669
  %1673 = vrot.lane.b32.xlu0 %v1647, 32
  %v1674 = vpop.permute.xlu0 %1673
  %1676 = vst.msk [vmem:[%s351] sm:$0xff] %vm188, %v1674
  %1678 = vrot.lane.b32.xlu0 %v1671, 64
  %v1679 = vpop.permute.xlu0 %1678
  %1681 = vst.msk [vmem:[%s4] sm:$0xff] %vm352, %v1679
  // Predicated region
  $region18: #{lstm_forward.2} parent=0 // pred_check
    _
  $region19: #{lstm_forward.2} parent=0 // pred_check_branch
    %1683 = sbr.rel (0) target = $region21
  $region20: #{lstm_forward.2} parent=0 // pred_region
    _
  $region21: #{lstm_forward.2} parent=0 // pred_fallthru
    _
  // Predicated region
  $region22: #{lstm_forward.2} parent=0 // pred_check
    _
  $region23: #{lstm_forward.2} parent=0 // pred_check_branch
    %1685 = sbr.rel (0) target = $region25
  $region24: #{lstm_forward.2} parent=0 // pred_region
    _
  $region25: #{lstm_forward.2} parent=0 // pred_fallthru
    _

// kernel: lstm_forward.3
$region0: #{lstm_forward.3}
  #allocation0 [shape = 'u32[]', space=smem, size = 0x4, offset = 0x4, fixed_abs, tag = 'smem constant byte address 0x4 - core index']
  #allocation1 [shape = 'u32[144,128]{1,0:T(1,128)}', space=vmem, size = 0x12000, scoped, tag = 'internal scratch']
  #allocation2 [shape = 'f32[8,8,256]{2,1,0:T(8,128)}', space=vmem, size = 0x10000, scoped, tag = 'scratch operand']
  %s0 = inlined_call_operand.vmem [shape: bf16[64,64], index: 0, kind: input, shape index: {}]
  %s1 = inlined_call_operand.vmem [shape: bf16[64,256], index: 1, kind: input, shape index: {}]
  %s2 = inlined_call_operand.vmem [shape: bf16[2,32,128], index: 2, kind: input, shape index: {}]
  %s3 = inlined_call_operand.vmem [shape: f32[1,256], index: 3, kind: input, shape index: {}]
  %s4 = inlined_call_operand.vmem [shape: f32[8,8,64], index: 4, kind: output, shape index: {}]
  %s5 = sld [smem:[#allocation0]]
  $region26: #{lstm_forward.3} parent=0
    _
  %s7 = ssub.s32 1, %s5
  %s8 = scalar_select 0, %s7, %s5
  // Predicated region
  $region2: #{lstm_forward.3} parent=0 // pred_check
    _
  $region3: #{lstm_forward.3} parent=0 // pred_check_branch
    %10 = sbr.rel (0) target = $region5
  $region4: #{lstm_forward.3} parent=0 // pred_region
    _
  $region5: #{lstm_forward.3} parent=0 // pred_fallthru
    _
  // Predicated region
  $region6: #{lstm_forward.3} parent=0 // pred_check
    _
  $region7: #{lstm_forward.3} parent=0 // pred_check_branch
    %12 = sbr.rel (0) target = $region9
  $region8: #{lstm_forward.3} parent=0 // pred_region
    _
  $region9: #{lstm_forward.3} parent=0 // pred_fallthru
    _
  // Predicated region
  $region10: #{lstm_forward.3} parent=0 // pred_check
    _
  $region11: #{lstm_forward.3} parent=0 // pred_check_branch
    %14 = sbr.rel (0) target = $region13
  $region12: #{lstm_forward.3} parent=0 // pred_region
    _
  $region13: #{lstm_forward.3} parent=0 // pred_fallthru
    _
  // Predicated region
  $region14: #{lstm_forward.3} parent=0 // pred_check
    _
  $region15: #{lstm_forward.3} parent=0 // pred_check_branch
    %16 = sbr.rel (0) target = $region17
  $region16: #{lstm_forward.3} parent=0 // pred_region
    _
  $region17: #{lstm_forward.3} parent=0 // pred_fallthru
    _
  %v18 = vld [vmem:[%s0] sm:$0xf]
  %v19 = vld [vmem:[%s0 + $0x4] sm:$0xf]
  %v20 = vld [vmem:[%s0 + $0x8] sm:$0xf]
  %v21 = vld [vmem:[%s0 + $0xc] sm:$0xf]
  %v22 = vld [vmem:[%s0 + $0x10] sm:$0xf]
  %v23 = vld [vmem:[%s0 + $0x14] sm:$0xf]
  %v24 = vld [vmem:[%s0 + $0x18] sm:$0xf]
  %v25 = vld [vmem:[%s0 + $0x1c] sm:$0xf]
  %v26 = vld [vmem:[%s1] sm:$0xff]
  %v27 = vld [vmem:[%s1 + $0x8] sm:$0xff]
  %v28 = vld [vmem:[%s1 + $0x10] sm:$0xff]
  %v29 = vld [vmem:[%s1 + $0x18] sm:$0xff]
  %v30 = vld [vmem:[%s1 + $0x20] sm:$0xff]
  %v31 = vld [vmem:[%s1 + $0x28] sm:$0xff]
  %v32 = vld [vmem:[%s1 + $0x30] sm:$0xff]
  %v33 = vld [vmem:[%s1 + $0x38] sm:$0xff]
  %v34 = vld [vmem:[%s3] sm:$0x3]
  %v36 = vlaneseq
  %v37 = vshrl.u32 %v36, 7
  %v38 = vsub.s32 0, %v37
  %v39 = vrot.slane %v34, %v38
  %v40 = vlaneseq
  %v41 = vshrl.u32 %v40, 7
  %v42 = vsub.s32 1, %v41
  %v43 = vrot.slane %v34, %v42
  %v54 = vunpack.c.l.b16 %v18
  %v55 = vunpack.c.l.b16 %v19
  %v56 = vunpack.c.l.b16 %v20
  %v57 = vunpack.c.l.b16 %v21
  %v58 = vunpack.c.l.b16 %v22
  %v59 = vunpack.c.l.b16 %v23
  %v60 = vunpack.c.l.b16 %v24
  %v61 = vunpack.c.l.b16 %v25
  %v62 = vpack.c.b16 %v55, %v54
  %v63 = vpack.c.b16 %v57, %v56
  %v64 = vpack.c.b16 %v59, %v58
  %v65 = vpack.c.b16 %v61, %v60
  %v74 = vunpack.c.l.b16 %v26
  %v75 = vunpack.c.h.b16 %v26
  %v76 = vunpack.c.l.b16 %v27
  %v77 = vunpack.c.h.b16 %v27
  %v78 = vunpack.c.l.b16 %v28
  %v79 = vunpack.c.h.b16 %v28
  %v80 = vunpack.c.l.b16 %v29
  %v81 = vunpack.c.h.b16 %v29
  %v82 = vunpack.c.l.b16 %v30
  %v83 = vunpack.c.h.b16 %v30
  %v84 = vunpack.c.l.b16 %v31
  %v85 = vunpack.c.h.b16 %v31
  %v86 = vunpack.c.l.b16 %v32
  %v87 = vunpack.c.h.b16 %v32
  %v88 = vunpack.c.l.b16 %v33
  %v89 = vunpack.c.h.b16 %v33
  %v90 = vpack.c.b16 %v76, %v74
  %v91 = vpack.c.b16 %v77, %v75
  %v92 = vpack.c.b16 %v80, %v78
  %v93 = vpack.c.b16 %v81, %v79
  %v94 = vpack.c.b16 %v84, %v82
  %v95 = vpack.c.b16 %v85, %v83
  %v96 = vpack.c.b16 %v88, %v86
  %v97 = vpack.c.b16 %v89, %v87
  %vm106 = vcmask 523264
  %v108 = vsel %vm106, %v62, 0
  %v111 = vsel %vm106, %v63, 0
  %v114 = vsel %vm106, %v64, 0
  %v117 = vsel %vm106, %v65, 0
  %119 = vmatprep.subr.bf16.mxu0 0
  %120 = vmatpush1.bf16.msra.mxu0 0
  %121 = vmatprep.subr.bf16.mxu0 0
  %122 = vmatpush1.bf16.msra.mxu0 0
  %123 = vmatprep.subr.bf16.mxu0 0
  %124 = vmatpush1.bf16.msra.mxu0 0
  %125 = vmatprep.subr.bf16.mxu0 0
  %126 = vmatpush1.bf16.msra.mxu0 0
  %127 = vmatprep.subr.bf16.mxu0 %v97
  %128 = vmatpush1.bf16.msra.mxu0 %v96
  %129 = vmatprep.subr.bf16.mxu0 %v95
  %130 = vmatpush1.bf16.msra.mxu0 %v94
  %131 = vmatprep.subr.bf16.mxu0 %v93
  %132 = vmatpush1.bf16.msra.mxu0 %v92
  %133 = vmatprep.subr.bf16.mxu0 %v91
  %134 = vmatpush1.bf16.msra.mxu0 %v90
  %135 = vmatprep.subr.bf16.mxu0 0
  %136 = vmatpush2.bf16.msra.mxu0 0
  %137 = vmatprep.subr.bf16.mxu0 0
  %138 = vmatpush2.bf16.msra.mxu0 0
  %139 = vmatprep.subr.bf16.mxu0 0
  %140 = vmatpush2.bf16.msra.mxu0 0
  %141 = vmatprep.subr.bf16.mxu0 0
  %142 = vmatpush2.bf16.msra.mxu0 0
  %143 = vmatprep.subr.bf16.mxu0 0
  %144 = vmatpush2.bf16.msra.mxu0 0
  %145 = vmatprep.subr.bf16.mxu0 0
  %146 = vmatpush2.bf16.msra.mxu0 0
  %147 = vmatprep.subr.bf16.mxu0 0
  %148 = vmatpush2.bf16.msra.mxu0 0
  %149 = vmatprep.subr.bf16.mxu0 0
  %150 = vmatpush2.bf16.msra.mxu0 0
  %151 = vmatprep.mubr.bf16.mxu0 0
  %152 = vmatmul.mubr.bf16.gmra.mxu0 %v108
  %v153 = vpop.f32.mrf.mxu0
  %v154 = vadd.f32 %v39, %v153
  %v155 = vpop.f32.mrf.mxu0
  %v156 = vadd.f32 %v43, %v155
  %v157 = vpop.f32.mrf.mxu0
  %v158 = vadd.f32 %v39, %v157
  %v159 = vpop.f32.mrf.mxu0
  %v160 = vadd.f32 %v43, %v159
  %161 = vmatprep.mubr.bf16.mxu0 0
  %162 = vmatmul.mubr.bf16.gmra.mxu0 %v111
  %v163 = vpop.f32.mrf.mxu0
  %v164 = vadd.f32 %v39, %v163
  %v165 = vpop.f32.mrf.mxu0
  %v166 = vadd.f32 %v43, %v165
  %v167 = vpop.f32.mrf.mxu0
  %v168 = vadd.f32 %v39, %v167
  %v169 = vpop.f32.mrf.mxu0
  %v170 = vadd.f32 %v43, %v169
  %171 = vmatprep.mubr.bf16.mxu0 0
  %172 = vmatmul.mubr.bf16.gmra.mxu0 %v114
  %v173 = vpop.f32.mrf.mxu0
  %v174 = vadd.f32 %v39, %v173
  %v175 = vpop.f32.mrf.mxu0
  %v176 = vadd.f32 %v43, %v175
  %v177 = vpop.f32.mrf.mxu0
  %v178 = vadd.f32 %v39, %v177
  %v179 = vpop.f32.mrf.mxu0
  %v180 = vadd.f32 %v43, %v179
  %181 = vmatprep.mubr.bf16.mxu0 0
  %182 = vmatmul.mubr.bf16.gmra.mxu0 %v117
  %v183 = vpop.f32.mrf.mxu0
  %v184 = vadd.f32 %v39, %v183
  %v185 = vpop.f32.mrf.mxu0
  %v186 = vadd.f32 %v43, %v185
  %v187 = vpop.f32.mrf.mxu0
  %v188 = vadd.f32 %v39, %v187
  %v189 = vpop.f32.mrf.mxu0
  %v190 = vadd.f32 %v43, %v189
  %191 = vdwg.mxu0
  %192 = vst [vmem:[#allocation2] sm:$0xff] %v154
  %193 = vst [vmem:[#allocation2 + $0x8] sm:$0xff] %v156
  %194 = vst [vmem:[#allocation2 + $0x10] sm:$0xff] %v158
  %195 = vst [vmem:[#allocation2 + $0x18] sm:$0xff] %v160
  %196 = vst [vmem:[#allocation2 + $0x20] sm:$0xff] %v164
  %197 = vst [vmem:[#allocation2 + $0x28] sm:$0xff] %v166
  %198 = vst [vmem:[#allocation2 + $0x30] sm:$0xff] %v168
  %199 = vst [vmem:[#allocation2 + $0x38] sm:$0xff] %v170
  %200 = vst [vmem:[#allocation2 + $0x40] sm:$0xff] %v174
  %201 = vst [vmem:[#allocation2 + $0x48] sm:$0xff] %v176
  %202 = vst [vmem:[#allocation2 + $0x50] sm:$0xff] %v178
  %203 = vst [vmem:[#allocation2 + $0x58] sm:$0xff] %v180
  %204 = vst [vmem:[#allocation2 + $0x60] sm:$0xff] %v184
  %205 = vst [vmem:[#allocation2 + $0x68] sm:$0xff] %v186
  %206 = vst [vmem:[#allocation2 + $0x70] sm:$0xff] %v188
  %207 = vst [vmem:[#allocation2 + $0x78] sm:$0xff] %v190
  %v208 = vld [vmem:[%s2] sm:$0xf]
  %v209 = vld [vmem:[%s2 + $0x4] sm:$0xf]
  %v210 = vld [vmem:[%s2 + $0x8] sm:$0xf]
  %v211 = vld [vmem:[%s2 + $0xc] sm:$0xf]
  %v216 = vunpack.c.l.b16 %v208
  %v217 = vunpack.c.l.b16 %v209
  %v218 = vunpack.c.l.b16 %v210
  %v219 = vunpack.c.l.b16 %v211
  %v220 = vpack.c.b16 %v217, %v216
  %v221 = vpack.c.b16 %v219, %v218
  %vm224 = vcmask 261120
  %v226 = vsel %vm224, 0, 0
  %228 = vmatprep.subr.bf16.mxu0 0
  %229 = vmatpush1.bf16.msra.mxu0 0
  %230 = vmatprep.subr.bf16.mxu0 0
  %231 = vmatpush1.bf16.msra.mxu0 0
  %232 = vmatprep.subr.bf16.mxu0 0
  %233 = vmatpush1.bf16.msra.mxu0 0
  %234 = vmatprep.subr.bf16.mxu0 0
  %235 = vmatpush1.bf16.msra.mxu0 0
  %236 = vmatprep.subr.bf16.mxu0 0
  %237 = vmatpush1.bf16.msra.mxu0 0
  %238 = vmatprep.subr.bf16.mxu0 0
  %239 = vmatpush1.bf16.msra.mxu0 0
  %240 = vmatprep.subr.bf16.mxu0 0
  %241 = vmatpush1.bf16.msra.mxu0 %v221
  %242 = vmatprep.subr.bf16.mxu0 0
  %243 = vmatpush1.bf16.msra.mxu0 %v220
  %244 = vmatprep.subr.bf16.mxu0 0
  %245 = vmatpush2.bf16.msra.mxu0 0
  %246 = vmatprep.subr.bf16.mxu0 0
  %247 = vmatpush2.bf16.msra.mxu0 0
  %248 = vmatprep.subr.bf16.mxu0 0
  %249 = vmatpush2.bf16.msra.mxu0 0
  %250 = vmatprep.subr.bf16.mxu0 0
  %251 = vmatpush2.bf16.msra.mxu0 0
  %252 = vmatprep.subr.bf16.mxu0 0
  %253 = vmatpush2.bf16.msra.mxu0 0
  %254 = vmatprep.subr.bf16.mxu0 0
  %255 = vmatpush2.bf16.msra.mxu0 0
  %256 = vmatprep.subr.bf16.mxu0 0
  %257 = vmatpush2.bf16.msra.mxu0 0
  %258 = vmatprep.subr.bf16.mxu0 0
  %259 = vmatpush2.bf16.msra.mxu0 0
  %260 = vmatprep.mubr.bf16.mxu0 0
  %261 = vmatmul.mubr.bf16.gmra.mxu0 %v226
  %v262 = vpop.f32.mrf.mxu0
  %v263 = vadd.f32 0.0, %v262
  %v264 = vpop.f32.mrf.mxu0
  %v265 = vpop.f32.mrf.mxu0
  %v266 = vpop.f32.mrf.mxu0
  %267 = vdwg.mxu0
  %s268 = scalar_lea.vmem %s2, 16
  %v269 = vld [vmem:[%s268] sm:$0xf]
  %v270 = vld [vmem:[%s268 + $0x4] sm:$0xf]
  %v271 = vld [vmem:[%s268 + $0x8] sm:$0xf]
  %v272 = vld [vmem:[%s268 + $0xc] sm:$0xf]
  %v277 = vunpack.c.l.b16 %v269
  %v278 = vunpack.c.l.b16 %v270
  %v279 = vunpack.c.l.b16 %v271
  %v280 = vunpack.c.l.b16 %v272
  %v281 = vpack.c.b16 %v278, %v277
  %v282 = vpack.c.b16 %v280, %v279
  %285 = vmatprep.subr.bf16.mxu0 0
  %286 = vmatpush1.bf16.msra.mxu0 0
  %287 = vmatprep.subr.bf16.mxu0 0
  %288 = vmatpush1.bf16.msra.mxu0 0
  %289 = vmatprep.subr.bf16.mxu0 0
  %290 = vmatpush1.bf16.msra.mxu0 0
  %291 = vmatprep.subr.bf16.mxu0 0
  %292 = vmatpush1.bf16.msra.mxu0 0
  %293 = vmatprep.subr.bf16.mxu0 0
  %294 = vmatpush1.bf16.msra.mxu0 0
  %295 = vmatprep.subr.bf16.mxu0 0
  %296 = vmatpush1.bf16.msra.mxu0 0
  %297 = vmatprep.subr.bf16.mxu0 0
  %298 = vmatpush1.bf16.msra.mxu0 %v282
  %299 = vmatprep.subr.bf16.mxu0 0
  %300 = vmatpush1.bf16.msra.mxu0 %v281
  %301 = vmatprep.subr.bf16.mxu0 0
  %302 = vmatpush2.bf16.msra.mxu0 0
  %303 = vmatprep.subr.bf16.mxu0 0
  %304 = vmatpush2.bf16.msra.mxu0 0
  %305 = vmatprep.subr.bf16.mxu0 0
  %306 = vmatpush2.bf16.msra.mxu0 0
  %307 = vmatprep.subr.bf16.mxu0 0
  %308 = vmatpush2.bf16.msra.mxu0 0
  %309 = vmatprep.subr.bf16.mxu0 0
  %310 = vmatpush2.bf16.msra.mxu0 0
  %311 = vmatprep.subr.bf16.mxu0 0
  %312 = vmatpush2.bf16.msra.mxu0 0
  %313 = vmatprep.subr.bf16.mxu0 0
  %314 = vmatpush2.bf16.msra.mxu0 0
  %315 = vmatprep.subr.bf16.mxu0 0
  %316 = vmatpush2.bf16.msra.mxu0 0
  %317 = vmatprep.mubr.bf16.mxu0 0
  %318 = vmatmul.mubr.bf16.gmra.mxu0 %v226
  %v319 = vpop.f32.mrf.mxu0
  %v320 = vadd.f32 0.0, %v319
  %v321 = vpop.f32.mrf.mxu0
  %v322 = vpop.f32.mrf.mxu0
  %v323 = vpop.f32.mrf.mxu0
  %324 = vdwg.mxu0
  %v325 = vld [vmem:[#allocation2] sm:$0xff]
  %v326 = vadd.f32 %v325, %v263
  %s327 = scalar_lea.vmem [#allocation2], 112
  %v328 = vld [vmem:[%s327 + $0x8] sm:$0xff]
  %v329 = vadd.f32 %v328, %v320
  %v330 = vxor.u32 %v326, 2147483648
  %v331 = vmul.f32 %v330, 1.442695
  %v332 = vpow.pop %v331
  %v333 = vadd.f32 %v332, 1.0
  %v334 = vrcp.pop %v333
  %v335 = vmul.f32 1.0, %v334
  %v336 = vtanh.pop %v326
  %v337 = vmul.f32 %v335, 0.0
  %339 = vrot.lane.b32.xlu0 %v336, 64
  %v340 = vpop.permute.xlu0 %339
  %v342 = vmul.f32 %v335, %v340
  %344 = vrot.lane.b32.xlu0 %v342, 32
  %v345 = vpop.permute.xlu0 %344
  %v347 = vadd.f32 %v337, %v345
  %v348 = vtanh.pop %v347
  %350 = vrot.lane.b32.xlu0 %v348, 64
  %v351 = vpop.permute.xlu0 %350
  %v353 = vmul.f32 %v335, %v351
  %v354 = vxor.u32 %v329, 2147483648
  %v355 = vmul.f32 %v354, 1.442695
  %v356 = vpow.pop %v355
  %v357 = vadd.f32 %v356, 1.0
  %v358 = vrcp.pop %v357
  %v359 = vmul.f32 1.0, %v358
  %v360 = vtanh.pop %v329
  %v361 = vmul.f32 %v359, 0.0
  %363 = vrot.lane.b32.xlu0 %v360, 64
  %v364 = vpop.permute.xlu0 %363
  %v366 = vmul.f32 %v359, %v364
  %368 = vrot.lane.b32.xlu0 %v366, 32
  %v369 = vpop.permute.xlu0 %368
  %v371 = vadd.f32 %v361, %v369
  %v372 = vtanh.pop %v371
  %374 = vrot.lane.b32.xlu0 %v372, 64
  %v375 = vpop.permute.xlu0 %374
  %v377 = vmul.f32 %v359, %v375
  %379 = vrot.lane.b32.xlu0 %v353, 32
  %v380 = vpop.permute.xlu0 %379
  %382 = vst.msk [vmem:[%s4] sm:$0xff] %vm224, %v380
  %384 = vrot.lane.b32.xlu0 %v377, 64
  %v385 = vpop.permute.xlu0 %384
  %s387 = scalar_lea.vmem %s4, 56
  %vm388 = vcmask 523520
  %389 = vst.msk [vmem:[%s387] sm:$0xff] %vm388, %v385
  %v390 = vpack.c.bf16 %v353, %v353
  %v391 = vld [vmem:[%s2] sm:$0xf]
  %v392 = vld [vmem:[%s2 + $0x4] sm:$0xf]
  %v393 = vld [vmem:[%s2 + $0x8] sm:$0xf]
  %v394 = vld [vmem:[%s2 + $0xc] sm:$0xf]
  %396 = vrot.lane.b32.xlu0 %v390, 32
  %v397 = vpop.permute.xlu0 %396
  %v402 = vunpack.c.l.b16 %v391
  %v403 = vunpack.c.l.b16 %v392
  %v404 = vunpack.c.l.b16 %v393
  %v405 = vunpack.c.l.b16 %v394
  %v406 = vpack.c.b16 %v403, %v402
  %v407 = vpack.c.b16 %v405, %v404
  %v411 = vsel %vm224, %v397, 0
  %413 = vmatprep.subr.bf16.mxu0 0
  %414 = vmatpush1.bf16.msra.mxu0 0
  %415 = vmatprep.subr.bf16.mxu0 0
  %416 = vmatpush1.bf16.msra.mxu0 0
  %417 = vmatprep.subr.bf16.mxu0 0
  %418 = vmatpush1.bf16.msra.mxu0 0
  %419 = vmatprep.subr.bf16.mxu0 0
  %420 = vmatpush1.bf16.msra.mxu0 0
  %421 = vmatprep.subr.bf16.mxu0 0
  %422 = vmatpush1.bf16.msra.mxu0 0
  %423 = vmatprep.subr.bf16.mxu0 0
  %424 = vmatpush1.bf16.msra.mxu0 0
  %425 = vmatprep.subr.bf16.mxu0 0
  %426 = vmatpush1.bf16.msra.mxu0 %v407
  %427 = vmatprep.subr.bf16.mxu0 0
  %428 = vmatpush1.bf16.msra.mxu0 %v406
  %429 = vmatprep.subr.bf16.mxu0 0
  %430 = vmatpush2.bf16.msra.mxu0 0
  %431 = vmatprep.subr.bf16.mxu0 0
  %432 = vmatpush2.bf16.msra.mxu0 0
  %433 = vmatprep.subr.bf16.mxu0 0
  %434 = vmatpush2.bf16.msra.mxu0 0
  %435 = vmatprep.subr.bf16.mxu0 0
  %436 = vmatpush2.bf16.msra.mxu0 0
  %437 = vmatprep.subr.bf16.mxu0 0
  %438 = vmatpush2.bf16.msra.mxu0 0
  %439 = vmatprep.subr.bf16.mxu0 0
  %440 = vmatpush2.bf16.msra.mxu0 0
  %441 = vmatprep.subr.bf16.mxu0 0
  %442 = vmatpush2.bf16.msra.mxu0 0
  %443 = vmatprep.subr.bf16.mxu0 0
  %444 = vmatpush2.bf16.msra.mxu0 0
  %445 = vmatprep.mubr.bf16.mxu0 0
  %446 = vmatmul.mubr.bf16.gmra.mxu0 %v411
  %v447 = vpop.f32.mrf.mxu0
  %v448 = vadd.f32 0.0, %v447
  %v449 = vpop.f32.mrf.mxu0
  %v450 = vpop.f32.mrf.mxu0
  %v451 = vpop.f32.mrf.mxu0
  %452 = vdwg.mxu0
  %v453 = vpack.c.bf16 %v377, %v377
  %v454 = vld [vmem:[%s268] sm:$0xf]
  %v455 = vld [vmem:[%s268 + $0x4] sm:$0xf]
  %v456 = vld [vmem:[%s268 + $0x8] sm:$0xf]
  %v457 = vld [vmem:[%s268 + $0xc] sm:$0xf]
  %459 = vrot.lane.b32.xlu0 %v453, 32
  %v460 = vpop.permute.xlu0 %459
  %v465 = vunpack.c.l.b16 %v454
  %v466 = vunpack.c.l.b16 %v455
  %v467 = vunpack.c.l.b16 %v456
  %v468 = vunpack.c.l.b16 %v457
  %v469 = vpack.c.b16 %v466, %v465
  %v470 = vpack.c.b16 %v468, %v467
  %v474 = vsel %vm224, %v460, 0
  %476 = vmatprep.subr.bf16.mxu0 0
  %477 = vmatpush1.bf16.msra.mxu0 0
  %478 = vmatprep.subr.bf16.mxu0 0
  %479 = vmatpush1.bf16.msra.mxu0 0
  %480 = vmatprep.subr.bf16.mxu0 0
  %481 = vmatpush1.bf16.msra.mxu0 0
  %482 = vmatprep.subr.bf16.mxu0 0
  %483 = vmatpush1.bf16.msra.mxu0 0
  %484 = vmatprep.subr.bf16.mxu0 0
  %485 = vmatpush1.bf16.msra.mxu0 0
  %486 = vmatprep.subr.bf16.mxu0 0
  %487 = vmatpush1.bf16.msra.mxu0 0
  %488 = vmatprep.subr.bf16.mxu0 0
  %489 = vmatpush1.bf16.msra.mxu0 %v470
  %490 = vmatprep.subr.bf16.mxu0 0
  %491 = vmatpush1.bf16.msra.mxu0 %v469
  %492 = vmatprep.subr.bf16.mxu0 0
  %493 = vmatpush2.bf16.msra.mxu0 0
  %494 = vmatprep.subr.bf16.mxu0 0
  %495 = vmatpush2.bf16.msra.mxu0 0
  %496 = vmatprep.subr.bf16.mxu0 0
  %497 = vmatpush2.bf16.msra.mxu0 0
  %498 = vmatprep.subr.bf16.mxu0 0
  %499 = vmatpush2.bf16.msra.mxu0 0
  %500 = vmatprep.subr.bf16.mxu0 0
  %501 = vmatpush2.bf16.msra.mxu0 0
  %502 = vmatprep.subr.bf16.mxu0 0
  %503 = vmatpush2.bf16.msra.mxu0 0
  %504 = vmatprep.subr.bf16.mxu0 0
  %505 = vmatpush2.bf16.msra.mxu0 0
  %506 = vmatprep.subr.bf16.mxu0 0
  %507 = vmatpush2.bf16.msra.mxu0 0
  %508 = vmatprep.mubr.bf16.mxu0 0
  %509 = vmatmul.mubr.bf16.gmra.mxu0 %v474
  %v510 = vpop.f32.mrf.mxu0
  %v511 = vadd.f32 0.0, %v510
  %v512 = vpop.f32.mrf.mxu0
  %v513 = vpop.f32.mrf.mxu0
  %v514 = vpop.f32.mrf.mxu0
  %515 = vdwg.mxu0
  %s516 = scalar_lea.vmem [#allocation2], 16
  %v517 = vld [vmem:[%s516] sm:$0xff]
  %v518 = vadd.f32 %v517, %v448
  %s519 = scalar_lea.vmem [#allocation2], 96
  %v520 = vld [vmem:[%s519 + $0x8] sm:$0xff]
  %v521 = vadd.f32 %v520, %v511
  %v522 = vxor.u32 %v518, 2147483648
  %v523 = vmul.f32 %v522, 1.442695
  %v524 = vpow.pop %v523
  %v525 = vadd.f32 %v524, 1.0
  %v526 = vrcp.pop %v525
  %v527 = vmul.f32 1.0, %v526
  %v528 = vtanh.pop %v518
  %v529 = vmul.f32 %v527, %v347
  %531 = vrot.lane.b32.xlu0 %v528, 64
  %v532 = vpop.permute.xlu0 %531
  %v534 = vmul.f32 %v527, %v532
  %536 = vrot.lane.b32.xlu0 %v534, 32
  %v537 = vpop.permute.xlu0 %536
  %v539 = vadd.f32 %v529, %v537
  %v540 = vtanh.pop %v539
  %542 = vrot.lane.b32.xlu0 %v540, 64
  %v543 = vpop.permute.xlu0 %542
  %v545 = vmul.f32 %v527, %v543
  %v546 = vxor.u32 %v521, 2147483648
  %v547 = vmul.f32 %v546, 1.442695
  %v548 = vpow.pop %v547
  %v549 = vadd.f32 %v548, 1.0
  %v550 = vrcp.pop %v549
  %v551 = vmul.f32 1.0, %v550
  %v552 = vtanh.pop %v521
  %v553 = vmul.f32 %v551, %v371
  %555 = vrot.lane.b32.xlu0 %v552, 64
  %v556 = vpop.permute.xlu0 %555
  %v558 = vmul.f32 %v551, %v556
  %560 = vrot.lane.b32.xlu0 %v558, 32
  %v561 = vpop.permute.xlu0 %560
  %v563 = vadd.f32 %v553, %v561
  %v564 = vtanh.pop %v563
  %566 = vrot.lane.b32.xlu0 %v564, 64
  %v567 = vpop.permute.xlu0 %566
  %v569 = vmul.f32 %v551, %v567
  %571 = vrot.lane.b32.xlu0 %v545, 32
  %v572 = vpop.permute.xlu0 %571
  %s574 = scalar_lea.vmem %s4, 8
  %575 = vst.msk [vmem:[%s574] sm:$0xff] %vm224, %v572
  %577 = vrot.lane.b32.xlu0 %v569, 64
  %v578 = vpop.permute.xlu0 %577
  %s580 = scalar_lea.vmem %s4, 48
  %581 = vst.msk [vmem:[%s580] sm:$0xff] %vm388, %v578
  %v582 = vpack.c.bf16 %v545, %v545
  %v583 = vld [vmem:[%s2] sm:$0xf]
  %v584 = vld [vmem:[%s2 + $0x4] sm:$0xf]
  %v585 = vld [vmem:[%s2 + $0x8] sm:$0xf]
  %v586 = vld [vmem:[%s2 + $0xc] sm:$0xf]
  %588 = vrot.lane.b32.xlu0 %v582, 32
  %v589 = vpop.permute.xlu0 %588
  %v594 = vunpack.c.l.b16 %v583
  %v595 = vunpack.c.l.b16 %v584
  %v596 = vunpack.c.l.b16 %v585
  %v597 = vunpack.c.l.b16 %v586
  %v598 = vpack.c.b16 %v595, %v594
  %v599 = vpack.c.b16 %v597, %v596
  %v603 = vsel %vm224, %v589, 0
  %605 = vmatprep.subr.bf16.mxu0 0
  %606 = vmatpush1.bf16.msra.mxu0 0
  %607 = vmatprep.subr.bf16.mxu0 0
  %608 = vmatpush1.bf16.msra.mxu0 0
  %609 = vmatprep.subr.bf16.mxu0 0
  %610 = vmatpush1.bf16.msra.mxu0 0
  %611 = vmatprep.subr.bf16.mxu0 0
  %612 = vmatpush1.bf16.msra.mxu0 0
  %613 = vmatprep.subr.bf16.mxu0 0
  %614 = vmatpush1.bf16.msra.mxu0 0
  %615 = vmatprep.subr.bf16.mxu0 0
  %616 = vmatpush1.bf16.msra.mxu0 0
  %617 = vmatprep.subr.bf16.mxu0 0
  %618 = vmatpush1.bf16.msra.mxu0 %v599
  %619 = vmatprep.subr.bf16.mxu0 0
  %620 = vmatpush1.bf16.msra.mxu0 %v598
  %621 = vmatprep.subr.bf16.mxu0 0
  %622 = vmatpush2.bf16.msra.mxu0 0
  %623 = vmatprep.subr.bf16.mxu0 0
  %624 = vmatpush2.bf16.msra.mxu0 0
  %625 = vmatprep.subr.bf16.mxu0 0
  %626 = vmatpush2.bf16.msra.mxu0 0
  %627 = vmatprep.subr.bf16.mxu0 0
  %628 = vmatpush2.bf16.msra.mxu0 0
  %629 = vmatprep.subr.bf16.mxu0 0
  %630 = vmatpush2.bf16.msra.mxu0 0
  %631 = vmatprep.subr.bf16.mxu0 0
  %632 = vmatpush2.bf16.msra.mxu0 0
  %633 = vmatprep.subr.bf16.mxu0 0
  %634 = vmatpush2.bf16.msra.mxu0 0
  %635 = vmatprep.subr.bf16.mxu0 0
  %636 = vmatpush2.bf16.msra.mxu0 0
  %637 = vmatprep.mubr.bf16.mxu0 0
  %638 = vmatmul.mubr.bf16.gmra.mxu0 %v603
  %v639 = vpop.f32.mrf.mxu0
  %v640 = vadd.f32 0.0, %v639
  %v641 = vpop.f32.mrf.mxu0
  %v642 = vpop.f32.mrf.mxu0
  %v643 = vpop.f32.mrf.mxu0
  %644 = vdwg.mxu0
  %v645 = vpack.c.bf16 %v569, %v569
  %v646 = vld [vmem:[%s268] sm:$0xf]
  %v647 = vld [vmem:[%s268 + $0x4] sm:$0xf]
  %v648 = vld [vmem:[%s268 + $0x8] sm:$0xf]
  %v649 = vld [vmem:[%s268 + $0xc] sm:$0xf]
  %651 = vrot.lane.b32.xlu0 %v645, 32
  %v652 = vpop.permute.xlu0 %651
  %v657 = vunpack.c.l.b16 %v646
  %v658 = vunpack.c.l.b16 %v647
  %v659 = vunpack.c.l.b16 %v648
  %v660 = vunpack.c.l.b16 %v649
  %v661 = vpack.c.b16 %v658, %v657
  %v662 = vpack.c.b16 %v660, %v659
  %v666 = vsel %vm224, %v652, 0
  %668 = vmatprep.subr.bf16.mxu0 0
  %669 = vmatpush1.bf16.msra.mxu0 0
  %670 = vmatprep.subr.bf16.mxu0 0
  %671 = vmatpush1.bf16.msra.mxu0 0
  %672 = vmatprep.subr.bf16.mxu0 0
  %673 = vmatpush1.bf16.msra.mxu0 0
  %674 = vmatprep.subr.bf16.mxu0 0
  %675 = vmatpush1.bf16.msra.mxu0 0
  %676 = vmatprep.subr.bf16.mxu0 0
  %677 = vmatpush1.bf16.msra.mxu0 0
  %678 = vmatprep.subr.bf16.mxu0 0
  %679 = vmatpush1.bf16.msra.mxu0 0
  %680 = vmatprep.subr.bf16.mxu0 0
  %681 = vmatpush1.bf16.msra.mxu0 %v662
  %682 = vmatprep.subr.bf16.mxu0 0
  %683 = vmatpush1.bf16.msra.mxu0 %v661
  %684 = vmatprep.subr.bf16.mxu0 0
  %685 = vmatpush2.bf16.msra.mxu0 0
  %686 = vmatprep.subr.bf16.mxu0 0
  %687 = vmatpush2.bf16.msra.mxu0 0
  %688 = vmatprep.subr.bf16.mxu0 0
  %689 = vmatpush2.bf16.msra.mxu0 0
  %690 = vmatprep.subr.bf16.mxu0 0
  %691 = vmatpush2.bf16.msra.mxu0 0
  %692 = vmatprep.subr.bf16.mxu0 0
  %693 = vmatpush2.bf16.msra.mxu0 0
  %694 = vmatprep.subr.bf16.mxu0 0
  %695 = vmatpush2.bf16.msra.mxu0 0
  %696 = vmatprep.subr.bf16.mxu0 0
  %697 = vmatpush2.bf16.msra.mxu0 0
  %698 = vmatprep.subr.bf16.mxu0 0
  %699 = vmatpush2.bf16.msra.mxu0 0
  %700 = vmatprep.mubr.bf16.mxu0 0
  %701 = vmatmul.mubr.bf16.gmra.mxu0 %v666
  %v702 = vpop.f32.mrf.mxu0
  %v703 = vadd.f32 0.0, %v702
  %v704 = vpop.f32.mrf.mxu0
  %v705 = vpop.f32.mrf.mxu0
  %v706 = vpop.f32.mrf.mxu0
  %707 = vdwg.mxu0
  %s708 = scalar_lea.vmem [#allocation2], 32
  %v709 = vld [vmem:[%s708] sm:$0xff]
  %v710 = vadd.f32 %v709, %v640
  %s711 = scalar_lea.vmem [#allocation2], 80
  %v712 = vld [vmem:[%s711 + $0x8] sm:$0xff]
  %v713 = vadd.f32 %v712, %v703
  %v714 = vxor.u32 %v710, 2147483648
  %v715 = vmul.f32 %v714, 1.442695
  %v716 = vpow.pop %v715
  %v717 = vadd.f32 %v716, 1.0
  %v718 = vrcp.pop %v717
  %v719 = vmul.f32 1.0, %v718
  %v720 = vtanh.pop %v710
  %v721 = vmul.f32 %v719, %v539
  %723 = vrot.lane.b32.xlu0 %v720, 64
  %v724 = vpop.permute.xlu0 %723
  %v726 = vmul.f32 %v719, %v724
  %728 = vrot.lane.b32.xlu0 %v726, 32
  %v729 = vpop.permute.xlu0 %728
  %v731 = vadd.f32 %v721, %v729
  %v732 = vtanh.pop %v731
  %734 = vrot.lane.b32.xlu0 %v732, 64
  %v735 = vpop.permute.xlu0 %734
  %v737 = vmul.f32 %v719, %v735
  %v738 = vxor.u32 %v713, 2147483648
  %v739 = vmul.f32 %v738, 1.442695
  %v740 = vpow.pop %v739
  %v741 = vadd.f32 %v740, 1.0
  %v742 = vrcp.pop %v741
  %v743 = vmul.f32 1.0, %v742
  %v744 = vtanh.pop %v713
  %v745 = vmul.f32 %v743, %v563
  %747 = vrot.lane.b32.xlu0 %v744, 64
  %v748 = vpop.permute.xlu0 %747
  %v750 = vmul.f32 %v743, %v748
  %752 = vrot.lane.b32.xlu0 %v750, 32
  %v753 = vpop.permute.xlu0 %752
  %v755 = vadd.f32 %v745, %v753
  %v756 = vtanh.pop %v755
  %758 = vrot.lane.b32.xlu0 %v756, 64
  %v759 = vpop.permute.xlu0 %758
  %v761 = vmul.f32 %v743, %v759
  %763 = vrot.lane.b32.xlu0 %v737, 32
  %v764 = vpop.permute.xlu0 %763
  %s766 = scalar_lea.vmem %s4, 16
  %767 = vst.msk [vmem:[%s766] sm:$0xff] %vm224, %v764
  %769 = vrot.lane.b32.xlu0 %v761, 64
  %v770 = vpop.permute.xlu0 %769
  %s772 = scalar_lea.vmem %s4, 40
  %773 = vst.msk [vmem:[%s772] sm:$0xff] %vm388, %v770
  %v774 = vpack.c.bf16 %v737, %v737
  %v775 = vld [vmem:[%s2] sm:$0xf]
  %v776 = vld [vmem:[%s2 + $0x4] sm:$0xf]
  %v777 = vld [vmem:[%s2 + $0x8] sm:$0xf]
  %v778 = vld [vmem:[%s2 + $0xc] sm:$0xf]
  %780 = vrot.lane.b32.xlu0 %v774, 32
  %v781 = vpop.permute.xlu0 %780
  %v786 = vunpack.c.l.b16 %v775
  %v787 = vunpack.c.l.b16 %v776
  %v788 = vunpack.c.l.b16 %v777
  %v789 = vunpack.c.l.b16 %v778
  %v790 = vpack.c.b16 %v787, %v786
  %v791 = vpack.c.b16 %v789, %v788
  %v795 = vsel %vm224, %v781, 0
  %797 = vmatprep.subr.bf16.mxu0 0
  %798 = vmatpush1.bf16.msra.mxu0 0
  %799 = vmatprep.subr.bf16.mxu0 0
  %800 = vmatpush1.bf16.msra.mxu0 0
  %801 = vmatprep.subr.bf16.mxu0 0
  %802 = vmatpush1.bf16.msra.mxu0 0
  %803 = vmatprep.subr.bf16.mxu0 0
  %804 = vmatpush1.bf16.msra.mxu0 0
  %805 = vmatprep.subr.bf16.mxu0 0
  %806 = vmatpush1.bf16.msra.mxu0 0
  %807 = vmatprep.subr.bf16.mxu0 0
  %808 = vmatpush1.bf16.msra.mxu0 0
  %809 = vmatprep.subr.bf16.mxu0 0
  %810 = vmatpush1.bf16.msra.mxu0 %v791
  %811 = vmatprep.subr.bf16.mxu0 0
  %812 = vmatpush1.bf16.msra.mxu0 %v790
  %813 = vmatprep.subr.bf16.mxu0 0
  %814 = vmatpush2.bf16.msra.mxu0 0
  %815 = vmatprep.subr.bf16.mxu0 0
  %816 = vmatpush2.bf16.msra.mxu0 0
  %817 = vmatprep.subr.bf16.mxu0 0
  %818 = vmatpush2.bf16.msra.mxu0 0
  %819 = vmatprep.subr.bf16.mxu0 0
  %820 = vmatpush2.bf16.msra.mxu0 0
  %821 = vmatprep.subr.bf16.mxu0 0
  %822 = vmatpush2.bf16.msra.mxu0 0
  %823 = vmatprep.subr.bf16.mxu0 0
  %824 = vmatpush2.bf16.msra.mxu0 0
  %825 = vmatprep.subr.bf16.mxu0 0
  %826 = vmatpush2.bf16.msra.mxu0 0
  %827 = vmatprep.subr.bf16.mxu0 0
  %828 = vmatpush2.bf16.msra.mxu0 0
  %829 = vmatprep.mubr.bf16.mxu0 0
  %830 = vmatmul.mubr.bf16.gmra.mxu0 %v795
  %v831 = vpop.f32.mrf.mxu0
  %v832 = vadd.f32 0.0, %v831
  %v833 = vpop.f32.mrf.mxu0
  %v834 = vpop.f32.mrf.mxu0
  %v835 = vpop.f32.mrf.mxu0
  %836 = vdwg.mxu0
  %v837 = vpack.c.bf16 %v761, %v761
  %v838 = vld [vmem:[%s268] sm:$0xf]
  %v839 = vld [vmem:[%s268 + $0x4] sm:$0xf]
  %v840 = vld [vmem:[%s268 + $0x8] sm:$0xf]
  %v841 = vld [vmem:[%s268 + $0xc] sm:$0xf]
  %843 = vrot.lane.b32.xlu0 %v837, 32
  %v844 = vpop.permute.xlu0 %843
  %v849 = vunpack.c.l.b16 %v838
  %v850 = vunpack.c.l.b16 %v839
  %v851 = vunpack.c.l.b16 %v840
  %v852 = vunpack.c.l.b16 %v841
  %v853 = vpack.c.b16 %v850, %v849
  %v854 = vpack.c.b16 %v852, %v851
  %v858 = vsel %vm224, %v844, 0
  %860 = vmatprep.subr.bf16.mxu0 0
  %861 = vmatpush1.bf16.msra.mxu0 0
  %862 = vmatprep.subr.bf16.mxu0 0
  %863 = vmatpush1.bf16.msra.mxu0 0
  %864 = vmatprep.subr.bf16.mxu0 0
  %865 = vmatpush1.bf16.msra.mxu0 0
  %866 = vmatprep.subr.bf16.mxu0 0
  %867 = vmatpush1.bf16.msra.mxu0 0
  %868 = vmatprep.subr.bf16.mxu0 0
  %869 = vmatpush1.bf16.msra.mxu0 0
  %870 = vmatprep.subr.bf16.mxu0 0
  %871 = vmatpush1.bf16.msra.mxu0 0
  %872 = vmatprep.subr.bf16.mxu0 0
  %873 = vmatpush1.bf16.msra.mxu0 %v854
  %874 = vmatprep.subr.bf16.mxu0 0
  %875 = vmatpush1.bf16.msra.mxu0 %v853
  %876 = vmatprep.subr.bf16.mxu0 0
  %877 = vmatpush2.bf16.msra.mxu0 0
  %878 = vmatprep.subr.bf16.mxu0 0
  %879 = vmatpush2.bf16.msra.mxu0 0
  %880 = vmatprep.subr.bf16.mxu0 0
  %881 = vmatpush2.bf16.msra.mxu0 0
  %882 = vmatprep.subr.bf16.mxu0 0
  %883 = vmatpush2.bf16.msra.mxu0 0
  %884 = vmatprep.subr.bf16.mxu0 0
  %885 = vmatpush2.bf16.msra.mxu0 0
  %886 = vmatprep.subr.bf16.mxu0 0
  %887 = vmatpush2.bf16.msra.mxu0 0
  %888 = vmatprep.subr.bf16.mxu0 0
  %889 = vmatpush2.bf16.msra.mxu0 0
  %890 = vmatprep.subr.bf16.mxu0 0
  %891 = vmatpush2.bf16.msra.mxu0 0
  %892 = vmatprep.mubr.bf16.mxu0 0
  %893 = vmatmul.mubr.bf16.gmra.mxu0 %v858
  %v894 = vpop.f32.mrf.mxu0
  %v895 = vadd.f32 0.0, %v894
  %v896 = vpop.f32.mrf.mxu0
  %v897 = vpop.f32.mrf.mxu0
  %v898 = vpop.f32.mrf.mxu0
  %899 = vdwg.mxu0
  %s900 = scalar_lea.vmem [#allocation2], 48
  %v901 = vld [vmem:[%s900] sm:$0xff]
  %v902 = vadd.f32 %v901, %v832
  %s903 = scalar_lea.vmem [#allocation2], 64
  %v904 = vld [vmem:[%s903 + $0x8] sm:$0xff]
  %v905 = vadd.f32 %v904, %v895
  %v906 = vxor.u32 %v902, 2147483648
  %v907 = vmul.f32 %v906, 1.442695
  %v908 = vpow.pop %v907
  %v909 = vadd.f32 %v908, 1.0
  %v910 = vrcp.pop %v909
  %v911 = vmul.f32 1.0, %v910
  %v912 = vtanh.pop %v902
  %v913 = vmul.f32 %v911, %v731
  %915 = vrot.lane.b32.xlu0 %v912, 64
  %v916 = vpop.permute.xlu0 %915
  %v918 = vmul.f32 %v911, %v916
  %920 = vrot.lane.b32.xlu0 %v918, 32
  %v921 = vpop.permute.xlu0 %920
  %v923 = vadd.f32 %v913, %v921
  %v924 = vtanh.pop %v923
  %926 = vrot.lane.b32.xlu0 %v924, 64
  %v927 = vpop.permute.xlu0 %926
  %v929 = vmul.f32 %v911, %v927
  %v930 = vxor.u32 %v905, 2147483648
  %v931 = vmul.f32 %v930, 1.442695
  %v932 = vpow.pop %v931
  %v933 = vadd.f32 %v932, 1.0
  %v934 = vrcp.pop %v933
  %v935 = vmul.f32 1.0, %v934
  %v936 = vtanh.pop %v905
  %v937 = vmul.f32 %v935, %v755
  %939 = vrot.lane.b32.xlu0 %v936, 64
  %v940 = vpop.permute.xlu0 %939
  %v942 = vmul.f32 %v935, %v940
  %944 = vrot.lane.b32.xlu0 %v942, 32
  %v945 = vpop.permute.xlu0 %944
  %v947 = vadd.f32 %v937, %v945
  %v948 = vtanh.pop %v947
  %950 = vrot.lane.b32.xlu0 %v948, 64
  %v951 = vpop.permute.xlu0 %950
  %v953 = vmul.f32 %v935, %v951
  %955 = vrot.lane.b32.xlu0 %v929, 32
  %v956 = vpop.permute.xlu0 %955
  %s958 = scalar_lea.vmem %s4, 24
  %959 = vst.msk [vmem:[%s958] sm:$0xff] %vm224, %v956
  %961 = vrot.lane.b32.xlu0 %v953, 64
  %v962 = vpop.permute.xlu0 %961
  %s964 = scalar_lea.vmem %s4, 32
  %965 = vst.msk [vmem:[%s964] sm:$0xff] %vm388, %v962
  %v966 = vpack.c.bf16 %v929, %v929
  %v967 = vld [vmem:[%s2] sm:$0xf]
  %v968 = vld [vmem:[%s2 + $0x4] sm:$0xf]
  %v969 = vld [vmem:[%s2 + $0x8] sm:$0xf]
  %v970 = vld [vmem:[%s2 + $0xc] sm:$0xf]
  %972 = vrot.lane.b32.xlu0 %v966, 32
  %v973 = vpop.permute.xlu0 %972
  %v978 = vunpack.c.l.b16 %v967
  %v979 = vunpack.c.l.b16 %v968
  %v980 = vunpack.c.l.b16 %v969
  %v981 = vunpack.c.l.b16 %v970
  %v982 = vpack.c.b16 %v979, %v978
  %v983 = vpack.c.b16 %v981, %v980
  %v987 = vsel %vm224, %v973, 0
  %989 = vmatprep.subr.bf16.mxu0 0
  %990 = vmatpush1.bf16.msra.mxu0 0
  %991 = vmatprep.subr.bf16.mxu0 0
  %992 = vmatpush1.bf16.msra.mxu0 0
  %993 = vmatprep.subr.bf16.mxu0 0
  %994 = vmatpush1.bf16.msra.mxu0 0
  %995 = vmatprep.subr.bf16.mxu0 0
  %996 = vmatpush1.bf16.msra.mxu0 0
  %997 = vmatprep.subr.bf16.mxu0 0
  %998 = vmatpush1.bf16.msra.mxu0 0
  %999 = vmatprep.subr.bf16.mxu0 0
  %1000 = vmatpush1.bf16.msra.mxu0 0
  %1001 = vmatprep.subr.bf16.mxu0 0
  %1002 = vmatpush1.bf16.msra.mxu0 %v983
  %1003 = vmatprep.subr.bf16.mxu0 0
  %1004 = vmatpush1.bf16.msra.mxu0 %v982
  %1005 = vmatprep.subr.bf16.mxu0 0
  %1006 = vmatpush2.bf16.msra.mxu0 0
  %1007 = vmatprep.subr.bf16.mxu0 0
  %1008 = vmatpush2.bf16.msra.mxu0 0
  %1009 = vmatprep.subr.bf16.mxu0 0
  %1010 = vmatpush2.bf16.msra.mxu0 0
  %1011 = vmatprep.subr.bf16.mxu0 0
  %1012 = vmatpush2.bf16.msra.mxu0 0
  %1013 = vmatprep.subr.bf16.mxu0 0
  %1014 = vmatpush2.bf16.msra.mxu0 0
  %1015 = vmatprep.subr.bf16.mxu0 0
  %1016 = vmatpush2.bf16.msra.mxu0 0
  %1017 = vmatprep.subr.bf16.mxu0 0
  %1018 = vmatpush2.bf16.msra.mxu0 0
  %1019 = vmatprep.subr.bf16.mxu0 0
  %1020 = vmatpush2.bf16.msra.mxu0 0
  %1021 = vmatprep.mubr.bf16.mxu0 0
  %1022 = vmatmul.mubr.bf16.gmra.mxu0 %v987
  %v1023 = vpop.f32.mrf.mxu0
  %v1024 = vadd.f32 0.0, %v1023
  %v1025 = vpop.f32.mrf.mxu0
  %v1026 = vpop.f32.mrf.mxu0
  %v1027 = vpop.f32.mrf.mxu0
  %1028 = vdwg.mxu0
  %v1029 = vpack.c.bf16 %v953, %v953
  %v1030 = vld [vmem:[%s268] sm:$0xf]
  %v1031 = vld [vmem:[%s268 + $0x4] sm:$0xf]
  %v1032 = vld [vmem:[%s268 + $0x8] sm:$0xf]
  %v1033 = vld [vmem:[%s268 + $0xc] sm:$0xf]
  %1035 = vrot.lane.b32.xlu0 %v1029, 32
  %v1036 = vpop.permute.xlu0 %1035
  %v1041 = vunpack.c.l.b16 %v1030
  %v1042 = vunpack.c.l.b16 %v1031
  %v1043 = vunpack.c.l.b16 %v1032
  %v1044 = vunpack.c.l.b16 %v1033
  %v1045 = vpack.c.b16 %v1042, %v1041
  %v1046 = vpack.c.b16 %v1044, %v1043
  %v1050 = vsel %vm224, %v1036, 0
  %1052 = vmatprep.subr.bf16.mxu0 0
  %1053 = vmatpush1.bf16.msra.mxu0 0
  %1054 = vmatprep.subr.bf16.mxu0 0
  %1055 = vmatpush1.bf16.msra.mxu0 0
  %1056 = vmatprep.subr.bf16.mxu0 0
  %1057 = vmatpush1.bf16.msra.mxu0 0
  %1058 = vmatprep.subr.bf16.mxu0 0
  %1059 = vmatpush1.bf16.msra.mxu0 0
  %1060 = vmatprep.subr.bf16.mxu0 0
  %1061 = vmatpush1.bf16.msra.mxu0 0
  %1062 = vmatprep.subr.bf16.mxu0 0
  %1063 = vmatpush1.bf16.msra.mxu0 0
  %1064 = vmatprep.subr.bf16.mxu0 0
  %1065 = vmatpush1.bf16.msra.mxu0 %v1046
  %1066 = vmatprep.subr.bf16.mxu0 0
  %1067 = vmatpush1.bf16.msra.mxu0 %v1045
  %1068 = vmatprep.subr.bf16.mxu0 0
  %1069 = vmatpush2.bf16.msra.mxu0 0
  %1070 = vmatprep.subr.bf16.mxu0 0
  %1071 = vmatpush2.bf16.msra.mxu0 0
  %1072 = vmatprep.subr.bf16.mxu0 0
  %1073 = vmatpush2.bf16.msra.mxu0 0
  %1074 = vmatprep.subr.bf16.mxu0 0
  %1075 = vmatpush2.bf16.msra.mxu0 0
  %1076 = vmatprep.subr.bf16.mxu0 0
  %1077 = vmatpush2.bf16.msra.mxu0 0
  %1078 = vmatprep.subr.bf16.mxu0 0
  %1079 = vmatpush2.bf16.msra.mxu0 0
  %1080 = vmatprep.subr.bf16.mxu0 0
  %1081 = vmatpush2.bf16.msra.mxu0 0
  %1082 = vmatprep.subr.bf16.mxu0 0
  %1083 = vmatpush2.bf16.msra.mxu0 0
  %1084 = vmatprep.mubr.bf16.mxu0 0
  %1085 = vmatmul.mubr.bf16.gmra.mxu0 %v1050
  %v1086 = vpop.f32.mrf.mxu0
  %v1087 = vadd.f32 0.0, %v1086
  %v1088 = vpop.f32.mrf.mxu0
  %v1089 = vpop.f32.mrf.mxu0
  %v1090 = vpop.f32.mrf.mxu0
  %1091 = vdwg.mxu0
  %v1092 = vld [vmem:[%s903] sm:$0xff]
  %v1093 = vadd.f32 %v1092, %v1024
  %v1094 = vld [vmem:[%s900 + $0x8] sm:$0xff]
  %v1095 = vadd.f32 %v1094, %v1087
  %v1096 = vxor.u32 %v1093, 2147483648
  %v1097 = vmul.f32 %v1096, 1.442695
  %v1098 = vpow.pop %v1097
  %v1099 = vadd.f32 %v1098, 1.0
  %v1100 = vrcp.pop %v1099
  %v1101 = vmul.f32 1.0, %v1100
  %v1102 = vtanh.pop %v1093
  %v1103 = vmul.f32 %v1101, %v923
  %1105 = vrot.lane.b32.xlu0 %v1102, 64
  %v1106 = vpop.permute.xlu0 %1105
  %v1108 = vmul.f32 %v1101, %v1106
  %1110 = vrot.lane.b32.xlu0 %v1108, 32
  %v1111 = vpop.permute.xlu0 %1110
  %v1113 = vadd.f32 %v1103, %v1111
  %v1114 = vtanh.pop %v1113
  %1116 = vrot.lane.b32.xlu0 %v1114, 64
  %v1117 = vpop.permute.xlu0 %1116
  %v1119 = vmul.f32 %v1101, %v1117
  %v1120 = vxor.u32 %v1095, 2147483648
  %v1121 = vmul.f32 %v1120, 1.442695
  %v1122 = vpow.pop %v1121
  %v1123 = vadd.f32 %v1122, 1.0
  %v1124 = vrcp.pop %v1123
  %v1125 = vmul.f32 1.0, %v1124
  %v1126 = vtanh.pop %v1095
  %v1127 = vmul.f32 %v1125, %v947
  %1129 = vrot.lane.b32.xlu0 %v1126, 64
  %v1130 = vpop.permute.xlu0 %1129
  %v1132 = vmul.f32 %v1125, %v1130
  %1134 = vrot.lane.b32.xlu0 %v1132, 32
  %v1135 = vpop.permute.xlu0 %1134
  %v1137 = vadd.f32 %v1127, %v1135
  %v1138 = vtanh.pop %v1137
  %1140 = vrot.lane.b32.xlu0 %v1138, 64
  %v1141 = vpop.permute.xlu0 %1140
  %v1143 = vmul.f32 %v1125, %v1141
  %1145 = vrot.lane.b32.xlu0 %v1119, 32
  %v1146 = vpop.permute.xlu0 %1145
  %1148 = vst.msk [vmem:[%s964] sm:$0xff] %vm224, %v1146
  %1150 = vrot.lane.b32.xlu0 %v1143, 64
  %v1151 = vpop.permute.xlu0 %1150
  %1153 = vst.msk [vmem:[%s958] sm:$0xff] %vm388, %v1151
  %v1154 = vpack.c.bf16 %v1119, %v1119
  %v1155 = vld [vmem:[%s2] sm:$0xf]
  %v1156 = vld [vmem:[%s2 + $0x4] sm:$0xf]
  %v1157 = vld [vmem:[%s2 + $0x8] sm:$0xf]
  %v1158 = vld [vmem:[%s2 + $0xc] sm:$0xf]
  %1160 = vrot.lane.b32.xlu0 %v1154, 32
  %v1161 = vpop.permute.xlu0 %1160
  %v1166 = vunpack.c.l.b16 %v1155
  %v1167 = vunpack.c.l.b16 %v1156
  %v1168 = vunpack.c.l.b16 %v1157
  %v1169 = vunpack.c.l.b16 %v1158
  %v1170 = vpack.c.b16 %v1167, %v1166
  %v1171 = vpack.c.b16 %v1169, %v1168
  %v1175 = vsel %vm224, %v1161, 0
  %1177 = vmatprep.subr.bf16.mxu0 0
  %1178 = vmatpush1.bf16.msra.mxu0 0
  %1179 = vmatprep.subr.bf16.mxu0 0
  %1180 = vmatpush1.bf16.msra.mxu0 0
  %1181 = vmatprep.subr.bf16.mxu0 0
  %1182 = vmatpush1.bf16.msra.mxu0 0
  %1183 = vmatprep.subr.bf16.mxu0 0
  %1184 = vmatpush1.bf16.msra.mxu0 0
  %1185 = vmatprep.subr.bf16.mxu0 0
  %1186 = vmatpush1.bf16.msra.mxu0 0
  %1187 = vmatprep.subr.bf16.mxu0 0
  %1188 = vmatpush1.bf16.msra.mxu0 0
  %1189 = vmatprep.subr.bf16.mxu0 0
  %1190 = vmatpush1.bf16.msra.mxu0 %v1171
  %1191 = vmatprep.subr.bf16.mxu0 0
  %1192 = vmatpush1.bf16.msra.mxu0 %v1170
  %1193 = vmatprep.subr.bf16.mxu0 0
  %1194 = vmatpush2.bf16.msra.mxu0 0
  %1195 = vmatprep.subr.bf16.mxu0 0
  %1196 = vmatpush2.bf16.msra.mxu0 0
  %1197 = vmatprep.subr.bf16.mxu0 0
  %1198 = vmatpush2.bf16.msra.mxu0 0
  %1199 = vmatprep.subr.bf16.mxu0 0
  %1200 = vmatpush2.bf16.msra.mxu0 0
  %1201 = vmatprep.subr.bf16.mxu0 0
  %1202 = vmatpush2.bf16.msra.mxu0 0
  %1203 = vmatprep.subr.bf16.mxu0 0
  %1204 = vmatpush2.bf16.msra.mxu0 0
  %1205 = vmatprep.subr.bf16.mxu0 0
  %1206 = vmatpush2.bf16.msra.mxu0 0
  %1207 = vmatprep.subr.bf16.mxu0 0
  %1208 = vmatpush2.bf16.msra.mxu0 0
  %1209 = vmatprep.mubr.bf16.mxu0 0
  %1210 = vmatmul.mubr.bf16.gmra.mxu0 %v1175
  %v1211 = vpop.f32.mrf.mxu0
  %v1212 = vadd.f32 0.0, %v1211
  %v1213 = vpop.f32.mrf.mxu0
  %v1214 = vpop.f32.mrf.mxu0
  %v1215 = vpop.f32.mrf.mxu0
  %1216 = vdwg.mxu0
  %v1217 = vpack.c.bf16 %v1143, %v1143
  %v1218 = vld [vmem:[%s268] sm:$0xf]
  %v1219 = vld [vmem:[%s268 + $0x4] sm:$0xf]
  %v1220 = vld [vmem:[%s268 + $0x8] sm:$0xf]
  %v1221 = vld [vmem:[%s268 + $0xc] sm:$0xf]
  %1223 = vrot.lane.b32.xlu0 %v1217, 32
  %v1224 = vpop.permute.xlu0 %1223
  %v1229 = vunpack.c.l.b16 %v1218
  %v1230 = vunpack.c.l.b16 %v1219
  %v1231 = vunpack.c.l.b16 %v1220
  %v1232 = vunpack.c.l.b16 %v1221
  %v1233 = vpack.c.b16 %v1230, %v1229
  %v1234 = vpack.c.b16 %v1232, %v1231
  %v1238 = vsel %vm224, %v1224, 0
  %1240 = vmatprep.subr.bf16.mxu0 0
  %1241 = vmatpush1.bf16.msra.mxu0 0
  %1242 = vmatprep.subr.bf16.mxu0 0
  %1243 = vmatpush1.bf16.msra.mxu0 0
  %1244 = vmatprep.subr.bf16.mxu0 0
  %1245 = vmatpush1.bf16.msra.mxu0 0
  %1246 = vmatprep.subr.bf16.mxu0 0
  %1247 = vmatpush1.bf16.msra.mxu0 0
  %1248 = vmatprep.subr.bf16.mxu0 0
  %1249 = vmatpush1.bf16.msra.mxu0 0
  %1250 = vmatprep.subr.bf16.mxu0 0
  %1251 = vmatpush1.bf16.msra.mxu0 0
  %1252 = vmatprep.subr.bf16.mxu0 0
  %1253 = vmatpush1.bf16.msra.mxu0 %v1234
  %1254 = vmatprep.subr.bf16.mxu0 0
  %1255 = vmatpush1.bf16.msra.mxu0 %v1233
  %1256 = vmatprep.subr.bf16.mxu0 0
  %1257 = vmatpush2.bf16.msra.mxu0 0
  %1258 = vmatprep.subr.bf16.mxu0 0
  %1259 = vmatpush2.bf16.msra.mxu0 0
  %1260 = vmatprep.subr.bf16.mxu0 0
  %1261 = vmatpush2.bf16.msra.mxu0 0
  %1262 = vmatprep.subr.bf16.mxu0 0
  %1263 = vmatpush2.bf16.msra.mxu0 0
  %1264 = vmatprep.subr.bf16.mxu0 0
  %1265 = vmatpush2.bf16.msra.mxu0 0
  %1266 = vmatprep.subr.bf16.mxu0 0
  %1267 = vmatpush2.bf16.msra.mxu0 0
  %1268 = vmatprep.subr.bf16.mxu0 0
  %1269 = vmatpush2.bf16.msra.mxu0 0
  %1270 = vmatprep.subr.bf16.mxu0 0
  %1271 = vmatpush2.bf16.msra.mxu0 0
  %1272 = vmatprep.mubr.bf16.mxu0 0
  %1273 = vmatmul.mubr.bf16.gmra.mxu0 %v1238
  %v1274 = vpop.f32.mrf.mxu0
  %v1275 = vadd.f32 0.0, %v1274
  %v1276 = vpop.f32.mrf.mxu0
  %v1277 = vpop.f32.mrf.mxu0
  %v1278 = vpop.f32.mrf.mxu0
  %1279 = vdwg.mxu0
  %v1280 = vld [vmem:[%s711] sm:$0xff]
  %v1281 = vadd.f32 %v1280, %v1212
  %v1282 = vld [vmem:[%s708 + $0x8] sm:$0xff]
  %v1283 = vadd.f32 %v1282, %v1275
  %v1284 = vxor.u32 %v1281, 2147483648
  %v1285 = vmul.f32 %v1284, 1.442695
  %v1286 = vpow.pop %v1285
  %v1287 = vadd.f32 %v1286, 1.0
  %v1288 = vrcp.pop %v1287
  %v1289 = vmul.f32 1.0, %v1288
  %v1290 = vtanh.pop %v1281
  %v1291 = vmul.f32 %v1289, %v1113
  %1293 = vrot.lane.b32.xlu0 %v1290, 64
  %v1294 = vpop.permute.xlu0 %1293
  %v1296 = vmul.f32 %v1289, %v1294
  %1298 = vrot.lane.b32.xlu0 %v1296, 32
  %v1299 = vpop.permute.xlu0 %1298
  %v1301 = vadd.f32 %v1291, %v1299
  %v1302 = vtanh.pop %v1301
  %1304 = vrot.lane.b32.xlu0 %v1302, 64
  %v1305 = vpop.permute.xlu0 %1304
  %v1307 = vmul.f32 %v1289, %v1305
  %v1308 = vxor.u32 %v1283, 2147483648
  %v1309 = vmul.f32 %v1308, 1.442695
  %v1310 = vpow.pop %v1309
  %v1311 = vadd.f32 %v1310, 1.0
  %v1312 = vrcp.pop %v1311
  %v1313 = vmul.f32 1.0, %v1312
  %v1314 = vtanh.pop %v1283
  %v1315 = vmul.f32 %v1313, %v1137
  %1317 = vrot.lane.b32.xlu0 %v1314, 64
  %v1318 = vpop.permute.xlu0 %1317
  %v1320 = vmul.f32 %v1313, %v1318
  %1322 = vrot.lane.b32.xlu0 %v1320, 32
  %v1323 = vpop.permute.xlu0 %1322
  %v1325 = vadd.f32 %v1315, %v1323
  %v1326 = vtanh.pop %v1325
  %1328 = vrot.lane.b32.xlu0 %v1326, 64
  %v1329 = vpop.permute.xlu0 %1328
  %v1331 = vmul.f32 %v1313, %v1329
  %1333 = vrot.lane.b32.xlu0 %v1307, 32
  %v1334 = vpop.permute.xlu0 %1333
  %1336 = vst.msk [vmem:[%s772] sm:$0xff] %vm224, %v1334
  %1338 = vrot.lane.b32.xlu0 %v1331, 64
  %v1339 = vpop.permute.xlu0 %1338
  %1341 = vst.msk [vmem:[%s766] sm:$0xff] %vm388, %v1339
  %v1342 = vpack.c.bf16 %v1307, %v1307
  %v1343 = vld [vmem:[%s2] sm:$0xf]
  %v1344 = vld [vmem:[%s2 + $0x4] sm:$0xf]
  %v1345 = vld [vmem:[%s2 + $0x8] sm:$0xf]
  %v1346 = vld [vmem:[%s2 + $0xc] sm:$0xf]
  %1348 = vrot.lane.b32.xlu0 %v1342, 32
  %v1349 = vpop.permute.xlu0 %1348
  %v1354 = vunpack.c.l.b16 %v1343
  %v1355 = vunpack.c.l.b16 %v1344
  %v1356 = vunpack.c.l.b16 %v1345
  %v1357 = vunpack.c.l.b16 %v1346
  %v1358 = vpack.c.b16 %v1355, %v1354
  %v1359 = vpack.c.b16 %v1357, %v1356
  %v1363 = vsel %vm224, %v1349, 0
  %1365 = vmatprep.subr.bf16.mxu0 0
  %1366 = vmatpush1.bf16.msra.mxu0 0
  %1367 = vmatprep.subr.bf16.mxu0 0
  %1368 = vmatpush1.bf16.msra.mxu0 0
  %1369 = vmatprep.subr.bf16.mxu0 0
  %1370 = vmatpush1.bf16.msra.mxu0 0
  %1371 = vmatprep.subr.bf16.mxu0 0
  %1372 = vmatpush1.bf16.msra.mxu0 0
  %1373 = vmatprep.subr.bf16.mxu0 0
  %1374 = vmatpush1.bf16.msra.mxu0 0
  %1375 = vmatprep.subr.bf16.mxu0 0
  %1376 = vmatpush1.bf16.msra.mxu0 0
  %1377 = vmatprep.subr.bf16.mxu0 0
  %1378 = vmatpush1.bf16.msra.mxu0 %v1359
  %1379 = vmatprep.subr.bf16.mxu0 0
  %1380 = vmatpush1.bf16.msra.mxu0 %v1358
  %1381 = vmatprep.subr.bf16.mxu0 0
  %1382 = vmatpush2.bf16.msra.mxu0 0
  %1383 = vmatprep.subr.bf16.mxu0 0
  %1384 = vmatpush2.bf16.msra.mxu0 0
  %1385 = vmatprep.subr.bf16.mxu0 0
  %1386 = vmatpush2.bf16.msra.mxu0 0
  %1387 = vmatprep.subr.bf16.mxu0 0
  %1388 = vmatpush2.bf16.msra.mxu0 0
  %1389 = vmatprep.subr.bf16.mxu0 0
  %1390 = vmatpush2.bf16.msra.mxu0 0
  %1391 = vmatprep.subr.bf16.mxu0 0
  %1392 = vmatpush2.bf16.msra.mxu0 0
  %1393 = vmatprep.subr.bf16.mxu0 0
  %1394 = vmatpush2.bf16.msra.mxu0 0
  %1395 = vmatprep.subr.bf16.mxu0 0
  %1396 = vmatpush2.bf16.msra.mxu0 0
  %1397 = vmatprep.mubr.bf16.mxu0 0
  %1398 = vmatmul.mubr.bf16.gmra.mxu0 %v1363
  %v1399 = vpop.f32.mrf.mxu0
  %v1400 = vadd.f32 0.0, %v1399
  %v1401 = vpop.f32.mrf.mxu0
  %v1402 = vpop.f32.mrf.mxu0
  %v1403 = vpop.f32.mrf.mxu0
  %1404 = vdwg.mxu0
  %v1405 = vpack.c.bf16 %v1331, %v1331
  %v1406 = vld [vmem:[%s268] sm:$0xf]
  %v1407 = vld [vmem:[%s268 + $0x4] sm:$0xf]
  %v1408 = vld [vmem:[%s268 + $0x8] sm:$0xf]
  %v1409 = vld [vmem:[%s268 + $0xc] sm:$0xf]
  %1411 = vrot.lane.b32.xlu0 %v1405, 32
  %v1412 = vpop.permute.xlu0 %1411
  %v1417 = vunpack.c.l.b16 %v1406
  %v1418 = vunpack.c.l.b16 %v1407
  %v1419 = vunpack.c.l.b16 %v1408
  %v1420 = vunpack.c.l.b16 %v1409
  %v1421 = vpack.c.b16 %v1418, %v1417
  %v1422 = vpack.c.b16 %v1420, %v1419
  %v1426 = vsel %vm224, %v1412, 0
  %1428 = vmatprep.subr.bf16.mxu0 0
  %1429 = vmatpush1.bf16.msra.mxu0 0
  %1430 = vmatprep.subr.bf16.mxu0 0
  %1431 = vmatpush1.bf16.msra.mxu0 0
  %1432 = vmatprep.subr.bf16.mxu0 0
  %1433 = vmatpush1.bf16.msra.mxu0 0
  %1434 = vmatprep.subr.bf16.mxu0 0
  %1435 = vmatpush1.bf16.msra.mxu0 0
  %1436 = vmatprep.subr.bf16.mxu0 0
  %1437 = vmatpush1.bf16.msra.mxu0 0
  %1438 = vmatprep.subr.bf16.mxu0 0
  %1439 = vmatpush1.bf16.msra.mxu0 0
  %1440 = vmatprep.subr.bf16.mxu0 0
  %1441 = vmatpush1.bf16.msra.mxu0 %v1422
  %1442 = vmatprep.subr.bf16.mxu0 0
  %1443 = vmatpush1.bf16.msra.mxu0 %v1421
  %1444 = vmatprep.subr.bf16.mxu0 0
  %1445 = vmatpush2.bf16.msra.mxu0 0
  %1446 = vmatprep.subr.bf16.mxu0 0
  %1447 = vmatpush2.bf16.msra.mxu0 0
  %1448 = vmatprep.subr.bf16.mxu0 0
  %1449 = vmatpush2.bf16.msra.mxu0 0
  %1450 = vmatprep.subr.bf16.mxu0 0
  %1451 = vmatpush2.bf16.msra.mxu0 0
  %1452 = vmatprep.subr.bf16.mxu0 0
  %1453 = vmatpush2.bf16.msra.mxu0 0
  %1454 = vmatprep.subr.bf16.mxu0 0
  %1455 = vmatpush2.bf16.msra.mxu0 0
  %1456 = vmatprep.subr.bf16.mxu0 0
  %1457 = vmatpush2.bf16.msra.mxu0 0
  %1458 = vmatprep.subr.bf16.mxu0 0
  %1459 = vmatpush2.bf16.msra.mxu0 0
  %1460 = vmatprep.mubr.bf16.mxu0 0
  %1461 = vmatmul.mubr.bf16.gmra.mxu0 %v1426
  %v1462 = vpop.f32.mrf.mxu0
  %v1463 = vadd.f32 0.0, %v1462
  %v1464 = vpop.f32.mrf.mxu0
  %v1465 = vpop.f32.mrf.mxu0
  %v1466 = vpop.f32.mrf.mxu0
  %1467 = vdwg.mxu0
  %v1468 = vld [vmem:[%s519] sm:$0xff]
  %v1469 = vadd.f32 %v1468, %v1400
  %v1470 = vld [vmem:[%s516 + $0x8] sm:$0xff]
  %v1471 = vadd.f32 %v1470, %v1463
  %v1472 = vxor.u32 %v1469, 2147483648
  %v1473 = vmul.f32 %v1472, 1.442695
  %v1474 = vpow.pop %v1473
  %v1475 = vadd.f32 %v1474, 1.0
  %v1476 = vrcp.pop %v1475
  %v1477 = vmul.f32 1.0, %v1476
  %v1478 = vtanh.pop %v1469
  %v1479 = vmul.f32 %v1477, %v1301
  %1481 = vrot.lane.b32.xlu0 %v1478, 64
  %v1482 = vpop.permute.xlu0 %1481
  %v1484 = vmul.f32 %v1477, %v1482
  %1486 = vrot.lane.b32.xlu0 %v1484, 32
  %v1487 = vpop.permute.xlu0 %1486
  %v1489 = vadd.f32 %v1479, %v1487
  %v1490 = vtanh.pop %v1489
  %1492 = vrot.lane.b32.xlu0 %v1490, 64
  %v1493 = vpop.permute.xlu0 %1492
  %v1495 = vmul.f32 %v1477, %v1493
  %v1496 = vxor.u32 %v1471, 2147483648
  %v1497 = vmul.f32 %v1496, 1.442695
  %v1498 = vpow.pop %v1497
  %v1499 = vadd.f32 %v1498, 1.0
  %v1500 = vrcp.pop %v1499
  %v1501 = vmul.f32 1.0, %v1500
  %v1502 = vtanh.pop %v1471
  %v1503 = vmul.f32 %v1501, %v1325
  %1505 = vrot.lane.b32.xlu0 %v1502, 64
  %v1506 = vpop.permute.xlu0 %1505
  %v1508 = vmul.f32 %v1501, %v1506
  %1510 = vrot.lane.b32.xlu0 %v1508, 32
  %v1511 = vpop.permute.xlu0 %1510
  %v1513 = vadd.f32 %v1503, %v1511
  %v1514 = vtanh.pop %v1513
  %1516 = vrot.lane.b32.xlu0 %v1514, 64
  %v1517 = vpop.permute.xlu0 %1516
  %v1519 = vmul.f32 %v1501, %v1517
  %1521 = vrot.lane.b32.xlu0 %v1495, 32
  %v1522 = vpop.permute.xlu0 %1521
  %1524 = vst.msk [vmem:[%s580] sm:$0xff] %vm224, %v1522
  %1526 = vrot.lane.b32.xlu0 %v1519, 64
  %v1527 = vpop.permute.xlu0 %1526
  %1529 = vst.msk [vmem:[%s574] sm:$0xff] %vm388, %v1527
  %v1530 = vpack.c.bf16 %v1495, %v1495
  %v1531 = vld [vmem:[%s2] sm:$0xf]
  %v1532 = vld [vmem:[%s2 + $0x4] sm:$0xf]
  %v1533 = vld [vmem:[%s2 + $0x8] sm:$0xf]
  %v1534 = vld [vmem:[%s2 + $0xc] sm:$0xf]
  %1536 = vrot.lane.b32.xlu0 %v1530, 32
  %v1537 = vpop.permute.xlu0 %1536
  %v1542 = vunpack.c.l.b16 %v1531
  %v1543 = vunpack.c.l.b16 %v1532
  %v1544 = vunpack.c.l.b16 %v1533
  %v1545 = vunpack.c.l.b16 %v1534
  %v1546 = vpack.c.b16 %v1543, %v1542
  %v1547 = vpack.c.b16 %v1545, %v1544
  %v1551 = vsel %vm224, %v1537, 0
  %1553 = vmatprep.subr.bf16.mxu0 0
  %1554 = vmatpush1.bf16.msra.mxu0 0
  %1555 = vmatprep.subr.bf16.mxu0 0
  %1556 = vmatpush1.bf16.msra.mxu0 0
  %1557 = vmatprep.subr.bf16.mxu0 0
  %1558 = vmatpush1.bf16.msra.mxu0 0
  %1559 = vmatprep.subr.bf16.mxu0 0
  %1560 = vmatpush1.bf16.msra.mxu0 0
  %1561 = vmatprep.subr.bf16.mxu0 0
  %1562 = vmatpush1.bf16.msra.mxu0 0
  %1563 = vmatprep.subr.bf16.mxu0 0
  %1564 = vmatpush1.bf16.msra.mxu0 0
  %1565 = vmatprep.subr.bf16.mxu0 0
  %1566 = vmatpush1.bf16.msra.mxu0 %v1547
  %1567 = vmatprep.subr.bf16.mxu0 0
  %1568 = vmatpush1.bf16.msra.mxu0 %v1546
  %1569 = vmatprep.subr.bf16.mxu0 0
  %1570 = vmatpush2.bf16.msra.mxu0 0
  %1571 = vmatprep.subr.bf16.mxu0 0
  %1572 = vmatpush2.bf16.msra.mxu0 0
  %1573 = vmatprep.subr.bf16.mxu0 0
  %1574 = vmatpush2.bf16.msra.mxu0 0
  %1575 = vmatprep.subr.bf16.mxu0 0
  %1576 = vmatpush2.bf16.msra.mxu0 0
  %1577 = vmatprep.subr.bf16.mxu0 0
  %1578 = vmatpush2.bf16.msra.mxu0 0
  %1579 = vmatprep.subr.bf16.mxu0 0
  %1580 = vmatpush2.bf16.msra.mxu0 0
  %1581 = vmatprep.subr.bf16.mxu0 0
  %1582 = vmatpush2.bf16.msra.mxu0 0
  %1583 = vmatprep.subr.bf16.mxu0 0
  %1584 = vmatpush2.bf16.msra.mxu0 0
  %1585 = vmatprep.mubr.bf16.mxu0 0
  %1586 = vmatmul.mubr.bf16.gmra.mxu0 %v1551
  %v1587 = vpop.f32.mrf.mxu0
  %v1588 = vadd.f32 0.0, %v1587
  %v1589 = vpop.f32.mrf.mxu0
  %v1590 = vpop.f32.mrf.mxu0
  %v1591 = vpop.f32.mrf.mxu0
  %1592 = vdwg.mxu0
  %v1593 = vpack.c.bf16 %v1519, %v1519
  %v1594 = vld [vmem:[%s268] sm:$0xf]
  %v1595 = vld [vmem:[%s268 + $0x4] sm:$0xf]
  %v1596 = vld [vmem:[%s268 + $0x8] sm:$0xf]
  %v1597 = vld [vmem:[%s268 + $0xc] sm:$0xf]
  %1599 = vrot.lane.b32.xlu0 %v1593, 32
  %v1600 = vpop.permute.xlu0 %1599
  %v1605 = vunpack.c.l.b16 %v1594
  %v1606 = vunpack.c.l.b16 %v1595
  %v1607 = vunpack.c.l.b16 %v1596
  %v1608 = vunpack.c.l.b16 %v1597
  %v1609 = vpack.c.b16 %v1606, %v1605
  %v1610 = vpack.c.b16 %v1608, %v1607
  %v1614 = vsel %vm224, %v1600, 0
  %1616 = vmatprep.subr.bf16.mxu0 0
  %1617 = vmatpush1.bf16.msra.mxu0 0
  %1618 = vmatprep.subr.bf16.mxu0 0
  %1619 = vmatpush1.bf16.msra.mxu0 0
  %1620 = vmatprep.subr.bf16.mxu0 0
  %1621 = vmatpush1.bf16.msra.mxu0 0
  %1622 = vmatprep.subr.bf16.mxu0 0
  %1623 = vmatpush1.bf16.msra.mxu0 0
  %1624 = vmatprep.subr.bf16.mxu0 0
  %1625 = vmatpush1.bf16.msra.mxu0 0
  %1626 = vmatprep.subr.bf16.mxu0 0
  %1627 = vmatpush1.bf16.msra.mxu0 0
  %1628 = vmatprep.subr.bf16.mxu0 0
  %1629 = vmatpush1.bf16.msra.mxu0 %v1610
  %1630 = vmatprep.subr.bf16.mxu0 0
  %1631 = vmatpush1.bf16.msra.mxu0 %v1609
  %1632 = vmatprep.subr.bf16.mxu0 0
  %1633 = vmatpush2.bf16.msra.mxu0 0
  %1634 = vmatprep.subr.bf16.mxu0 0
  %1635 = vmatpush2.bf16.msra.mxu0 0
  %1636 = vmatprep.subr.bf16.mxu0 0
  %1637 = vmatpush2.bf16.msra.mxu0 0
  %1638 = vmatprep.subr.bf16.mxu0 0
  %1639 = vmatpush2.bf16.msra.mxu0 0
  %1640 = vmatprep.subr.bf16.mxu0 0
  %1641 = vmatpush2.bf16.msra.mxu0 0
  %1642 = vmatprep.subr.bf16.mxu0 0
  %1643 = vmatpush2.bf16.msra.mxu0 0
  %1644 = vmatprep.subr.bf16.mxu0 0
  %1645 = vmatpush2.bf16.msra.mxu0 0
  %1646 = vmatprep.subr.bf16.mxu0 0
  %1647 = vmatpush2.bf16.msra.mxu0 0
  %1648 = vmatprep.mubr.bf16.mxu0 0
  %1649 = vmatmul.mubr.bf16.gmra.mxu0 %v1614
  %v1650 = vpop.f32.mrf.mxu0
  %v1651 = vadd.f32 0.0, %v1650
  %v1652 = vpop.f32.mrf.mxu0
  %v1653 = vpop.f32.mrf.mxu0
  %v1654 = vpop.f32.mrf.mxu0
  %1655 = vdwg.mxu0
  %v1656 = vld [vmem:[%s327] sm:$0xff]
  %v1657 = vadd.f32 %v1656, %v1588
  %v1658 = vld [vmem:[#allocation2 + $0x8] sm:$0xff]
  %v1659 = vadd.f32 %v1658, %v1651
  %v1660 = vxor.u32 %v1657, 2147483648
  %v1661 = vmul.f32 %v1660, 1.442695
  %v1662 = vpow.pop %v1661
  %v1663 = vadd.f32 %v1662, 1.0
  %v1664 = vrcp.pop %v1663
  %v1665 = vmul.f32 1.0, %v1664
  %v1666 = vtanh.pop %v1657
  %v1667 = vmul.f32 %v1665, %v1489
  %1669 = vrot.lane.b32.xlu0 %v1666, 64
  %v1670 = vpop.permute.xlu0 %1669
  %v1672 = vmul.f32 %v1665, %v1670
  %1674 = vrot.lane.b32.xlu0 %v1672, 32
  %v1675 = vpop.permute.xlu0 %1674
  %v1677 = vadd.f32 %v1667, %v1675
  %v1678 = vtanh.pop %v1677
  %1680 = vrot.lane.b32.xlu0 %v1678, 64
  %v1681 = vpop.permute.xlu0 %1680
  %v1683 = vmul.f32 %v1665, %v1681
  %v1684 = vxor.u32 %v1659, 2147483648
  %v1685 = vmul.f32 %v1684, 1.442695
  %v1686 = vpow.pop %v1685
  %v1687 = vadd.f32 %v1686, 1.0
  %v1688 = vrcp.pop %v1687
  %v1689 = vmul.f32 1.0, %v1688
  %v1690 = vtanh.pop %v1659
  %v1691 = vmul.f32 %v1689, %v1513
  %1693 = vrot.lane.b32.xlu0 %v1690, 64
  %v1694 = vpop.permute.xlu0 %1693
  %v1696 = vmul.f32 %v1689, %v1694
  %1698 = vrot.lane.b32.xlu0 %v1696, 32
  %v1699 = vpop.permute.xlu0 %1698
  %v1701 = vadd.f32 %v1691, %v1699
  %v1702 = vtanh.pop %v1701
  %1704 = vrot.lane.b32.xlu0 %v1702, 64
  %v1705 = vpop.permute.xlu0 %1704
  %v1707 = vmul.f32 %v1689, %v1705
  %1709 = vrot.lane.b32.xlu0 %v1683, 32
  %v1710 = vpop.permute.xlu0 %1709
  %1712 = vst.msk [vmem:[%s387] sm:$0xff] %vm224, %v1710
  %1714 = vrot.lane.b32.xlu0 %v1707, 64
  %v1715 = vpop.permute.xlu0 %1714
  %1717 = vst.msk [vmem:[%s4] sm:$0xff] %vm388, %v1715
  // Predicated region
  $region18: #{lstm_forward.3} parent=0 // pred_check
    _
  $region19: #{lstm_forward.3} parent=0 // pred_check_branch
    %1719 = sbr.rel (0) target = $region21
  $region20: #{lstm_forward.3} parent=0 // pred_region
    _
  $region21: #{lstm_forward.3} parent=0 // pred_fallthru
    _
  // Predicated region
  $region22: #{lstm_forward.3} parent=0 // pred_check
    _
  $region23: #{lstm_forward.3} parent=0 // pred_check_branch
    %1721 = sbr.rel (0) target = $region25
  $region24: #{lstm_forward.3} parent=0 // pred_region
    _
  $region25: #{lstm_forward.3} parent=0 // pred_fallthru
    _

</llo_original>
